<compile_context>
chip_gen: v5e
topology: v5e:2x2
jax: 0.10.0
libtpu: 0.0.40
codegen_flags: <defaults>
</compile_context>

<pallas_src>
import jax
import jax.numpy as jnp
from jax import lax
from jax.experimental import pallas as pl
from jax.experimental.pallas import tpu as pltpu


def _round_up(x, m):
    return ((x + m - 1) // m) * m


def _pack_gates(w, h, h_pad):
    """PyTorch nn.LSTM packs gates as [i, f, g, o] along the leading 4H axis.
    Reorder to [i, f, o, g] (one sigmoid covers the first 3 gates) and pad each
    gate's H rows to h_pad so every gate starts on a 128-lane boundary."""
    i, f, g, o = jnp.split(w, 4, axis=0)
    pad = [(0, h_pad - h)] + [(0, 0)] * (w.ndim - 1)
    return jnp.concatenate([jnp.pad(p, pad) for p in (i, f, o, g)], axis=0)


def lstm_forward(x, w_ih, w_hh, b_ih, b_hh, w_fc, b_fc, *,
                 chunk_t=32, batch_tile=None, matmul_dtype=jnp.float32):
    """x: (B, T, I).  Returns fc(lstm(x)[:, -1, :]) of shape (B, O)."""
    B, T, I = x.shape
    H = w_hh.shape[1]
    O = w_fc.shape[0]

    # ---------------- host-side sizing ----------------
    H_pad = max(128, _round_up(H, 128))          # lane-aligned per-gate width
    if batch_tile is None:
        B_pad = max(8, _round_up(B, 8))
        TBb = B_pad                               # one batch tile (1-TC chips)
    else:
        TBb = max(8, _round_up(batch_tile, 8))    # v7x: batch_tile = B_pad // 2
        B_pad = _round_up(max(B, TBb), TBb)
    n_btiles = B_pad // TBb

    TB = min(T, chunk_t)
    if T % TB != 0:
        # Prefer a chunk that divides T (static trip count => unrollable and no
        # padded timesteps executed); fall back to a dynamic tail otherwise.
        for d in range(TB, 0, -1):
            if T % d == 0 and 2 * d >= TB:
                TB = d
                break
    static_tail = (T % TB == 0)
    n_chunks = -(-T // TB)
    T_pad = n_chunks * TB
    unroll = TB if TB <= 8 else 4

    gx_dtype = jnp.dtype(matmul_dtype)
    w_dtype = jnp.dtype(matmul_dtype)

    # ---------------- host-side prep ----------------
    w_ih_p = _pack_gates(w_ih, H, H_pad)                            # (4Hp, I)
    b_p = _pack_gates(b_ih + b_hh, H, H_pad)                        # (4Hp,)
    w_hh_p = _pack_gates(w_hh, H, H_pad)                            # (4Hp, H)
    w_hh_p = jnp.pad(w_hh_p, ((0, 0), (0, H_pad - H)))              # (4Hp, Hp)
    whh_t = w_hh_p.T.astype(w_dtype)                                # (Hp, 4Hp)

    # Hoisted input projection: one big matmul, time-major output directly.
    gates_x = jnp.einsum('bti,gi->tbg', x, w_ih_p,
                         preferred_element_type=jnp.float32) + b_p  # (T,B,4Hp)
    gates_x = jnp.pad(gates_x, ((0, T_pad - T), (0, B_pad - B), (0, 0)))
    gates_x = gates_x.astype(gx_dtype)

    HS = 3 * H_pad                               # sigmoid gates [i | f | o]

    # ---------------- kernel ----------------
    def kernel(gx_ref, whh_ref, out_ref, h_sc, c_sc):
        s = pl.program_id(1)                     # time-chunk axis

        @pl.when(s == 0)                         # reset per batch tile
        def _():
            h_sc[...] = jnp.zeros_like(h_sc)
            c_sc[...] = jnp.zeros_like(c_sc)

        def step(t, carry):
            h, c = carry
            gx = gx_ref[t].astype(jnp.float32)                   # (TBb, 4Hp)
            hm = h.astype(w_dtype)
            pre_sig = gx[:, :HS] + jnp.dot(
                hm, whh_ref[:, :HS], preferred_element_type=jnp.float32)
            pre_g = gx[:, HS:] + jnp.dot(
                hm, whh_ref[:, HS:], preferred_element_type=jnp.float32)
            sig = jax.nn.sigmoid(pre_sig)        # one EUP pass: [i | f | o]
            g_g = jnp.tanh(pre_g)                # one EUP pass
            i_g = sig[:, :H_pad]
            f_g = sig[:, H_pad:2 * H_pad]
            o_g = sig[:, 2 * H_pad:]
            c = f_g * c + i_g * g_g
            h = o_g * jnp.tanh(c)
            return h, c

        carry0 = (h_sc[...], c_sc[...])
        if static_tail:
            h, c = lax.fori_loop(0, TB, step, carry0, unroll=unroll)
        else:
            n = jnp.minimum(TB, T - s * TB)      # padded steps must NOT run
            h, c = lax.fori_loop(0, n, step, carry0)
        h_sc[...] = h
        c_sc[...] = c

        @pl.when(s == pl.num_programs(1) - 1)
        def _():
            out_ref[...] = h.astype(out_ref.dtype)

    # ---------------- pallas_call ----------------
    def _run(single_buffer_weights):
        whh_kwargs = {}
        if single_buffer_weights:
            # Constant index_map -> no need for a second pipeline buffer.
            whh_kwargs["pipeline_mode"] = pl.Buffered(1)
        gx_spec = pl.BlockSpec((TB, TBb, 4 * H_pad), lambda b, s: (s, b, 0))
        whh_spec = pl.BlockSpec((H_pad, 4 * H_pad), lambda b, s: (0, 0),
                                **whh_kwargs)
        out_spec = pl.BlockSpec((TBb, H_pad), lambda b, s: (b, 0))

        gx_bytes = TB * TBb * 4 * H_pad * gx_dtype.itemsize * 2
        whh_bytes = (H_pad * 4 * H_pad * w_dtype.itemsize
                     * (1 if single_buffer_weights else 2))
        state_bytes = 4 * TBb * H_pad * 4          # h, c scratch + out block
        vmem_limit = min(128 << 20,
                         max(16 << 20,
                             2 * (gx_bytes + whh_bytes + state_bytes)))

        return pl.pallas_call(
            kernel,
            out_shape=jax.ShapeDtypeStruct((B_pad, H_pad), jnp.float32),
            grid_spec=pltpu.PrefetchScalarGridSpec(
                num_scalar_prefetch=0,
                grid=(n_btiles, n_chunks),
                in_specs=[gx_spec, whh_spec],
                out_specs=out_spec,
                scratch_shapes=[
                    pltpu.VMEM((TBb, H_pad), jnp.float32),   # h state
                    pltpu.VMEM((TBb, H_pad), jnp.float32),   # c state
                ],
            ),
            compiler_params=pltpu.CompilerParams(
                dimension_semantics=("parallel", "arbitrary"),
                vmem_limit_bytes=vmem_limit),
        )(gates_x, whh_t)

    try:
        h_all = _run(single_buffer_weights=True)
    except Exception:
        # pipeline_mode=pl.Buffered(1) not supported by this JAX build.
        h_all = _run(single_buffer_weights=False)

    # Final Linear on the last hidden state: one small XLA matmul (used once,
    # so it should not occupy VMEM during the recurrence).
    h_last = h_all[:B, :H].astype(jnp.float32)
    out = h_last @ w_fc.T + b_fc
    return out.astype(x.dtype)


def lstm_reference(x, w_ih, w_hh, b_ih, b_hh, w_fc, b_fc):
    """Pure-JAX reference matching torch.nn.LSTM(batch_first=True) + Linear."""
    B, T, I = x.shape
    H = w_hh.shape[1]
    h = jnp.zeros((B, H), jnp.float32)
    c = jnp.zeros((B, H), jnp.float32)
    for t in range(T):
        gates = x[:, t, :] @ w_ih.T + b_ih + h @ w_hh.T + b_hh
        i_g = jax.nn.sigmoid(gates[:, 0 * H:1 * H])
        f_g = jax.nn.sigmoid(gates[:, 1 * H:2 * H])
        g_g = jnp.tanh(gates[:, 2 * H:3 * H])
        o_g = jax.nn.sigmoid(gates[:, 3 * H:4 * H])
        c = f_g * c + i_g * g_g
        h = o_g * jnp.tanh(c)
    return h @ w_fc.T + b_fc


if __name__ == "__main__":
    # Small shapes consistent with the module's forward:
    B, T = 2, 8             # batch, sequence length
    input_size = 4
    hidden_size = 32
    output_size = 4

    key = jax.random.PRNGKey(0)
    ks = jax.random.split(key, 7)
    bound = 1.0 / jnp.sqrt(hidden_size)  # PyTorch default LSTM init range

    x = jax.random.normal(ks[0], (B, T, input_size), jnp.float32)
    w_ih = jax.random.uniform(ks[1], (4 * hidden_size, input_size),
                              jnp.float32, -bound, bound)
    w_hh = jax.random.uniform(ks[2], (4 * hidden_size, hidden_size),
                              jnp.float32, -bound, bound)
    b_ih = jax.random.uniform(ks[3], (4 * hidden_size,), jnp.float32, -bound, bound)
    b_hh = jax.random.uniform(ks[4], (4 * hidden_size,), jnp.float32, -bound, bound)
    w_fc = jax.random.uniform(ks[5], (output_size, hidden_size),
                              jnp.float32, -bound, bound)
    b_fc = jax.random.uniform(ks[6], (output_size,), jnp.float32, -bound, bound)

    ref = lstm_reference(x, w_ih, w_hh, b_ih, b_hh, w_fc, b_fc)

    # Full-precision path: exact parity with the f32 reference.
    out = lstm_forward(x, w_ih, w_hh, b_ih, b_hh, w_fc, b_fc)
    out = jax.block_until_ready(out)
    assert out.shape == (B, output_size)
    assert jnp.allclose(out, ref, atol=1e-5, rtol=1e-5), (out, ref)

    # Low-precision (bf16 weights / gate stream / h operand) path: looser check.
    out_bf16 = lstm_forward(x, w_ih, w_hh, b_ih, b_hh, w_fc, b_fc,
                            matmul_dtype=jnp.bfloat16)
    out_bf16 = jax.block_until_ready(out_bf16)
    assert out_bf16.shape == (B, output_size)
    assert float(jnp.max(jnp.abs(out_bf16 - ref))) < 1e-1, (out_bf16, ref)

    print("KERNEL_OK")
</pallas_src>

<mosaic_0001>
module attributes {stable_mosaic.version = 11 : i64} {
  func.func @kernel(%arg0: i32, %arg1: i32, %arg2: memref<8x8x512xf32, #tpu.memory_space<vmem>>, %arg3: memref<128x512xf32, #tpu.memory_space<vmem>>, %arg4: memref<8x128xf32, #tpu.memory_space<vmem>>, %arg5: memref<8x128xf32, #tpu.memory_space<vmem>>, %arg6: memref<8x128xf32, #tpu.memory_space<vmem>>) attributes {dimension_semantics = [#tpu.dimension_semantics<parallel>, #tpu.dimension_semantics<arbitrary>], iteration_bounds = array<i64: 1, 1>, scalar_prefetch = 0 : i64, scratch_operands = 2 : i64, tpu.core_type = #tpu.core_type<tc>, window_params = [{transform_indices = @transform_0, window_bounds = array<i64: 8, 8, 512>}, {pipeline_mode = #tpu.pipeline_mode<synchronous>, transform_indices = @transform_1, window_bounds = array<i64: 128, 512>}, {transform_indices = @transform_2, window_bounds = array<i64: 8, 128>}]} {
    %c0_i32 = arith.constant 0 : i32
    %0 = arith.cmpi eq, %arg1, %c0_i32 : i32
    %1 = arith.extui %0 : i1 to i32
    %c0_i32_0 = arith.constant 0 : i32
    %2 = arith.cmpi ne, %1, %c0_i32_0 : i32
    scf.if %2 {
      %cst_81 = arith.constant 0.000000e+00 : f32
      %210 = vector.broadcast %cst_81 : f32 to vector<8x128xf32>
      %c0_82 = arith.constant 0 : index
      %c0_83 = arith.constant 0 : index
      %211 = vector.load %arg5[%c0_82, %c0_83] : memref<8x128xf32, #tpu.memory_space<vmem>>, vector<8x128xf32>
      tpu.vector_store %arg5[%c0_82, %c0_83], %210 {strides = array<i32>} : memref<8x128xf32, #tpu.memory_space<vmem>>, vector<8x128xf32>,
      %cst_84 = arith.constant 0.000000e+00 : f32
      %212 = vector.broadcast %cst_84 : f32 to vector<8x128xf32>
      %c0_85 = arith.constant 0 : index
      %c0_86 = arith.constant 0 : index
      %213 = vector.load %arg6[%c0_85, %c0_86] : memref<8x128xf32, #tpu.memory_space<vmem>>, vector<8x128xf32>
      tpu.vector_store %arg6[%c0_85, %c0_86], %212 {strides = array<i32>} : memref<8x128xf32, #tpu.memory_space<vmem>>, vector<8x128xf32>,
    } else {
    }
    %c0 = arith.constant 0 : index
    %c0_1 = arith.constant 0 : index
    %3 = vector.load %arg5[%c0, %c0_1] : memref<8x128xf32, #tpu.memory_space<vmem>>, vector<8x128xf32>
    %c0_2 = arith.constant 0 : index
    %c0_3 = arith.constant 0 : index
    %4 = vector.load %arg6[%c0_2, %c0_3] : memref<8x128xf32, #tpu.memory_space<vmem>>, vector<8x128xf32>
    %c0_i32_4 = arith.constant 0 : i32
    %5 = arith.index_cast %c0_i32_4 : i32 to index
    %c0_5 = arith.constant 0 : index
    %c0_6 = arith.constant 0 : index
    %6 = vector.load %arg2[%5, %c0_5, %c0_6] : memref<8x8x512xf32, #tpu.memory_space<vmem>>, vector<1x8x512xf32>
    %7 = vector.shape_cast %6 : vector<1x8x512xf32> to vector<8x512xf32>
    %8 = vector.extract_strided_slice %7 {offsets = [0, 0], sizes = [8, 384], strides = [1, 1]} : vector<8x512xf32> to vector<8x384xf32>
    %c0_7 = arith.constant 0 : index
    %c0_8 = arith.constant 0 : index
    %9 = vector.load %arg3[%c0_7, %c0_8] : memref<128x512xf32, #tpu.memory_space<vmem>>, vector<128x384xf32>
    %cst = arith.constant dense<0.000000e+00> : vector<8x384xf32>
    %10 = tpu.matmul %3, %9, %cst {dimension_numbers = #tpu.dot_dimension_numbers<[1], [0], [0], [1], [0, 0, 1, 1], [], []>} : vector<8x128xf32>, vector<128x384xf32>, vector<8x384xf32> -> vector<8x384xf32>
    %11 = arith.addf %8, %10 : vector<8x384xf32>
    %12 = vector.extract_strided_slice %7 {offsets = [0, 384], sizes = [8, 128], strides = [1, 1]} : vector<8x512xf32> to vector<8x128xf32>
    %c0_9 = arith.constant 0 : index
    %c384 = arith.constant 384 : index
    %13 = vector.load %arg3[%c0_9, %c384] : memref<128x512xf32, #tpu.memory_space<vmem>>, vector<128x128xf32>
    %cst_10 = arith.constant dense<0.000000e+00> : vector<8x128xf32>
    %14 = tpu.matmul %3, %13, %cst_10 {dimension_numbers = #tpu.dot_dimension_numbers<[1], [0], [0], [1], [0, 0, 1, 1], [], []>} : vector<8x128xf32>, vector<128x128xf32>, vector<8x128xf32> -> vector<8x128xf32>
    %15 = arith.addf %12, %14 : vector<8x128xf32>
    %16 = arith.negf %11 : vector<8x384xf32>
    %17 = math.exp %16 : vector<8x384xf32>
    %cst_11 = arith.constant 1.000000e+00 : f32
    %18 = vector.broadcast %cst_11 : f32 to vector<8x384xf32>
    %19 = arith.addf %18, %17 : vector<8x384xf32>
    %20 = arith.divf %18, %19 : vector<8x384xf32>
    %21 = math.tanh %15 : vector<8x128xf32>
    %22 = vector.extract_strided_slice %20 {offsets = [0, 0], sizes = [8, 128], strides = [1, 1]} : vector<8x384xf32> to vector<8x128xf32>
    %23 = vector.extract_strided_slice %20 {offsets = [0, 128], sizes = [8, 128], strides = [1, 1]} : vector<8x384xf32> to vector<8x128xf32>
    %24 = vector.extract_strided_slice %20 {offsets = [0, 256], sizes = [8, 128], strides = [1, 1]} : vector<8x384xf32> to vector<8x128xf32>
    %25 = arith.mulf %23, %4 : vector<8x128xf32>
    %26 = arith.mulf %22, %21 : vector<8x128xf32>
    %27 = arith.addf %25, %26 : vector<8x128xf32>
    %28 = math.tanh %27 : vector<8x128xf32>
    %29 = arith.mulf %24, %28 : vector<8x128xf32>
    %c1_i32 = arith.constant 1 : i32
    %30 = arith.index_cast %c1_i32 : i32 to index
    %c0_12 = arith.constant 0 : index
    %c0_13 = arith.constant 0 : index
    %31 = vector.load %arg2[%30, %c0_12, %c0_13] : memref<8x8x512xf32, #tpu.memory_space<vmem>>, vector<1x8x512xf32>
    %32 = vector.shape_cast %31 : vector<1x8x512xf32> to vector<8x512xf32>
    %33 = vector.extract_strided_slice %32 {offsets = [0, 0], sizes = [8, 384], strides = [1, 1]} : vector<8x512xf32> to vector<8x384xf32>
    %c0_14 = arith.constant 0 : index
    %c0_15 = arith.constant 0 : index
    %34 = vector.load %arg3[%c0_14, %c0_15] : memref<128x512xf32, #tpu.memory_space<vmem>>, vector<128x384xf32>
    %cst_16 = arith.constant dense<0.000000e+00> : vector<8x384xf32>
    %35 = tpu.matmul %29, %34, %cst_16 {dimension_numbers = #tpu.dot_dimension_numbers<[1], [0], [0], [1], [0, 0, 1, 1], [], []>} : vector<8x128xf32>, vector<128x384xf32>, vector<8x384xf32> -> vector<8x384xf32>
    %36 = arith.addf %33, %35 : vector<8x384xf32>
    %37 = vector.extract_strided_slice %32 {offsets = [0, 384], sizes = [8, 128], strides = [1, 1]} : vector<8x512xf32> to vector<8x128xf32>
    %c0_17 = arith.constant 0 : index
    %c384_18 = arith.constant 384 : index
    %38 = vector.load %arg3[%c0_17, %c384_18] : memref<128x512xf32, #tpu.memory_space<vmem>>, vector<128x128xf32>
    %cst_19 = arith.constant dense<0.000000e+00> : vector<8x128xf32>
    %39 = tpu.matmul %29, %38, %cst_19 {dimension_numbers = #tpu.dot_dimension_numbers<[1], [0], [0], [1], [0, 0, 1, 1], [], []>} : vector<8x128xf32>, vector<128x128xf32>, vector<8x128xf32> -> vector<8x128xf32>
    %40 = arith.addf %37, %39 : vector<8x128xf32>
    %41 = arith.negf %36 : vector<8x384xf32>
    %42 = math.exp %41 : vector<8x384xf32>
    %cst_20 = arith.constant 1.000000e+00 : f32
    %43 = vector.broadcast %cst_20 : f32 to vector<8x384xf32>
    %44 = arith.addf %43, %42 : vector<8x384xf32>
    %45 = arith.divf %43, %44 : vector<8x384xf32>
    %46 = math.tanh %40 : vector<8x128xf32>
    %47 = vector.extract_strided_slice %45 {offsets = [0, 0], sizes = [8, 128], strides = [1, 1]} : vector<8x384xf32> to vector<8x128xf32>
    %48 = vector.extract_strided_slice %45 {offsets = [0, 128], sizes = [8, 128], strides = [1, 1]} : vector<8x384xf32> to vector<8x128xf32>
    %49 = vector.extract_strided_slice %45 {offsets = [0, 256], sizes = [8, 128], strides = [1, 1]} : vector<8x384xf32> to vector<8x128xf32>
    %50 = arith.mulf %48, %27 : vector<8x128xf32>
    %51 = arith.mulf %47, %46 : vector<8x128xf32>
    %52 = arith.addf %50, %51 : vector<8x128xf32>
    %53 = math.tanh %52 : vector<8x128xf32>
    %54 = arith.mulf %49, %53 : vector<8x128xf32>
    %c2_i32 = arith.constant 2 : i32
    %55 = arith.index_cast %c2_i32 : i32 to index
    %c0_21 = arith.constant 0 : index
    %c0_22 = arith.constant 0 : index
    %56 = vector.load %arg2[%55, %c0_21, %c0_22] : memref<8x8x512xf32, #tpu.memory_space<vmem>>, vector<1x8x512xf32>
    %57 = vector.shape_cast %56 : vector<1x8x512xf32> to vector<8x512xf32>
    %58 = vector.extract_strided_slice %57 {offsets = [0, 0], sizes = [8, 384], strides = [1, 1]} : vector<8x512xf32> to vector<8x384xf32>
    %c0_23 = arith.constant 0 : index
    %c0_24 = arith.constant 0 : index
    %59 = vector.load %arg3[%c0_23, %c0_24] : memref<128x512xf32, #tpu.memory_space<vmem>>, vector<128x384xf32>
    %cst_25 = arith.constant dense<0.000000e+00> : vector<8x384xf32>
    %60 = tpu.matmul %54, %59, %cst_25 {dimension_numbers = #tpu.dot_dimension_numbers<[1], [0], [0], [1], [0, 0, 1, 1], [], []>} : vector<8x128xf32>, vector<128x384xf32>, vector<8x384xf32> -> vector<8x384xf32>
    %61 = arith.addf %58, %60 : vector<8x384xf32>
    %62 = vector.extract_strided_slice %57 {offsets = [0, 384], sizes = [8, 128], strides = [1, 1]} : vector<8x512xf32> to vector<8x128xf32>
    %c0_26 = arith.constant 0 : index
    %c384_27 = arith.constant 384 : index
    %63 = vector.load %arg3[%c0_26, %c384_27] : memref<128x512xf32, #tpu.memory_space<vmem>>, vector<128x128xf32>
    %cst_28 = arith.constant dense<0.000000e+00> : vector<8x128xf32>
    %64 = tpu.matmul %54, %63, %cst_28 {dimension_numbers = #tpu.dot_dimension_numbers<[1], [0], [0], [1], [0, 0, 1, 1], [], []>} : vector<8x128xf32>, vector<128x128xf32>, vector<8x128xf32> -> vector<8x128xf32>
    %65 = arith.addf %62, %64 : vector<8x128xf32>
    %66 = arith.negf %61 : vector<8x384xf32>
    %67 = math.exp %66 : vector<8x384xf32>
    %cst_29 = arith.constant 1.000000e+00 : f32
    %68 = vector.broadcast %cst_29 : f32 to vector<8x384xf32>
    %69 = arith.addf %68, %67 : vector<8x384xf32>
    %70 = arith.divf %68, %69 : vector<8x384xf32>
    %71 = math.tanh %65 : vector<8x128xf32>
    %72 = vector.extract_strided_slice %70 {offsets = [0, 0], sizes = [8, 128], strides = [1, 1]} : vector<8x384xf32> to vector<8x128xf32>
    %73 = vector.extract_strided_slice %70 {offsets = [0, 128], sizes = [8, 128], strides = [1, 1]} : vector<8x384xf32> to vector<8x128xf32>
    %74 = vector.extract_strided_slice %70 {offsets = [0, 256], sizes = [8, 128], strides = [1, 1]} : vector<8x384xf32> to vector<8x128xf32>
    %75 = arith.mulf %73, %52 : vector<8x128xf32>
    %76 = arith.mulf %72, %71 : vector<8x128xf32>
    %77 = arith.addf %75, %76 : vector<8x128xf32>
    %78 = math.tanh %77 : vector<8x128xf32>
    %79 = arith.mulf %74, %78 : vector<8x128xf32>
    %c3_i32 = arith.constant 3 : i32
    %80 = arith.index_cast %c3_i32 : i32 to index
    %c0_30 = arith.constant 0 : index
    %c0_31 = arith.constant 0 : index
    %81 = vector.load %arg2[%80, %c0_30, %c0_31] : memref<8x8x512xf32, #tpu.memory_space<vmem>>, vector<1x8x512xf32>
    %82 = vector.shape_cast %81 : vector<1x8x512xf32> to vector<8x512xf32>
    %83 = vector.extract_strided_slice %82 {offsets = [0, 0], sizes = [8, 384], strides = [1, 1]} : vector<8x512xf32> to vector<8x384xf32>
    %c0_32 = arith.constant 0 : index
    %c0_33 = arith.constant 0 : index
    %84 = vector.load %arg3[%c0_32, %c0_33] : memref<128x512xf32, #tpu.memory_space<vmem>>, vector<128x384xf32>
    %cst_34 = arith.constant dense<0.000000e+00> : vector<8x384xf32>
    %85 = tpu.matmul %79, %84, %cst_34 {dimension_numbers = #tpu.dot_dimension_numbers<[1], [0], [0], [1], [0, 0, 1, 1], [], []>} : vector<8x128xf32>, vector<128x384xf32>, vector<8x384xf32> -> vector<8x384xf32>
    %86 = arith.addf %83, %85 : vector<8x384xf32>
    %87 = vector.extract_strided_slice %82 {offsets = [0, 384], sizes = [8, 128], strides = [1, 1]} : vector<8x512xf32> to vector<8x128xf32>
    %c0_35 = arith.constant 0 : index
    %c384_36 = arith.constant 384 : index
    %88 = vector.load %arg3[%c0_35, %c384_36] : memref<128x512xf32, #tpu.memory_space<vmem>>, vector<128x128xf32>
    %cst_37 = arith.constant dense<0.000000e+00> : vector<8x128xf32>
    %89 = tpu.matmul %79, %88, %cst_37 {dimension_numbers = #tpu.dot_dimension_numbers<[1], [0], [0], [1], [0, 0, 1, 1], [], []>} : vector<8x128xf32>, vector<128x128xf32>, vector<8x128xf32> -> vector<8x128xf32>
    %90 = arith.addf %87, %89 : vector<8x128xf32>
    %91 = arith.negf %86 : vector<8x384xf32>
    %92 = math.exp %91 : vector<8x384xf32>
    %cst_38 = arith.constant 1.000000e+00 : f32
    %93 = vector.broadcast %cst_38 : f32 to vector<8x384xf32>
    %94 = arith.addf %93, %92 : vector<8x384xf32>
    %95 = arith.divf %93, %94 : vector<8x384xf32>
    %96 = math.tanh %90 : vector<8x128xf32>
    %97 = vector.extract_strided_slice %95 {offsets = [0, 0], sizes = [8, 128], strides = [1, 1]} : vector<8x384xf32> to vector<8x128xf32>
    %98 = vector.extract_strided_slice %95 {offsets = [0, 128], sizes = [8, 128], strides = [1, 1]} : vector<8x384xf32> to vector<8x128xf32>
    %99 = vector.extract_strided_slice %95 {offsets = [0, 256], sizes = [8, 128], strides = [1, 1]} : vector<8x384xf32> to vector<8x128xf32>
    %100 = arith.mulf %98, %77 : vector<8x128xf32>
    %101 = arith.mulf %97, %96 : vector<8x128xf32>
    %102 = arith.addf %100, %101 : vector<8x128xf32>
    %103 = math.tanh %102 : vector<8x128xf32>
    %104 = arith.mulf %99, %103 : vector<8x128xf32>
    %c4_i32 = arith.constant 4 : i32
    %105 = arith.index_cast %c4_i32 : i32 to index
    %c0_39 = arith.constant 0 : index
    %c0_40 = arith.constant 0 : index
    %106 = vector.load %arg2[%105, %c0_39, %c0_40] : memref<8x8x512xf32, #tpu.memory_space<vmem>>, vector<1x8x512xf32>
    %107 = vector.shape_cast %106 : vector<1x8x512xf32> to vector<8x512xf32>
    %108 = vector.extract_strided_slice %107 {offsets = [0, 0], sizes = [8, 384], strides = [1, 1]} : vector<8x512xf32> to vector<8x384xf32>
    %c0_41 = arith.constant 0 : index
    %c0_42 = arith.constant 0 : index
    %109 = vector.load %arg3[%c0_41, %c0_42] : memref<128x512xf32, #tpu.memory_space<vmem>>, vector<128x384xf32>
    %cst_43 = arith.constant dense<0.000000e+00> : vector<8x384xf32>
    %110 = tpu.matmul %104, %109, %cst_43 {dimension_numbers = #tpu.dot_dimension_numbers<[1], [0], [0], [1], [0, 0, 1, 1], [], []>} : vector<8x128xf32>, vector<128x384xf32>, vector<8x384xf32> -> vector<8x384xf32>
    %111 = arith.addf %108, %110 : vector<8x384xf32>
    %112 = vector.extract_strided_slice %107 {offsets = [0, 384], sizes = [8, 128], strides = [1, 1]} : vector<8x512xf32> to vector<8x128xf32>
    %c0_44 = arith.constant 0 : index
    %c384_45 = arith.constant 384 : index
    %113 = vector.load %arg3[%c0_44, %c384_45] : memref<128x512xf32, #tpu.memory_space<vmem>>, vector<128x128xf32>
    %cst_46 = arith.constant dense<0.000000e+00> : vector<8x128xf32>
    %114 = tpu.matmul %104, %113, %cst_46 {dimension_numbers = #tpu.dot_dimension_numbers<[1], [0], [0], [1], [0, 0, 1, 1], [], []>} : vector<8x128xf32>, vector<128x128xf32>, vector<8x128xf32> -> vector<8x128xf32>
    %115 = arith.addf %112, %114 : vector<8x128xf32>
    %116 = arith.negf %111 : vector<8x384xf32>
    %117 = math.exp %116 : vector<8x384xf32>
    %cst_47 = arith.constant 1.000000e+00 : f32
    %118 = vector.broadcast %cst_47 : f32 to vector<8x384xf32>
    %119 = arith.addf %118, %117 : vector<8x384xf32>
    %120 = arith.divf %118, %119 : vector<8x384xf32>
    %121 = math.tanh %115 : vector<8x128xf32>
    %122 = vector.extract_strided_slice %120 {offsets = [0, 0], sizes = [8, 128], strides = [1, 1]} : vector<8x384xf32> to vector<8x128xf32>
    %123 = vector.extract_strided_slice %120 {offsets = [0, 128], sizes = [8, 128], strides = [1, 1]} : vector<8x384xf32> to vector<8x128xf32>
    %124 = vector.extract_strided_slice %120 {offsets = [0, 256], sizes = [8, 128], strides = [1, 1]} : vector<8x384xf32> to vector<8x128xf32>
    %125 = arith.mulf %123, %102 : vector<8x128xf32>
    %126 = arith.mulf %122, %121 : vector<8x128xf32>
    %127 = arith.addf %125, %126 : vector<8x128xf32>
    %128 = math.tanh %127 : vector<8x128xf32>
    %129 = arith.mulf %124, %128 : vector<8x128xf32>
    %c5_i32 = arith.constant 5 : i32
    %130 = arith.index_cast %c5_i32 : i32 to index
    %c0_48 = arith.constant 0 : index
    %c0_49 = arith.constant 0 : index
    %131 = vector.load %arg2[%130, %c0_48, %c0_49] : memref<8x8x512xf32, #tpu.memory_space<vmem>>, vector<1x8x512xf32>
    %132 = vector.shape_cast %131 : vector<1x8x512xf32> to vector<8x512xf32>
    %133 = vector.extract_strided_slice %132 {offsets = [0, 0], sizes = [8, 384], strides = [1, 1]} : vector<8x512xf32> to vector<8x384xf32>
    %c0_50 = arith.constant 0 : index
    %c0_51 = arith.constant 0 : index
    %134 = vector.load %arg3[%c0_50, %c0_51] : memref<128x512xf32, #tpu.memory_space<vmem>>, vector<128x384xf32>
    %cst_52 = arith.constant dense<0.000000e+00> : vector<8x384xf32>
    %135 = tpu.matmul %129, %134, %cst_52 {dimension_numbers = #tpu.dot_dimension_numbers<[1], [0], [0], [1], [0, 0, 1, 1], [], []>} : vector<8x128xf32>, vector<128x384xf32>, vector<8x384xf32> -> vector<8x384xf32>
    %136 = arith.addf %133, %135 : vector<8x384xf32>
    %137 = vector.extract_strided_slice %132 {offsets = [0, 384], sizes = [8, 128], strides = [1, 1]} : vector<8x512xf32> to vector<8x128xf32>
    %c0_53 = arith.constant 0 : index
    %c384_54 = arith.constant 384 : index
    %138 = vector.load %arg3[%c0_53, %c384_54] : memref<128x512xf32, #tpu.memory_space<vmem>>, vector<128x128xf32>
    %cst_55 = arith.constant dense<0.000000e+00> : vector<8x128xf32>
    %139 = tpu.matmul %129, %138, %cst_55 {dimension_numbers = #tpu.dot_dimension_numbers<[1], [0], [0], [1], [0, 0, 1, 1], [], []>} : vector<8x128xf32>, vector<128x128xf32>, vector<8x128xf32> -> vector<8x128xf32>
    %140 = arith.addf %137, %139 : vector<8x128xf32>
    %141 = arith.negf %136 : vector<8x384xf32>
    %142 = math.exp %141 : vector<8x384xf32>
    %cst_56 = arith.constant 1.000000e+00 : f32
    %143 = vector.broadcast %cst_56 : f32 to vector<8x384xf32>
    %144 = arith.addf %143, %142 : vector<8x384xf32>
    %145 = arith.divf %143, %144 : vector<8x384xf32>
    %146 = math.tanh %140 : vector<8x128xf32>
    %147 = vector.extract_strided_slice %145 {offsets = [0, 0], sizes = [8, 128], strides = [1, 1]} : vector<8x384xf32> to vector<8x128xf32>
    %148 = vector.extract_strided_slice %145 {offsets = [0, 128], sizes = [8, 128], strides = [1, 1]} : vector<8x384xf32> to vector<8x128xf32>
    %149 = vector.extract_strided_slice %145 {offsets = [0, 256], sizes = [8, 128], strides = [1, 1]} : vector<8x384xf32> to vector<8x128xf32>
    %150 = arith.mulf %148, %127 : vector<8x128xf32>
    %151 = arith.mulf %147, %146 : vector<8x128xf32>
    %152 = arith.addf %150, %151 : vector<8x128xf32>
    %153 = math.tanh %152 : vector<8x128xf32>
    %154 = arith.mulf %149, %153 : vector<8x128xf32>
    %c6_i32 = arith.constant 6 : i32
    %155 = arith.index_cast %c6_i32 : i32 to index
    %c0_57 = arith.constant 0 : index
    %c0_58 = arith.constant 0 : index
    %156 = vector.load %arg2[%155, %c0_57, %c0_58] : memref<8x8x512xf32, #tpu.memory_space<vmem>>, vector<1x8x512xf32>
    %157 = vector.shape_cast %156 : vector<1x8x512xf32> to vector<8x512xf32>
    %158 = vector.extract_strided_slice %157 {offsets = [0, 0], sizes = [8, 384], strides = [1, 1]} : vector<8x512xf32> to vector<8x384xf32>
    %c0_59 = arith.constant 0 : index
    %c0_60 = arith.constant 0 : index
    %159 = vector.load %arg3[%c0_59, %c0_60] : memref<128x512xf32, #tpu.memory_space<vmem>>, vector<128x384xf32>
    %cst_61 = arith.constant dense<0.000000e+00> : vector<8x384xf32>
    %160 = tpu.matmul %154, %159, %cst_61 {dimension_numbers = #tpu.dot_dimension_numbers<[1], [0], [0], [1], [0, 0, 1, 1], [], []>} : vector<8x128xf32>, vector<128x384xf32>, vector<8x384xf32> -> vector<8x384xf32>
    %161 = arith.addf %158, %160 : vector<8x384xf32>
    %162 = vector.extract_strided_slice %157 {offsets = [0, 384], sizes = [8, 128], strides = [1, 1]} : vector<8x512xf32> to vector<8x128xf32>
    %c0_62 = arith.constant 0 : index
    %c384_63 = arith.constant 384 : index
    %163 = vector.load %arg3[%c0_62, %c384_63] : memref<128x512xf32, #tpu.memory_space<vmem>>, vector<128x128xf32>
    %cst_64 = arith.constant dense<0.000000e+00> : vector<8x128xf32>
    %164 = tpu.matmul %154, %163, %cst_64 {dimension_numbers = #tpu.dot_dimension_numbers<[1], [0], [0], [1], [0, 0, 1, 1], [], []>} : vector<8x128xf32>, vector<128x128xf32>, vector<8x128xf32> -> vector<8x128xf32>
    %165 = arith.addf %162, %164 : vector<8x128xf32>
    %166 = arith.negf %161 : vector<8x384xf32>
    %167 = math.exp %166 : vector<8x384xf32>
    %cst_65 = arith.constant 1.000000e+00 : f32
    %168 = vector.broadcast %cst_65 : f32 to vector<8x384xf32>
    %169 = arith.addf %168, %167 : vector<8x384xf32>
    %170 = arith.divf %168, %169 : vector<8x384xf32>
    %171 = math.tanh %165 : vector<8x128xf32>
    %172 = vector.extract_strided_slice %170 {offsets = [0, 0], sizes = [8, 128], strides = [1, 1]} : vector<8x384xf32> to vector<8x128xf32>
    %173 = vector.extract_strided_slice %170 {offsets = [0, 128], sizes = [8, 128], strides = [1, 1]} : vector<8x384xf32> to vector<8x128xf32>
    %174 = vector.extract_strided_slice %170 {offsets = [0, 256], sizes = [8, 128], strides = [1, 1]} : vector<8x384xf32> to vector<8x128xf32>
    %175 = arith.mulf %173, %152 : vector<8x128xf32>
    %176 = arith.mulf %172, %171 : vector<8x128xf32>
    %177 = arith.addf %175, %176 : vector<8x128xf32>
    %178 = math.tanh %177 : vector<8x128xf32>
    %179 = arith.mulf %174, %178 : vector<8x128xf32>
    %c7_i32 = arith.constant 7 : i32
    %180 = arith.index_cast %c7_i32 : i32 to index
    %c0_66 = arith.constant 0 : index
    %c0_67 = arith.constant 0 : index
    %181 = vector.load %arg2[%180, %c0_66, %c0_67] : memref<8x8x512xf32, #tpu.memory_space<vmem>>, vector<1x8x512xf32>
    %182 = vector.shape_cast %181 : vector<1x8x512xf32> to vector<8x512xf32>
    %183 = vector.extract_strided_slice %182 {offsets = [0, 0], sizes = [8, 384], strides = [1, 1]} : vector<8x512xf32> to vector<8x384xf32>
    %c0_68 = arith.constant 0 : index
    %c0_69 = arith.constant 0 : index
    %184 = vector.load %arg3[%c0_68, %c0_69] : memref<128x512xf32, #tpu.memory_space<vmem>>, vector<128x384xf32>
    %cst_70 = arith.constant dense<0.000000e+00> : vector<8x384xf32>
    %185 = tpu.matmul %179, %184, %cst_70 {dimension_numbers = #tpu.dot_dimension_numbers<[1], [0], [0], [1], [0, 0, 1, 1], [], []>} : vector<8x128xf32>, vector<128x384xf32>, vector<8x384xf32> -> vector<8x384xf32>
    %186 = arith.addf %183, %185 : vector<8x384xf32>
    %187 = vector.extract_strided_slice %182 {offsets = [0, 384], sizes = [8, 128], strides = [1, 1]} : vector<8x512xf32> to vector<8x128xf32>
    %c0_71 = arith.constant 0 : index
    %c384_72 = arith.constant 384 : index
    %188 = vector.load %arg3[%c0_71, %c384_72] : memref<128x512xf32, #tpu.memory_space<vmem>>, vector<128x128xf32>
    %cst_73 = arith.constant dense<0.000000e+00> : vector<8x128xf32>
    %189 = tpu.matmul %179, %188, %cst_73 {dimension_numbers = #tpu.dot_dimension_numbers<[1], [0], [0], [1], [0, 0, 1, 1], [], []>} : vector<8x128xf32>, vector<128x128xf32>, vector<8x128xf32> -> vector<8x128xf32>
    %190 = arith.addf %187, %189 : vector<8x128xf32>
    %191 = arith.negf %186 : vector<8x384xf32>
    %192 = math.exp %191 : vector<8x384xf32>
    %cst_74 = arith.constant 1.000000e+00 : f32
    %193 = vector.broadcast %cst_74 : f32 to vector<8x384xf32>
    %194 = arith.addf %193, %192 : vector<8x384xf32>
    %195 = arith.divf %193, %194 : vector<8x384xf32>
    %196 = math.tanh %190 : vector<8x128xf32>
    %197 = vector.extract_strided_slice %195 {offsets = [0, 0], sizes = [8, 128], strides = [1, 1]} : vector<8x384xf32> to vector<8x128xf32>
    %198 = vector.extract_strided_slice %195 {offsets = [0, 128], sizes = [8, 128], strides = [1, 1]} : vector<8x384xf32> to vector<8x128xf32>
    %199 = vector.extract_strided_slice %195 {offsets = [0, 256], sizes = [8, 128], strides = [1, 1]} : vector<8x384xf32> to vector<8x128xf32>
    %200 = arith.mulf %198, %177 : vector<8x128xf32>
    %201 = arith.mulf %197, %196 : vector<8x128xf32>
    %202 = arith.addf %200, %201 : vector<8x128xf32>
    %203 = math.tanh %202 : vector<8x128xf32>
    %204 = arith.mulf %199, %203 : vector<8x128xf32>
    %c8_i32 = arith.constant 8 : i32
    %c0_75 = arith.constant 0 : index
    %c0_76 = arith.constant 0 : index
    %205 = vector.load %arg5[%c0_75, %c0_76] : memref<8x128xf32, #tpu.memory_space<vmem>>, vector<8x128xf32>
    tpu.vector_store %arg5[%c0_75, %c0_76], %204 {strides = array<i32>} : memref<8x128xf32, #tpu.memory_space<vmem>>, vector<8x128xf32>,
    %c0_77 = arith.constant 0 : index
    %c0_78 = arith.constant 0 : index
    %206 = vector.load %arg6[%c0_77, %c0_78] : memref<8x128xf32, #tpu.memory_space<vmem>>, vector<8x128xf32>
    tpu.vector_store %arg6[%c0_77, %c0_78], %202 {strides = array<i32>} : memref<8x128xf32, #tpu.memory_space<vmem>>, vector<8x128xf32>,
    %c0_i32_79 = arith.constant 0 : i32
    %207 = arith.cmpi eq, %arg1, %c0_i32_79 : i32
    %208 = arith.extui %207 : i1 to i32
    %c0_i32_80 = arith.constant 0 : i32
    %209 = arith.cmpi ne, %208, %c0_i32_80 : i32
    scf.if %209 {
      %c0_81 = arith.constant 0 : index
      %c0_82 = arith.constant 0 : index
      %210 = vector.load %arg4[%c0_81, %c0_82] : memref<8x128xf32, #tpu.memory_space<vmem>>, vector<8x128xf32>
      tpu.vector_store %arg4[%c0_81, %c0_82], %204 {strides = array<i32>} : memref<8x128xf32, #tpu.memory_space<vmem>>, vector<8x128xf32>,
    } else {
    }
    return
  }
  func.func @transform_0(%arg0: i32, %arg1: i32) -> (i32, i32, i32) {
    %c0_i32 = arith.constant 0 : i32
    %c0_i32_0 = arith.constant 0 : i32
    return %arg1, %arg0, %c0_i32 : i32, i32, i32
  }
  func.func @transform_1(%arg0: i32, %arg1: i32) -> (i32, i32) {
    %c0_i32 = arith.constant 0 : i32
    %c0_i32_0 = arith.constant 0 : i32
    %c0_i32_1 = arith.constant 0 : i32
    return %c0_i32, %c0_i32_0 : i32, i32
  }
  func.func @transform_2(%arg0: i32, %arg1: i32) -> (i32, i32) {
    %c0_i32 = arith.constant 0 : i32
    %c0_i32_0 = arith.constant 0 : i32
    return %arg0, %c0_i32 : i32, i32
  }
}

module attributes {stable_mosaic.version = 11 : i64} {
  func.func @kernel(%arg0: i32, %arg1: i32, %arg2: memref<8x8x512xf32, #tpu.memory_space<vmem>>, %arg3: memref<128x512xf32, #tpu.memory_space<vmem>>, %arg4: memref<8x128xf32, #tpu.memory_space<vmem>>, %arg5: memref<8x128xf32, #tpu.memory_space<vmem>>, %arg6: memref<8x128xf32, #tpu.memory_space<vmem>>) attributes {dimension_semantics = [#tpu.dimension_semantics<parallel>, #tpu.dimension_semantics<arbitrary>], iteration_bounds = array<i64: 1, 1>, scalar_prefetch = 0 : i64, scratch_operands = 2 : i64, tpu.core_type = #tpu.core_type<tc>, window_params = [{transform_indices = @transform_0, window_bounds = array<i64: 8, 8, 512>}, {pipeline_mode = #tpu.pipeline_mode<synchronous>, transform_indices = @transform_1, window_bounds = array<i64: 128, 512>}, {transform_indices = @transform_2, window_bounds = array<i64: 8, 128>}]} {
    %c0_i32 = arith.constant 0 : i32
    %0 = arith.cmpi eq, %arg1, %c0_i32 : i32
    %1 = arith.extui %0 : i1 to i32
    %c0_i32_0 = arith.constant 0 : i32
    %2 = arith.cmpi ne, %1, %c0_i32_0 : i32
    scf.if %2 {
      %cst_81 = arith.constant 0.000000e+00 : f32
      %210 = vector.broadcast %cst_81 : f32 to vector<8x128xf32>
      %c0_82 = arith.constant 0 : index
      %c0_83 = arith.constant 0 : index
      %211 = vector.load %arg5[%c0_82, %c0_83] : memref<8x128xf32, #tpu.memory_space<vmem>>, vector<8x128xf32>
      tpu.vector_store %arg5[%c0_82, %c0_83], %210 {strides = array<i32>} : memref<8x128xf32, #tpu.memory_space<vmem>>, vector<8x128xf32>,
      %cst_84 = arith.constant 0.000000e+00 : f32
      %212 = vector.broadcast %cst_84 : f32 to vector<8x128xf32>
      %c0_85 = arith.constant 0 : index
      %c0_86 = arith.constant 0 : index
      %213 = vector.load %arg6[%c0_85, %c0_86] : memref<8x128xf32, #tpu.memory_space<vmem>>, vector<8x128xf32>
      tpu.vector_store %arg6[%c0_85, %c0_86], %212 {strides = array<i32>} : memref<8x128xf32, #tpu.memory_space<vmem>>, vector<8x128xf32>,
    } else {
    }
    %c0 = arith.constant 0 : index
    %c0_1 = arith.constant 0 : index
    %3 = vector.load %arg5[%c0, %c0_1] : memref<8x128xf32, #tpu.memory_space<vmem>>, vector<8x128xf32>
    %c0_2 = arith.constant 0 : index
    %c0_3 = arith.constant 0 : index
    %4 = vector.load %arg6[%c0_2, %c0_3] : memref<8x128xf32, #tpu.memory_space<vmem>>, vector<8x128xf32>
    %c0_i32_4 = arith.constant 0 : i32
    %5 = arith.index_cast %c0_i32_4 : i32 to index
    %c0_5 = arith.constant 0 : index
    %c0_6 = arith.constant 0 : index
    %6 = vector.load %arg2[%5, %c0_5, %c0_6] : memref<8x8x512xf32, #tpu.memory_space<vmem>>, vector<1x8x512xf32>
    %7 = vector.shape_cast %6 : vector<1x8x512xf32> to vector<8x512xf32>
    %8 = vector.extract_strided_slice %7 {offsets = [0, 0], sizes = [8, 384], strides = [1, 1]} : vector<8x512xf32> to vector<8x384xf32>
    %c0_7 = arith.constant 0 : index
    %c0_8 = arith.constant 0 : index
    %9 = vector.load %arg3[%c0_7, %c0_8] : memref<128x512xf32, #tpu.memory_space<vmem>>, vector<128x384xf32>
    %cst = arith.constant dense<0.000000e+00> : vector<8x384xf32>
    %10 = tpu.matmul %3, %9, %cst {dimension_numbers = #tpu.dot_dimension_numbers<[1], [0], [0], [1], [0, 0, 1, 1], [], []>} : vector<8x128xf32>, vector<128x384xf32>, vector<8x384xf32> -> vector<8x384xf32>
    %11 = arith.addf %8, %10 : vector<8x384xf32>
    %12 = vector.extract_strided_slice %7 {offsets = [0, 384], sizes = [8, 128], strides = [1, 1]} : vector<8x512xf32> to vector<8x128xf32>
    %c0_9 = arith.constant 0 : index
    %c384 = arith.constant 384 : index
    %13 = vector.load %arg3[%c0_9, %c384] : memref<128x512xf32, #tpu.memory_space<vmem>>, vector<128x128xf32>
    %cst_10 = arith.constant dense<0.000000e+00> : vector<8x128xf32>
    %14 = tpu.matmul %3, %13, %cst_10 {dimension_numbers = #tpu.dot_dimension_numbers<[1], [0], [0], [1], [0, 0, 1, 1], [], []>} : vector<8x128xf32>, vector<128x128xf32>, vector<8x128xf32> -> vector<8x128xf32>
    %15 = arith.addf %12, %14 : vector<8x128xf32>
    %16 = arith.negf %11 : vector<8x384xf32>
    %17 = math.exp %16 : vector<8x384xf32>
    %cst_11 = arith.constant 1.000000e+00 : f32
    %18 = vector.broadcast %cst_11 : f32 to vector<8x384xf32>
    %19 = arith.addf %18, %17 : vector<8x384xf32>
    %20 = arith.divf %18, %19 : vector<8x384xf32>
    %21 = math.tanh %15 : vector<8x128xf32>
    %22 = vector.extract_strided_slice %20 {offsets = [0, 0], sizes = [8, 128], strides = [1, 1]} : vector<8x384xf32> to vector<8x128xf32>
    %23 = vector.extract_strided_slice %20 {offsets = [0, 128], sizes = [8, 128], strides = [1, 1]} : vector<8x384xf32> to vector<8x128xf32>
    %24 = vector.extract_strided_slice %20 {offsets = [0, 256], sizes = [8, 128], strides = [1, 1]} : vector<8x384xf32> to vector<8x128xf32>
    %25 = arith.mulf %23, %4 : vector<8x128xf32>
    %26 = arith.mulf %22, %21 : vector<8x128xf32>
    %27 = arith.addf %25, %26 : vector<8x128xf32>
    %28 = math.tanh %27 : vector<8x128xf32>
    %29 = arith.mulf %24, %28 : vector<8x128xf32>
    %c1_i32 = arith.constant 1 : i32
    %30 = arith.index_cast %c1_i32 : i32 to index
    %c0_12 = arith.constant 0 : index
    %c0_13 = arith.constant 0 : index
    %31 = vector.load %arg2[%30, %c0_12, %c0_13] : memref<8x8x512xf32, #tpu.memory_space<vmem>>, vector<1x8x512xf32>
    %32 = vector.shape_cast %31 : vector<1x8x512xf32> to vector<8x512xf32>
    %33 = vector.extract_strided_slice %32 {offsets = [0, 0], sizes = [8, 384], strides = [1, 1]} : vector<8x512xf32> to vector<8x384xf32>
    %c0_14 = arith.constant 0 : index
    %c0_15 = arith.constant 0 : index
    %34 = vector.load %arg3[%c0_14, %c0_15] : memref<128x512xf32, #tpu.memory_space<vmem>>, vector<128x384xf32>
    %cst_16 = arith.constant dense<0.000000e+00> : vector<8x384xf32>
    %35 = tpu.matmul %29, %34, %cst_16 {dimension_numbers = #tpu.dot_dimension_numbers<[1], [0], [0], [1], [0, 0, 1, 1], [], []>} : vector<8x128xf32>, vector<128x384xf32>, vector<8x384xf32> -> vector<8x384xf32>
    %36 = arith.addf %33, %35 : vector<8x384xf32>
    %37 = vector.extract_strided_slice %32 {offsets = [0, 384], sizes = [8, 128], strides = [1, 1]} : vector<8x512xf32> to vector<8x128xf32>
    %c0_17 = arith.constant 0 : index
    %c384_18 = arith.constant 384 : index
    %38 = vector.load %arg3[%c0_17, %c384_18] : memref<128x512xf32, #tpu.memory_space<vmem>>, vector<128x128xf32>
    %cst_19 = arith.constant dense<0.000000e+00> : vector<8x128xf32>
    %39 = tpu.matmul %29, %38, %cst_19 {dimension_numbers = #tpu.dot_dimension_numbers<[1], [0], [0], [1], [0, 0, 1, 1], [], []>} : vector<8x128xf32>, vector<128x128xf32>, vector<8x128xf32> -> vector<8x128xf32>
    %40 = arith.addf %37, %39 : vector<8x128xf32>
    %41 = arith.negf %36 : vector<8x384xf32>
    %42 = math.exp %41 : vector<8x384xf32>
    %cst_20 = arith.constant 1.000000e+00 : f32
    %43 = vector.broadcast %cst_20 : f32 to vector<8x384xf32>
    %44 = arith.addf %43, %42 : vector<8x384xf32>
    %45 = arith.divf %43, %44 : vector<8x384xf32>
    %46 = math.tanh %40 : vector<8x128xf32>
    %47 = vector.extract_strided_slice %45 {offsets = [0, 0], sizes = [8, 128], strides = [1, 1]} : vector<8x384xf32> to vector<8x128xf32>
    %48 = vector.extract_strided_slice %45 {offsets = [0, 128], sizes = [8, 128], strides = [1, 1]} : vector<8x384xf32> to vector<8x128xf32>
    %49 = vector.extract_strided_slice %45 {offsets = [0, 256], sizes = [8, 128], strides = [1, 1]} : vector<8x384xf32> to vector<8x128xf32>
    %50 = arith.mulf %48, %27 : vector<8x128xf32>
    %51 = arith.mulf %47, %46 : vector<8x128xf32>
    %52 = arith.addf %50, %51 : vector<8x128xf32>
    %53 = math.tanh %52 : vector<8x128xf32>
    %54 = arith.mulf %49, %53 : vector<8x128xf32>
    %c2_i32 = arith.constant 2 : i32
    %55 = arith.index_cast %c2_i32 : i32 to index
    %c0_21 = arith.constant 0 : index
    %c0_22 = arith.constant 0 : index
    %56 = vector.load %arg2[%55, %c0_21, %c0_22] : memref<8x8x512xf32, #tpu.memory_space<vmem>>, vector<1x8x512xf32>
    %57 = vector.shape_cast %56 : vector<1x8x512xf32> to vector<8x512xf32>
    %58 = vector.extract_strided_slice %57 {offsets = [0, 0], sizes = [8, 384], strides = [1, 1]} : vector<8x512xf32> to vector<8x384xf32>
    %c0_23 = arith.constant 0 : index
    %c0_24 = arith.constant 0 : index
    %59 = vector.load %arg3[%c0_23, %c0_24] : memref<128x512xf32, #tpu.memory_space<vmem>>, vector<128x384xf32>
    %cst_25 = arith.constant dense<0.000000e+00> : vector<8x384xf32>
    %60 = tpu.matmul %54, %59, %cst_25 {dimension_numbers = #tpu.dot_dimension_numbers<[1], [0], [0], [1], [0, 0, 1, 1], [], []>} : vector<8x128xf32>, vector<128x384xf32>, vector<8x384xf32> -> vector<8x384xf32>
    %61 = arith.addf %58, %60 : vector<8x384xf32>
    %62 = vector.extract_strided_slice %57 {offsets = [0, 384], sizes = [8, 128], strides = [1, 1]} : vector<8x512xf32> to vector<8x128xf32>
    %c0_26 = arith.constant 0 : index
    %c384_27 = arith.constant 384 : index
    %63 = vector.load %arg3[%c0_26, %c384_27] : memref<128x512xf32, #tpu.memory_space<vmem>>, vector<128x128xf32>
    %cst_28 = arith.constant dense<0.000000e+00> : vector<8x128xf32>
    %64 = tpu.matmul %54, %63, %cst_28 {dimension_numbers = #tpu.dot_dimension_numbers<[1], [0], [0], [1], [0, 0, 1, 1], [], []>} : vector<8x128xf32>, vector<128x128xf32>, vector<8x128xf32> -> vector<8x128xf32>
    %65 = arith.addf %62, %64 : vector<8x128xf32>
    %66 = arith.negf %61 : vector<8x384xf32>
    %67 = math.exp %66 : vector<8x384xf32>
    %cst_29 = arith.constant 1.000000e+00 : f32
    %68 = vector.broadcast %cst_29 : f32 to vector<8x384xf32>
    %69 = arith.addf %68, %67 : vector<8x384xf32>
    %70 = arith.divf %68, %69 : vector<8x384xf32>
    %71 = math.tanh %65 : vector<8x128xf32>
    %72 = vector.extract_strided_slice %70 {offsets = [0, 0], sizes = [8, 128], strides = [1, 1]} : vector<8x384xf32> to vector<8x128xf32>
    %73 = vector.extract_strided_slice %70 {offsets = [0, 128], sizes = [8, 128], strides = [1, 1]} : vector<8x384xf32> to vector<8x128xf32>
    %74 = vector.extract_strided_slice %70 {offsets = [0, 256], sizes = [8, 128], strides = [1, 1]} : vector<8x384xf32> to vector<8x128xf32>
    %75 = arith.mulf %73, %52 : vector<8x128xf32>
    %76 = arith.mulf %72, %71 : vector<8x128xf32>
    %77 = arith.addf %75, %76 : vector<8x128xf32>
    %78 = math.tanh %77 : vector<8x128xf32>
    %79 = arith.mulf %74, %78 : vector<8x128xf32>
    %c3_i32 = arith.constant 3 : i32
    %80 = arith.index_cast %c3_i32 : i32 to index
    %c0_30 = arith.constant 0 : index
    %c0_31 = arith.constant 0 : index
    %81 = vector.load %arg2[%80, %c0_30, %c0_31] : memref<8x8x512xf32, #tpu.memory_space<vmem>>, vector<1x8x512xf32>
    %82 = vector.shape_cast %81 : vector<1x8x512xf32> to vector<8x512xf32>
    %83 = vector.extract_strided_slice %82 {offsets = [0, 0], sizes = [8, 384], strides = [1, 1]} : vector<8x512xf32> to vector<8x384xf32>
    %c0_32 = arith.constant 0 : index
    %c0_33 = arith.constant 0 : index
    %84 = vector.load %arg3[%c0_32, %c0_33] : memref<128x512xf32, #tpu.memory_space<vmem>>, vector<128x384xf32>
    %cst_34 = arith.constant dense<0.000000e+00> : vector<8x384xf32>
    %85 = tpu.matmul %79, %84, %cst_34 {dimension_numbers = #tpu.dot_dimension_numbers<[1], [0], [0], [1], [0, 0, 1, 1], [], []>} : vector<8x128xf32>, vector<128x384xf32>, vector<8x384xf32> -> vector<8x384xf32>
    %86 = arith.addf %83, %85 : vector<8x384xf32>
    %87 = vector.extract_strided_slice %82 {offsets = [0, 384], sizes = [8, 128], strides = [1, 1]} : vector<8x512xf32> to vector<8x128xf32>
    %c0_35 = arith.constant 0 : index
    %c384_36 = arith.constant 384 : index
    %88 = vector.load %arg3[%c0_35, %c384_36] : memref<128x512xf32, #tpu.memory_space<vmem>>, vector<128x128xf32>
    %cst_37 = arith.constant dense<0.000000e+00> : vector<8x128xf32>
    %89 = tpu.matmul %79, %88, %cst_37 {dimension_numbers = #tpu.dot_dimension_numbers<[1], [0], [0], [1], [0, 0, 1, 1], [], []>} : vector<8x128xf32>, vector<128x128xf32>, vector<8x128xf32> -> vector<8x128xf32>
    %90 = arith.addf %87, %89 : vector<8x128xf32>
    %91 = arith.negf %86 : vector<8x384xf32>
    %92 = math.exp %91 : vector<8x384xf32>
    %cst_38 = arith.constant 1.000000e+00 : f32
    %93 = vector.broadcast %cst_38 : f32 to vector<8x384xf32>
    %94 = arith.addf %93, %92 : vector<8x384xf32>
    %95 = arith.divf %93, %94 : vector<8x384xf32>
    %96 = math.tanh %90 : vector<8x128xf32>
    %97 = vector.extract_strided_slice %95 {offsets = [0, 0], sizes = [8, 128], strides = [1, 1]} : vector<8x384xf32> to vector<8x128xf32>
    %98 = vector.extract_strided_slice %95 {offsets = [0, 128], sizes = [8, 128], strides = [1, 1]} : vector<8x384xf32> to vector<8x128xf32>
    %99 = vector.extract_strided_slice %95 {offsets = [0, 256], sizes = [8, 128], strides = [1, 1]} : vector<8x384xf32> to vector<8x128xf32>
    %100 = arith.mulf %98, %77 : vector<8x128xf32>
    %101 = arith.mulf %97, %96 : vector<8x128xf32>
    %102 = arith.addf %100, %101 : vector<8x128xf32>
    %103 = math.tanh %102 : vector<8x128xf32>
    %104 = arith.mulf %99, %103 : vector<8x128xf32>
    %c4_i32 = arith.constant 4 : i32
    %105 = arith.index_cast %c4_i32 : i32 to index
    %c0_39 = arith.constant 0 : index
    %c0_40 = arith.constant 0 : index
    %106 = vector.load %arg2[%105, %c0_39, %c0_40] : memref<8x8x512xf32, #tpu.memory_space<vmem>>, vector<1x8x512xf32>
    %107 = vector.shape_cast %106 : vector<1x8x512xf32> to vector<8x512xf32>
    %108 = vector.extract_strided_slice %107 {offsets = [0, 0], sizes = [8, 384], strides = [1, 1]} : vector<8x512xf32> to vector<8x384xf32>
    %c0_41 = arith.constant 0 : index
    %c0_42 = arith.constant 0 : index
    %109 = vector.load %arg3[%c0_41, %c0_42] : memref<128x512xf32, #tpu.memory_space<vmem>>, vector<128x384xf32>
    %cst_43 = arith.constant dense<0.000000e+00> : vector<8x384xf32>
    %110 = tpu.matmul %104, %109, %cst_43 {dimension_numbers = #tpu.dot_dimension_numbers<[1], [0], [0], [1], [0, 0, 1, 1], [], []>} : vector<8x128xf32>, vector<128x384xf32>, vector<8x384xf32> -> vector<8x384xf32>
    %111 = arith.addf %108, %110 : vector<8x384xf32>
    %112 = vector.extract_strided_slice %107 {offsets = [0, 384], sizes = [8, 128], strides = [1, 1]} : vector<8x512xf32> to vector<8x128xf32>
    %c0_44 = arith.constant 0 : index
    %c384_45 = arith.constant 384 : index
    %113 = vector.load %arg3[%c0_44, %c384_45] : memref<128x512xf32, #tpu.memory_space<vmem>>, vector<128x128xf32>
    %cst_46 = arith.constant dense<0.000000e+00> : vector<8x128xf32>
    %114 = tpu.matmul %104, %113, %cst_46 {dimension_numbers = #tpu.dot_dimension_numbers<[1], [0], [0], [1], [0, 0, 1, 1], [], []>} : vector<8x128xf32>, vector<128x128xf32>, vector<8x128xf32> -> vector<8x128xf32>
    %115 = arith.addf %112, %114 : vector<8x128xf32>
    %116 = arith.negf %111 : vector<8x384xf32>
    %117 = math.exp %116 : vector<8x384xf32>
    %cst_47 = arith.constant 1.000000e+00 : f32
    %118 = vector.broadcast %cst_47 : f32 to vector<8x384xf32>
    %119 = arith.addf %118, %117 : vector<8x384xf32>
    %120 = arith.divf %118, %119 : vector<8x384xf32>
    %121 = math.tanh %115 : vector<8x128xf32>
    %122 = vector.extract_strided_slice %120 {offsets = [0, 0], sizes = [8, 128], strides = [1, 1]} : vector<8x384xf32> to vector<8x128xf32>
    %123 = vector.extract_strided_slice %120 {offsets = [0, 128], sizes = [8, 128], strides = [1, 1]} : vector<8x384xf32> to vector<8x128xf32>
    %124 = vector.extract_strided_slice %120 {offsets = [0, 256], sizes = [8, 128], strides = [1, 1]} : vector<8x384xf32> to vector<8x128xf32>
    %125 = arith.mulf %123, %102 : vector<8x128xf32>
    %126 = arith.mulf %122, %121 : vector<8x128xf32>
    %127 = arith.addf %125, %126 : vector<8x128xf32>
    %128 = math.tanh %127 : vector<8x128xf32>
    %129 = arith.mulf %124, %128 : vector<8x128xf32>
    %c5_i32 = arith.constant 5 : i32
    %130 = arith.index_cast %c5_i32 : i32 to index
    %c0_48 = arith.constant 0 : index
    %c0_49 = arith.constant 0 : index
    %131 = vector.load %arg2[%130, %c0_48, %c0_49] : memref<8x8x512xf32, #tpu.memory_space<vmem>>, vector<1x8x512xf32>
    %132 = vector.shape_cast %131 : vector<1x8x512xf32> to vector<8x512xf32>
    %133 = vector.extract_strided_slice %132 {offsets = [0, 0], sizes = [8, 384], strides = [1, 1]} : vector<8x512xf32> to vector<8x384xf32>
    %c0_50 = arith.constant 0 : index
    %c0_51 = arith.constant 0 : index
    %134 = vector.load %arg3[%c0_50, %c0_51] : memref<128x512xf32, #tpu.memory_space<vmem>>, vector<128x384xf32>
    %cst_52 = arith.constant dense<0.000000e+00> : vector<8x384xf32>
    %135 = tpu.matmul %129, %134, %cst_52 {dimension_numbers = #tpu.dot_dimension_numbers<[1], [0], [0], [1], [0, 0, 1, 1], [], []>} : vector<8x128xf32>, vector<128x384xf32>, vector<8x384xf32> -> vector<8x384xf32>
    %136 = arith.addf %133, %135 : vector<8x384xf32>
    %137 = vector.extract_strided_slice %132 {offsets = [0, 384], sizes = [8, 128], strides = [1, 1]} : vector<8x512xf32> to vector<8x128xf32>
    %c0_53 = arith.constant 0 : index
    %c384_54 = arith.constant 384 : index
    %138 = vector.load %arg3[%c0_53, %c384_54] : memref<128x512xf32, #tpu.memory_space<vmem>>, vector<128x128xf32>
    %cst_55 = arith.constant dense<0.000000e+00> : vector<8x128xf32>
    %139 = tpu.matmul %129, %138, %cst_55 {dimension_numbers = #tpu.dot_dimension_numbers<[1], [0], [0], [1], [0, 0, 1, 1], [], []>} : vector<8x128xf32>, vector<128x128xf32>, vector<8x128xf32> -> vector<8x128xf32>
    %140 = arith.addf %137, %139 : vector<8x128xf32>
    %141 = arith.negf %136 : vector<8x384xf32>
    %142 = math.exp %141 : vector<8x384xf32>
    %cst_56 = arith.constant 1.000000e+00 : f32
    %143 = vector.broadcast %cst_56 : f32 to vector<8x384xf32>
    %144 = arith.addf %143, %142 : vector<8x384xf32>
    %145 = arith.divf %143, %144 : vector<8x384xf32>
    %146 = math.tanh %140 : vector<8x128xf32>
    %147 = vector.extract_strided_slice %145 {offsets = [0, 0], sizes = [8, 128], strides = [1, 1]} : vector<8x384xf32> to vector<8x128xf32>
    %148 = vector.extract_strided_slice %145 {offsets = [0, 128], sizes = [8, 128], strides = [1, 1]} : vector<8x384xf32> to vector<8x128xf32>
    %149 = vector.extract_strided_slice %145 {offsets = [0, 256], sizes = [8, 128], strides = [1, 1]} : vector<8x384xf32> to vector<8x128xf32>
    %150 = arith.mulf %148, %127 : vector<8x128xf32>
    %151 = arith.mulf %147, %146 : vector<8x128xf32>
    %152 = arith.addf %150, %151 : vector<8x128xf32>
    %153 = math.tanh %152 : vector<8x128xf32>
    %154 = arith.mulf %149, %153 : vector<8x128xf32>
    %c6_i32 = arith.constant 6 : i32
    %155 = arith.index_cast %c6_i32 : i32 to index
    %c0_57 = arith.constant 0 : index
    %c0_58 = arith.constant 0 : index
    %156 = vector.load %arg2[%155, %c0_57, %c0_58] : memref<8x8x512xf32, #tpu.memory_space<vmem>>, vector<1x8x512xf32>
    %157 = vector.shape_cast %156 : vector<1x8x512xf32> to vector<8x512xf32>
    %158 = vector.extract_strided_slice %157 {offsets = [0, 0], sizes = [8, 384], strides = [1, 1]} : vector<8x512xf32> to vector<8x384xf32>
    %c0_59 = arith.constant 0 : index
    %c0_60 = arith.constant 0 : index
    %159 = vector.load %arg3[%c0_59, %c0_60] : memref<128x512xf32, #tpu.memory_space<vmem>>, vector<128x384xf32>
    %cst_61 = arith.constant dense<0.000000e+00> : vector<8x384xf32>
    %160 = tpu.matmul %154, %159, %cst_61 {dimension_numbers = #tpu.dot_dimension_numbers<[1], [0], [0], [1], [0, 0, 1, 1], [], []>} : vector<8x128xf32>, vector<128x384xf32>, vector<8x384xf32> -> vector<8x384xf32>
    %161 = arith.addf %158, %160 : vector<8x384xf32>
    %162 = vector.extract_strided_slice %157 {offsets = [0, 384], sizes = [8, 128], strides = [1, 1]} : vector<8x512xf32> to vector<8x128xf32>
    %c0_62 = arith.constant 0 : index
    %c384_63 = arith.constant 384 : index
    %163 = vector.load %arg3[%c0_62, %c384_63] : memref<128x512xf32, #tpu.memory_space<vmem>>, vector<128x128xf32>
    %cst_64 = arith.constant dense<0.000000e+00> : vector<8x128xf32>
    %164 = tpu.matmul %154, %163, %cst_64 {dimension_numbers = #tpu.dot_dimension_numbers<[1], [0], [0], [1], [0, 0, 1, 1], [], []>} : vector<8x128xf32>, vector<128x128xf32>, vector<8x128xf32> -> vector<8x128xf32>
    %165 = arith.addf %162, %164 : vector<8x128xf32>
    %166 = arith.negf %161 : vector<8x384xf32>
    %167 = math.exp %166 : vector<8x384xf32>
    %cst_65 = arith.constant 1.000000e+00 : f32
    %168 = vector.broadcast %cst_65 : f32 to vector<8x384xf32>
    %169 = arith.addf %168, %167 : vector<8x384xf32>
    %170 = arith.divf %168, %169 : vector<8x384xf32>
    %171 = math.tanh %165 : vector<8x128xf32>
    %172 = vector.extract_strided_slice %170 {offsets = [0, 0], sizes = [8, 128], strides = [1, 1]} : vector<8x384xf32> to vector<8x128xf32>
    %173 = vector.extract_strided_slice %170 {offsets = [0, 128], sizes = [8, 128], strides = [1, 1]} : vector<8x384xf32> to vector<8x128xf32>
    %174 = vector.extract_strided_slice %170 {offsets = [0, 256], sizes = [8, 128], strides = [1, 1]} : vector<8x384xf32> to vector<8x128xf32>
    %175 = arith.mulf %173, %152 : vector<8x128xf32>
    %176 = arith.mulf %172, %171 : vector<8x128xf32>
    %177 = arith.addf %175, %176 : vector<8x128xf32>
    %178 = math.tanh %177 : vector<8x128xf32>
    %179 = arith.mulf %174, %178 : vector<8x128xf32>
    %c7_i32 = arith.constant 7 : i32
    %180 = arith.index_cast %c7_i32 : i32 to index
    %c0_66 = arith.constant 0 : index
    %c0_67 = arith.constant 0 : index
    %181 = vector.load %arg2[%180, %c0_66, %c0_67] : memref<8x8x512xf32, #tpu.memory_space<vmem>>, vector<1x8x512xf32>
    %182 = vector.shape_cast %181 : vector<1x8x512xf32> to vector<8x512xf32>
    %183 = vector.extract_strided_slice %182 {offsets = [0, 0], sizes = [8, 384], strides = [1, 1]} : vector<8x512xf32> to vector<8x384xf32>
    %c0_68 = arith.constant 0 : index
    %c0_69 = arith.constant 0 : index
    %184 = vector.load %arg3[%c0_68, %c0_69] : memref<128x512xf32, #tpu.memory_space<vmem>>, vector<128x384xf32>
    %cst_70 = arith.constant dense<0.000000e+00> : vector<8x384xf32>
    %185 = tpu.matmul %179, %184, %cst_70 {dimension_numbers = #tpu.dot_dimension_numbers<[1], [0], [0], [1], [0, 0, 1, 1], [], []>} : vector<8x128xf32>, vector<128x384xf32>, vector<8x384xf32> -> vector<8x384xf32>
    %186 = arith.addf %183, %185 : vector<8x384xf32>
    %187 = vector.extract_strided_slice %182 {offsets = [0, 384], sizes = [8, 128], strides = [1, 1]} : vector<8x512xf32> to vector<8x128xf32>
    %c0_71 = arith.constant 0 : index
    %c384_72 = arith.constant 384 : index
    %188 = vector.load %arg3[%c0_71, %c384_72] : memref<128x512xf32, #tpu.memory_space<vmem>>, vector<128x128xf32>
    %cst_73 = arith.constant dense<0.000000e+00> : vector<8x128xf32>
    %189 = tpu.matmul %179, %188, %cst_73 {dimension_numbers = #tpu.dot_dimension_numbers<[1], [0], [0], [1], [0, 0, 1, 1], [], []>} : vector<8x128xf32>, vector<128x128xf32>, vector<8x128xf32> -> vector<8x128xf32>
    %190 = arith.addf %187, %189 : vector<8x128xf32>
    %191 = arith.negf %186 : vector<8x384xf32>
    %192 = math.exp %191 : vector<8x384xf32>
    %cst_74 = arith.constant 1.000000e+00 : f32
    %193 = vector.broadcast %cst_74 : f32 to vector<8x384xf32>
    %194 = arith.addf %193, %192 : vector<8x384xf32>
    %195 = arith.divf %193, %194 : vector<8x384xf32>
    %196 = math.tanh %190 : vector<8x128xf32>
    %197 = vector.extract_strided_slice %195 {offsets = [0, 0], sizes = [8, 128], strides = [1, 1]} : vector<8x384xf32> to vector<8x128xf32>
    %198 = vector.extract_strided_slice %195 {offsets = [0, 128], sizes = [8, 128], strides = [1, 1]} : vector<8x384xf32> to vector<8x128xf32>
    %199 = vector.extract_strided_slice %195 {offsets = [0, 256], sizes = [8, 128], strides = [1, 1]} : vector<8x384xf32> to vector<8x128xf32>
    %200 = arith.mulf %198, %177 : vector<8x128xf32>
    %201 = arith.mulf %197, %196 : vector<8x128xf32>
    %202 = arith.addf %200, %201 : vector<8x128xf32>
    %203 = math.tanh %202 : vector<8x128xf32>
    %204 = arith.mulf %199, %203 : vector<8x128xf32>
    %c8_i32 = arith.constant 8 : i32
    %c0_75 = arith.constant 0 : index
    %c0_76 = arith.constant 0 : index
    %205 = vector.load %arg5[%c0_75, %c0_76] : memref<8x128xf32, #tpu.memory_space<vmem>>, vector<8x128xf32>
    tpu.vector_store %arg5[%c0_75, %c0_76], %204 {strides = array<i32>} : memref<8x128xf32, #tpu.memory_space<vmem>>, vector<8x128xf32>,
    %c0_77 = arith.constant 0 : index
    %c0_78 = arith.constant 0 : index
    %206 = vector.load %arg6[%c0_77, %c0_78] : memref<8x128xf32, #tpu.memory_space<vmem>>, vector<8x128xf32>
    tpu.vector_store %arg6[%c0_77, %c0_78], %202 {strides = array<i32>} : memref<8x128xf32, #tpu.memory_space<vmem>>, vector<8x128xf32>,
    %c0_i32_79 = arith.constant 0 : i32
    %207 = arith.cmpi eq, %arg1, %c0_i32_79 : i32
    %208 = arith.extui %207 : i1 to i32
    %c0_i32_80 = arith.constant 0 : i32
    %209 = arith.cmpi ne, %208, %c0_i32_80 : i32
    scf.if %209 {
      %c0_81 = arith.constant 0 : index
      %c0_82 = arith.constant 0 : index
      %210 = vector.load %arg4[%c0_81, %c0_82] : memref<8x128xf32, #tpu.memory_space<vmem>>, vector<8x128xf32>
      tpu.vector_store %arg4[%c0_81, %c0_82], %204 {strides = array<i32>} : memref<8x128xf32, #tpu.memory_space<vmem>>, vector<8x128xf32>,
    } else {
    }
    return
  }
  func.func @transform_0(%arg0: i32, %arg1: i32) -> (i32, i32, i32) {
    %c0_i32 = arith.constant 0 : i32
    %c0_i32_0 = arith.constant 0 : i32
    return %arg1, %arg0, %c0_i32 : i32, i32, i32
  }
  func.func @transform_1(%arg0: i32, %arg1: i32) -> (i32, i32) {
    %c0_i32 = arith.constant 0 : i32
    %c0_i32_0 = arith.constant 0 : i32
    %c0_i32_1 = arith.constant 0 : i32
    return %c0_i32, %c0_i32_0 : i32, i32
  }
  func.func @transform_2(%arg0: i32, %arg1: i32) -> (i32, i32) {
    %c0_i32 = arith.constant 0 : i32
    %c0_i32_0 = arith.constant 0 : i32
    return %arg0, %c0_i32 : i32, i32
  }
}

</mosaic_0001>

<llo_original>
// kernel: tpu_custom_call.1
$region0: #{tpu_custom_call.1}
  #allocation0 [shape = 'u32[]', space=smem, size = 0x4, offset = 0x4, fixed_abs, tag = 'smem constant byte address 0x4 - core index']
  #allocation1 [shape = 'u32[72,128]{1,0:T(1,128)}', space=vmem, size = 0x9000, scoped, tag = 'internal scratch']
  #allocation2 [shape = 'f32[8,128]{1,0:T(8,128)}', space=vmem, size = 0x1000, scoped, tag = 'scratch operand']
  #allocation3 [shape = 'f32[8,128]{1,0:T(8,128)}', space=vmem, size = 0x1000, scoped, tag = 'scratch operand']
  %s0 = inlined_call_operand.hbm [shape: f32[8,8,512], index: 0, kind: input, shape index: {}]
  %s1 = inlined_call_operand.hbm [shape: f32[128,512], index: 1, kind: input, shape index: {}]
  %s2 = inlined_call_operand.hbm [shape: f32[8,128], index: 2, kind: output, shape index: {}]
  %s3 = sld [smem:[#allocation0]]
  $region34: #{tpu_custom_call.1} parent=0
    _
  %s5 = ssub.s32 1, %s3
  %s6 = scalar_select 0, %s5, %s3
  $region1: #{tpu_custom_call.1} parent=0
    #allocation4 [shape = 'u8[131072]{0}', space=vmem, size = 0x20000, scoped, tag = 'input window, operand 0, single buffered']
    #allocation5 [shape = 's32[1]{0}', space=sflag, size = 0x4, scoped, tag = 'scoped memory for tpu_custom_call.1']
    #allocation6 [shape = 's32[1]{0}', space=sflag, size = 0x4, scoped, tag = 'scoped memory for tpu_custom_call.1']
    #allocation7 [shape = 'u8[262144]{0}', space=vmem, size = 0x40000, scoped, tag = 'input window, operand 1, single buffered']
    #allocation8 [shape = 's32[1]{0}', space=sflag, size = 0x4, scoped, tag = 'scoped memory for tpu_custom_call.1']
    #allocation9 [shape = 'u8[4096]{0}', space=vmem, size = 0x1000, scoped, tag = 'output window, operand 0, single buffered']
    %7 = vsyncpa [#allocation5], 0
    %8 = vsyncpa [#allocation8], 0
    %9 = vsyncpa [#allocation6], 0
    // Predicated region
    $region2: #{tpu_custom_call.1} parent=1 // pred_check
      _
    $region3: #{tpu_custom_call.1} parent=1 // pred_check_branch
      %11 = sbr.rel (0) target = $region5
    $region4: #{tpu_custom_call.1} parent=1 // pred_region
      %13 = vsyncadd [#allocation5], 0
      %s14 = sshll.u32 %s0, 4
      %s15 = int_to_ptr.hbm [resolvable:$true] %s14
      %s16 = sshll.u32 [#allocation4], 4
      %s17 = int_to_ptr.vmem [resolvable:$true] %s16
      %22 = dma.hbm_to_vmem [thread:$0]  %s15, 4096, %s17, [#allocation5], 512, 512, 32
    $region5: #{tpu_custom_call.1} parent=1 // pred_fallthru
      _
    // Predicated region
    $region6: #{tpu_custom_call.1} parent=1 // pred_check
      _
    $region7: #{tpu_custom_call.1} parent=1 // pred_check_branch
      %24 = sbr.rel (0) target = $region9
    $region8: #{tpu_custom_call.1} parent=1 // pred_region
      %26 = vsyncadd [#allocation8], 0
      %s27 = sshll.u32 %s1, 4
      %s28 = int_to_ptr.hbm [resolvable:$true] %s27
      %s29 = sshll.u32 [#allocation7], 4
      %s30 = int_to_ptr.vmem [resolvable:$true] %s29
      %35 = dma.hbm_to_vmem [thread:$0]  %s28, 8192, %s30, [#allocation8], 512, 512, 32
    $region9: #{tpu_custom_call.1} parent=1 // pred_fallthru
      _
    // Predicated region
    $region10: #{tpu_custom_call.1} parent=1 // pred_check
      _
    $region11: #{tpu_custom_call.1} parent=1 // pred_check_branch
      %37 = sbr.rel (0) target = $region13
    $region12: #{tpu_custom_call.1} parent=1 // pred_region
      %39 = dma.done [#allocation5], 4096
    $region13: #{tpu_custom_call.1} parent=1 // pred_fallthru
      _
    // Predicated region
    $region14: #{tpu_custom_call.1} parent=1 // pred_check
      _
    $region15: #{tpu_custom_call.1} parent=1 // pred_check_branch
      %41 = sbr.rel (0) target = $region17
    $region16: #{tpu_custom_call.1} parent=1 // pred_region
      %43 = dma.done [#allocation8], 8192
    $region17: #{tpu_custom_call.1} parent=1 // pred_fallthru
      _
    %p44 = scmp.eq.s32.totalorder 0, 0
    // Predicated region
    $region18: #{tpu_custom_call.1} parent=1 // pred_check
      %p45 = pneg %p44
    $region19: #{tpu_custom_call.1} parent=1 // pred_check_branch
      %47 = sbr.rel (%p45) target = $region21
    $region20: #{tpu_custom_call.1} parent=1 // pred_region
      %48 = vst [vmem:[#allocation2] sm:$0xff] 0.0
      %49 = vst [vmem:[#allocation3] sm:$0xff] 0.0
    $region21: #{tpu_custom_call.1} parent=1 // pred_fallthru
      _
    %v50 = vld [vmem:[#allocation2] sm:$0xff]
    %v51 = vld [vmem:[#allocation3] sm:$0xff]
    %v52 = vld [vmem:[#allocation4] sm:$0xff]
    %v53 = vld [vmem:[#allocation4 + $0x8] sm:$0xff]
    %v54 = vld [vmem:[#allocation4 + $0x10] sm:$0xff]
    %v55 = vld [vmem:[#allocation4 + $0x18] sm:$0xff]
    %v56 = vld [vmem:[#allocation7] sm:$0xff]
    %v57 = vld [vmem:[#allocation7 + $0x8] sm:$0xff]
    %v58 = vld [vmem:[#allocation7 + $0x10] sm:$0xff]
    %v59 = vld [vmem:[#allocation7 + $0x20] sm:$0xff]
    %v60 = vld [vmem:[#allocation7 + $0x28] sm:$0xff]
    %v61 = vld [vmem:[#allocation7 + $0x30] sm:$0xff]
    %v62 = vld [vmem:[#allocation7 + $0x40] sm:$0xff]
    %v63 = vld [vmem:[#allocation7 + $0x48] sm:$0xff]
    %v64 = vld [vmem:[#allocation7 + $0x50] sm:$0xff]
    %v65 = vld [vmem:[#allocation7 + $0x60] sm:$0xff]
    %v66 = vld [vmem:[#allocation7 + $0x68] sm:$0xff]
    %v67 = vld [vmem:[#allocation7 + $0x70] sm:$0xff]
    %v68 = vld [vmem:[#allocation7 + $0x80] sm:$0xff]
    %v69 = vld [vmem:[#allocation7 + $0x88] sm:$0xff]
    %v70 = vld [vmem:[#allocation7 + $0x90] sm:$0xff]
    %v71 = vld [vmem:[#allocation7 + $0xa0] sm:$0xff]
    %v72 = vld [vmem:[#allocation7 + $0xa8] sm:$0xff]
    %v73 = vld [vmem:[#allocation7 + $0xb0] sm:$0xff]
    %v74 = vld [vmem:[#allocation7 + $0xc0] sm:$0xff]
    %v75 = vld [vmem:[#allocation7 + $0xc8] sm:$0xff]
    %v76 = vld [vmem:[#allocation7 + $0xd0] sm:$0xff]
    %v77 = vld [vmem:[#allocation7 + $0xe0] sm:$0xff]
    %v78 = vld [vmem:[#allocation7 + $0xe8] sm:$0xff]
    %v79 = vld [vmem:[#allocation7 + $0xf0] sm:$0xff]
    %v80 = vld [vmem:[#allocation7 + $0x100] sm:$0xff]
    %v81 = vld [vmem:[#allocation7 + $0x108] sm:$0xff]
    %v82 = vld [vmem:[#allocation7 + $0x110] sm:$0xff]
    %v83 = vld [vmem:[#allocation7 + $0x120] sm:$0xff]
    %v84 = vld [vmem:[#allocation7 + $0x128] sm:$0xff]
    %v85 = vld [vmem:[#allocation7 + $0x130] sm:$0xff]
    %v86 = vld [vmem:[#allocation7 + $0x140] sm:$0xff]
    %v87 = vld [vmem:[#allocation7 + $0x148] sm:$0xff]
    %v88 = vld [vmem:[#allocation7 + $0x150] sm:$0xff]
    %v89 = vld [vmem:[#allocation7 + $0x160] sm:$0xff]
    %v90 = vld [vmem:[#allocation7 + $0x168] sm:$0xff]
    %v91 = vld [vmem:[#allocation7 + $0x170] sm:$0xff]
    %v92 = vld [vmem:[#allocation7 + $0x180] sm:$0xff]
    %v93 = vld [vmem:[#allocation7 + $0x188] sm:$0xff]
    %v94 = vld [vmem:[#allocation7 + $0x190] sm:$0xff]
    %v95 = vld [vmem:[#allocation7 + $0x1a0] sm:$0xff]
    %v96 = vld [vmem:[#allocation7 + $0x1a8] sm:$0xff]
    %v97 = vld [vmem:[#allocation7 + $0x1b0] sm:$0xff]
    %v98 = vld [vmem:[#allocation7 + $0x1c0] sm:$0xff]
    %v99 = vld [vmem:[#allocation7 + $0x1c8] sm:$0xff]
    %v100 = vld [vmem:[#allocation7 + $0x1d0] sm:$0xff]
    %v101 = vld [vmem:[#allocation7 + $0x1e0] sm:$0xff]
    %v102 = vld [vmem:[#allocation7 + $0x1e8] sm:$0xff]
    %v103 = vld [vmem:[#allocation7 + $0x1f0] sm:$0xff]
    %104 = vmatpush.msra.mxu0 %v101
    %105 = vmatpush.msra.mxu0 %v98
    %106 = vmatpush.msra.mxu0 %v95
    %107 = vmatpush.msra.mxu0 %v92
    %108 = vmatpush.msra.mxu0 %v89
    %109 = vmatpush.msra.mxu0 %v86
    %110 = vmatpush.msra.mxu0 %v83
    %111 = vmatpush.msra.mxu0 %v80
    %112 = vmatpush.msra.mxu0 %v77
    %113 = vmatpush.msra.mxu0 %v74
    %114 = vmatpush.msra.mxu0 %v71
    %115 = vmatpush.msra.mxu0 %v68
    %116 = vmatpush.msra.mxu0 %v65
    %117 = vmatpush.msra.mxu0 %v62
    %118 = vmatpush.msra.mxu0 %v59
    %119 = vmatpush.msra.mxu0 %v56
    %120 = vmatmul.f32.gmra.mxu0 %v50
    %v121 = vpop.f32.mrf.mxu0
    %v122 = vadd.f32 0.0, %v121
    %123 = vdwg.mxu0
    %124 = vmatpush.msra.mxu0 %v102
    %125 = vmatpush.msra.mxu0 %v99
    %126 = vmatpush.msra.mxu0 %v96
    %127 = vmatpush.msra.mxu0 %v93
    %128 = vmatpush.msra.mxu0 %v90
    %129 = vmatpush.msra.mxu0 %v87
    %130 = vmatpush.msra.mxu0 %v84
    %131 = vmatpush.msra.mxu0 %v81
    %132 = vmatpush.msra.mxu0 %v78
    %133 = vmatpush.msra.mxu0 %v75
    %134 = vmatpush.msra.mxu0 %v72
    %135 = vmatpush.msra.mxu0 %v69
    %136 = vmatpush.msra.mxu0 %v66
    %137 = vmatpush.msra.mxu0 %v63
    %138 = vmatpush.msra.mxu0 %v60
    %139 = vmatpush.msra.mxu0 %v57
    %140 = vmatmul.f32.gmra.mxu0 %v50
    %v141 = vpop.f32.mrf.mxu0
    %v142 = vadd.f32 0.0, %v141
    %143 = vdwg.mxu0
    %144 = vmatpush.msra.mxu0 %v103
    %145 = vmatpush.msra.mxu0 %v100
    %146 = vmatpush.msra.mxu0 %v97
    %147 = vmatpush.msra.mxu0 %v94
    %148 = vmatpush.msra.mxu0 %v91
    %149 = vmatpush.msra.mxu0 %v88
    %150 = vmatpush.msra.mxu0 %v85
    %151 = vmatpush.msra.mxu0 %v82
    %152 = vmatpush.msra.mxu0 %v79
    %153 = vmatpush.msra.mxu0 %v76
    %154 = vmatpush.msra.mxu0 %v73
    %155 = vmatpush.msra.mxu0 %v70
    %156 = vmatpush.msra.mxu0 %v67
    %157 = vmatpush.msra.mxu0 %v64
    %158 = vmatpush.msra.mxu0 %v61
    %159 = vmatpush.msra.mxu0 %v58
    %160 = vmatmul.f32.gmra.mxu0 %v50
    %v161 = vpop.f32.mrf.mxu0
    %v162 = vadd.f32 0.0, %v161
    %163 = vdwg.mxu0
    %v164 = vadd.f32 %v52, %v122
    %v165 = vadd.f32 %v53, %v142
    %v166 = vadd.f32 %v54, %v162
    %v167 = vld [vmem:[#allocation7 + $0x18] sm:$0xff]
    %v168 = vld [vmem:[#allocation7 + $0x38] sm:$0xff]
    %v169 = vld [vmem:[#allocation7 + $0x58] sm:$0xff]
    %v170 = vld [vmem:[#allocation7 + $0x78] sm:$0xff]
    %v171 = vld [vmem:[#allocation7 + $0x98] sm:$0xff]
    %v172 = vld [vmem:[#allocation7 + $0xb8] sm:$0xff]
    %v173 = vld [vmem:[#allocation7 + $0xd8] sm:$0xff]
    %v174 = vld [vmem:[#allocation7 + $0xf8] sm:$0xff]
    %v175 = vld [vmem:[#allocation7 + $0x118] sm:$0xff]
    %v176 = vld [vmem:[#allocation7 + $0x138] sm:$0xff]
    %v177 = vld [vmem:[#allocation7 + $0x158] sm:$0xff]
    %v178 = vld [vmem:[#allocation7 + $0x178] sm:$0xff]
    %v179 = vld [vmem:[#allocation7 + $0x198] sm:$0xff]
    %v180 = vld [vmem:[#allocation7 + $0x1b8] sm:$0xff]
    %v181 = vld [vmem:[#allocation7 + $0x1d8] sm:$0xff]
    %v182 = vld [vmem:[#allocation7 + $0x1f8] sm:$0xff]
    %183 = vmatpush.msra.mxu0 %v182
    %184 = vmatpush.msra.mxu0 %v181
    %185 = vmatpush.msra.mxu0 %v180
    %186 = vmatpush.msra.mxu0 %v179
    %187 = vmatpush.msra.mxu0 %v178
    %188 = vmatpush.msra.mxu0 %v177
    %189 = vmatpush.msra.mxu0 %v176
    %190 = vmatpush.msra.mxu0 %v175
    %191 = vmatpush.msra.mxu0 %v174
    %192 = vmatpush.msra.mxu0 %v173
    %193 = vmatpush.msra.mxu0 %v172
    %194 = vmatpush.msra.mxu0 %v171
    %195 = vmatpush.msra.mxu0 %v170
    %196 = vmatpush.msra.mxu0 %v169
    %197 = vmatpush.msra.mxu0 %v168
    %198 = vmatpush.msra.mxu0 %v167
    %199 = vmatmul.f32.gmra.mxu0 %v50
    %v200 = vpop.f32.mrf.mxu0
    %v201 = vadd.f32 0.0, %v200
    %202 = vdwg.mxu0
    %v203 = vadd.f32 %v55, %v201
    %v204 = vxor.u32 %v164, 2147483648
    %v205 = vxor.u32 %v165, 2147483648
    %v206 = vxor.u32 %v166, 2147483648
    %v207 = vmul.f32 %v204, 1.442695
    %v208 = vpow.pop %v207
    %v209 = vmul.f32 %v205, 1.442695
    %v210 = vpow.pop %v209
    %v211 = vmul.f32 %v206, 1.442695
    %v212 = vpow.pop %v211
    %v213 = vadd.f32 %v208, 1.0
    %v214 = vadd.f32 %v210, 1.0
    %v215 = vadd.f32 %v212, 1.0
    %v216 = vrcp.pop %v213
    %v217 = vmul.f32 %v213, %v216
    %v218 = vsub.f32 1.0, %v217
    %v219 = vmul.f32 %v216, %v218
    %v220 = vadd.f32 %v216, %v219
    %vm221 = vweird.f32 %v213
    %vm222 = vweird.f32 %v216
    %vm223 = vmor %vm221, %vm222
    %v224 = vsel %vm223, %v216, %v220
    %v225 = vand.u32 2147483647, %v213
    %vm226 = vcmp.eq.f32.partialorder %v225, 8.507059e+37
    %v227 = vand.u32 %v213, 2147483648
    %v228 = vor.u32 1.1754944e-38, %v227
    %v229 = vsel %vm226, %v228, %v224
    %v230 = vmul.f32 1.0, %v229
    %v231 = vrcp.pop %v214
    %v232 = vmul.f32 %v214, %v231
    %v233 = vsub.f32 1.0, %v232
    %v234 = vmul.f32 %v231, %v233
    %v235 = vadd.f32 %v231, %v234
    %vm236 = vweird.f32 %v214
    %vm237 = vweird.f32 %v231
    %vm238 = vmor %vm236, %vm237
    %v239 = vsel %vm238, %v231, %v235
    %v240 = vand.u32 2147483647, %v214
    %vm241 = vcmp.eq.f32.partialorder %v240, 8.507059e+37
    %v242 = vand.u32 %v214, 2147483648
    %v243 = vor.u32 1.1754944e-38, %v242
    %v244 = vsel %vm241, %v243, %v239
    %v245 = vmul.f32 1.0, %v244
    %v246 = vrcp.pop %v215
    %v247 = vmul.f32 %v215, %v246
    %v248 = vsub.f32 1.0, %v247
    %v249 = vmul.f32 %v246, %v248
    %v250 = vadd.f32 %v246, %v249
    %vm251 = vweird.f32 %v215
    %vm252 = vweird.f32 %v246
    %vm253 = vmor %vm251, %vm252
    %v254 = vsel %vm253, %v246, %v250
    %v255 = vand.u32 2147483647, %v215
    %vm256 = vcmp.eq.f32.partialorder %v255, 8.507059e+37
    %v257 = vand.u32 %v215, 2147483648
    %v258 = vor.u32 1.1754944e-38, %v257
    %v259 = vsel %vm256, %v258, %v254
    %v260 = vmul.f32 1.0, %v259
    %v261 = vtanh.pop %v203
    %v262 = vmul.f32 %v245, %v51
    %v263 = vmul.f32 %v230, %v261
    %v264 = vadd.f32 %v262, %v263
    %v265 = vtanh.pop %v264
    %v266 = vmul.f32 %v260, %v265
    %s267 = scalar_lea.vmem [#allocation4], 32
    %v268 = vld [vmem:[%s267] sm:$0xff]
    %v269 = vld [vmem:[%s267 + $0x8] sm:$0xff]
    %v270 = vld [vmem:[%s267 + $0x10] sm:$0xff]
    %v271 = vld [vmem:[%s267 + $0x18] sm:$0xff]
    %272 = vmatpush.msra.mxu0 %v101
    %273 = vmatpush.msra.mxu0 %v98
    %274 = vmatpush.msra.mxu0 %v95
    %275 = vmatpush.msra.mxu0 %v92
    %276 = vmatpush.msra.mxu0 %v89
    %277 = vmatpush.msra.mxu0 %v86
    %278 = vmatpush.msra.mxu0 %v83
    %279 = vmatpush.msra.mxu0 %v80
    %280 = vmatpush.msra.mxu0 %v77
    %281 = vmatpush.msra.mxu0 %v74
    %282 = vmatpush.msra.mxu0 %v71
    %283 = vmatpush.msra.mxu0 %v68
    %284 = vmatpush.msra.mxu0 %v65
    %285 = vmatpush.msra.mxu0 %v62
    %286 = vmatpush.msra.mxu0 %v59
    %287 = vmatpush.msra.mxu0 %v56
    %288 = vmatmul.f32.gmra.mxu0 %v266
    %v289 = vpop.f32.mrf.mxu0
    %v290 = vadd.f32 0.0, %v289
    %291 = vdwg.mxu0
    %292 = vmatpush.msra.mxu0 %v102
    %293 = vmatpush.msra.mxu0 %v99
    %294 = vmatpush.msra.mxu0 %v96
    %295 = vmatpush.msra.mxu0 %v93
    %296 = vmatpush.msra.mxu0 %v90
    %297 = vmatpush.msra.mxu0 %v87
    %298 = vmatpush.msra.mxu0 %v84
    %299 = vmatpush.msra.mxu0 %v81
    %300 = vmatpush.msra.mxu0 %v78
    %301 = vmatpush.msra.mxu0 %v75
    %302 = vmatpush.msra.mxu0 %v72
    %303 = vmatpush.msra.mxu0 %v69
    %304 = vmatpush.msra.mxu0 %v66
    %305 = vmatpush.msra.mxu0 %v63
    %306 = vmatpush.msra.mxu0 %v60
    %307 = vmatpush.msra.mxu0 %v57
    %308 = vmatmul.f32.gmra.mxu0 %v266
    %v309 = vpop.f32.mrf.mxu0
    %v310 = vadd.f32 0.0, %v309
    %311 = vdwg.mxu0
    %312 = vmatpush.msra.mxu0 %v103
    %313 = vmatpush.msra.mxu0 %v100
    %314 = vmatpush.msra.mxu0 %v97
    %315 = vmatpush.msra.mxu0 %v94
    %316 = vmatpush.msra.mxu0 %v91
    %317 = vmatpush.msra.mxu0 %v88
    %318 = vmatpush.msra.mxu0 %v85
    %319 = vmatpush.msra.mxu0 %v82
    %320 = vmatpush.msra.mxu0 %v79
    %321 = vmatpush.msra.mxu0 %v76
    %322 = vmatpush.msra.mxu0 %v73
    %323 = vmatpush.msra.mxu0 %v70
    %324 = vmatpush.msra.mxu0 %v67
    %325 = vmatpush.msra.mxu0 %v64
    %326 = vmatpush.msra.mxu0 %v61
    %327 = vmatpush.msra.mxu0 %v58
    %328 = vmatmul.f32.gmra.mxu0 %v266
    %v329 = vpop.f32.mrf.mxu0
    %v330 = vadd.f32 0.0, %v329
    %331 = vdwg.mxu0
    %v332 = vadd.f32 %v268, %v290
    %v333 = vadd.f32 %v269, %v310
    %v334 = vadd.f32 %v270, %v330
    %335 = vmatpush.msra.mxu0 %v182
    %336 = vmatpush.msra.mxu0 %v181
    %337 = vmatpush.msra.mxu0 %v180
    %338 = vmatpush.msra.mxu0 %v179
    %339 = vmatpush.msra.mxu0 %v178
    %340 = vmatpush.msra.mxu0 %v177
    %341 = vmatpush.msra.mxu0 %v176
    %342 = vmatpush.msra.mxu0 %v175
    %343 = vmatpush.msra.mxu0 %v174
    %344 = vmatpush.msra.mxu0 %v173
    %345 = vmatpush.msra.mxu0 %v172
    %346 = vmatpush.msra.mxu0 %v171
    %347 = vmatpush.msra.mxu0 %v170
    %348 = vmatpush.msra.mxu0 %v169
    %349 = vmatpush.msra.mxu0 %v168
    %350 = vmatpush.msra.mxu0 %v167
    %351 = vmatmul.f32.gmra.mxu0 %v266
    %v352 = vpop.f32.mrf.mxu0
    %v353 = vadd.f32 0.0, %v352
    %354 = vdwg.mxu0
    %v355 = vadd.f32 %v271, %v353
    %v356 = vxor.u32 %v332, 2147483648
    %v357 = vxor.u32 %v333, 2147483648
    %v358 = vxor.u32 %v334, 2147483648
    %v359 = vmul.f32 %v356, 1.442695
    %v360 = vpow.pop %v359
    %v361 = vmul.f32 %v357, 1.442695
    %v362 = vpow.pop %v361
    %v363 = vmul.f32 %v358, 1.442695
    %v364 = vpow.pop %v363
    %v365 = vadd.f32 %v360, 1.0
    %v366 = vadd.f32 %v362, 1.0
    %v367 = vadd.f32 %v364, 1.0
    %v368 = vrcp.pop %v365
    %v369 = vmul.f32 %v365, %v368
    %v370 = vsub.f32 1.0, %v369
    %v371 = vmul.f32 %v368, %v370
    %v372 = vadd.f32 %v368, %v371
    %vm373 = vweird.f32 %v365
    %vm374 = vweird.f32 %v368
    %vm375 = vmor %vm373, %vm374
    %v376 = vsel %vm375, %v368, %v372
    %v377 = vand.u32 2147483647, %v365
    %vm378 = vcmp.eq.f32.partialorder %v377, 8.507059e+37
    %v379 = vand.u32 %v365, 2147483648
    %v380 = vor.u32 1.1754944e-38, %v379
    %v381 = vsel %vm378, %v380, %v376
    %v382 = vmul.f32 1.0, %v381
    %v383 = vrcp.pop %v366
    %v384 = vmul.f32 %v366, %v383
    %v385 = vsub.f32 1.0, %v384
    %v386 = vmul.f32 %v383, %v385
    %v387 = vadd.f32 %v383, %v386
    %vm388 = vweird.f32 %v366
    %vm389 = vweird.f32 %v383
    %vm390 = vmor %vm388, %vm389
    %v391 = vsel %vm390, %v383, %v387
    %v392 = vand.u32 2147483647, %v366
    %vm393 = vcmp.eq.f32.partialorder %v392, 8.507059e+37
    %v394 = vand.u32 %v366, 2147483648
    %v395 = vor.u32 1.1754944e-38, %v394
    %v396 = vsel %vm393, %v395, %v391
    %v397 = vmul.f32 1.0, %v396
    %v398 = vrcp.pop %v367
    %v399 = vmul.f32 %v367, %v398
    %v400 = vsub.f32 1.0, %v399
    %v401 = vmul.f32 %v398, %v400
    %v402 = vadd.f32 %v398, %v401
    %vm403 = vweird.f32 %v367
    %vm404 = vweird.f32 %v398
    %vm405 = vmor %vm403, %vm404
    %v406 = vsel %vm405, %v398, %v402
    %v407 = vand.u32 2147483647, %v367
    %vm408 = vcmp.eq.f32.partialorder %v407, 8.507059e+37
    %v409 = vand.u32 %v367, 2147483648
    %v410 = vor.u32 1.1754944e-38, %v409
    %v411 = vsel %vm408, %v410, %v406
    %v412 = vmul.f32 1.0, %v411
    %v413 = vtanh.pop %v355
    %v414 = vmul.f32 %v397, %v264
    %v415 = vmul.f32 %v382, %v413
    %v416 = vadd.f32 %v414, %v415
    %v417 = vtanh.pop %v416
    %v418 = vmul.f32 %v412, %v417
    %s419 = scalar_lea.vmem [#allocation4], 64
    %v420 = vld [vmem:[%s419] sm:$0xff]
    %v421 = vld [vmem:[%s419 + $0x8] sm:$0xff]
    %v422 = vld [vmem:[%s419 + $0x10] sm:$0xff]
    %v423 = vld [vmem:[%s419 + $0x18] sm:$0xff]
    %424 = vmatpush.msra.mxu0 %v101
    %425 = vmatpush.msra.mxu0 %v98
    %426 = vmatpush.msra.mxu0 %v95
    %427 = vmatpush.msra.mxu0 %v92
    %428 = vmatpush.msra.mxu0 %v89
    %429 = vmatpush.msra.mxu0 %v86
    %430 = vmatpush.msra.mxu0 %v83
    %431 = vmatpush.msra.mxu0 %v80
    %432 = vmatpush.msra.mxu0 %v77
    %433 = vmatpush.msra.mxu0 %v74
    %434 = vmatpush.msra.mxu0 %v71
    %435 = vmatpush.msra.mxu0 %v68
    %436 = vmatpush.msra.mxu0 %v65
    %437 = vmatpush.msra.mxu0 %v62
    %438 = vmatpush.msra.mxu0 %v59
    %439 = vmatpush.msra.mxu0 %v56
    %440 = vmatmul.f32.gmra.mxu0 %v418
    %v441 = vpop.f32.mrf.mxu0
    %v442 = vadd.f32 0.0, %v441
    %443 = vdwg.mxu0
    %444 = vmatpush.msra.mxu0 %v102
    %445 = vmatpush.msra.mxu0 %v99
    %446 = vmatpush.msra.mxu0 %v96
    %447 = vmatpush.msra.mxu0 %v93
    %448 = vmatpush.msra.mxu0 %v90
    %449 = vmatpush.msra.mxu0 %v87
    %450 = vmatpush.msra.mxu0 %v84
    %451 = vmatpush.msra.mxu0 %v81
    %452 = vmatpush.msra.mxu0 %v78
    %453 = vmatpush.msra.mxu0 %v75
    %454 = vmatpush.msra.mxu0 %v72
    %455 = vmatpush.msra.mxu0 %v69
    %456 = vmatpush.msra.mxu0 %v66
    %457 = vmatpush.msra.mxu0 %v63
    %458 = vmatpush.msra.mxu0 %v60
    %459 = vmatpush.msra.mxu0 %v57
    %460 = vmatmul.f32.gmra.mxu0 %v418
    %v461 = vpop.f32.mrf.mxu0
    %v462 = vadd.f32 0.0, %v461
    %463 = vdwg.mxu0
    %464 = vmatpush.msra.mxu0 %v103
    %465 = vmatpush.msra.mxu0 %v100
    %466 = vmatpush.msra.mxu0 %v97
    %467 = vmatpush.msra.mxu0 %v94
    %468 = vmatpush.msra.mxu0 %v91
    %469 = vmatpush.msra.mxu0 %v88
    %470 = vmatpush.msra.mxu0 %v85
    %471 = vmatpush.msra.mxu0 %v82
    %472 = vmatpush.msra.mxu0 %v79
    %473 = vmatpush.msra.mxu0 %v76
    %474 = vmatpush.msra.mxu0 %v73
    %475 = vmatpush.msra.mxu0 %v70
    %476 = vmatpush.msra.mxu0 %v67
    %477 = vmatpush.msra.mxu0 %v64
    %478 = vmatpush.msra.mxu0 %v61
    %479 = vmatpush.msra.mxu0 %v58
    %480 = vmatmul.f32.gmra.mxu0 %v418
    %v481 = vpop.f32.mrf.mxu0
    %v482 = vadd.f32 0.0, %v481
    %483 = vdwg.mxu0
    %v484 = vadd.f32 %v420, %v442
    %v485 = vadd.f32 %v421, %v462
    %v486 = vadd.f32 %v422, %v482
    %487 = vmatpush.msra.mxu0 %v182
    %488 = vmatpush.msra.mxu0 %v181
    %489 = vmatpush.msra.mxu0 %v180
    %490 = vmatpush.msra.mxu0 %v179
    %491 = vmatpush.msra.mxu0 %v178
    %492 = vmatpush.msra.mxu0 %v177
    %493 = vmatpush.msra.mxu0 %v176
    %494 = vmatpush.msra.mxu0 %v175
    %495 = vmatpush.msra.mxu0 %v174
    %496 = vmatpush.msra.mxu0 %v173
    %497 = vmatpush.msra.mxu0 %v172
    %498 = vmatpush.msra.mxu0 %v171
    %499 = vmatpush.msra.mxu0 %v170
    %500 = vmatpush.msra.mxu0 %v169
    %501 = vmatpush.msra.mxu0 %v168
    %502 = vmatpush.msra.mxu0 %v167
    %503 = vmatmul.f32.gmra.mxu0 %v418
    %v504 = vpop.f32.mrf.mxu0
    %v505 = vadd.f32 0.0, %v504
    %506 = vdwg.mxu0
    %v507 = vadd.f32 %v423, %v505
    %v508 = vxor.u32 %v484, 2147483648
    %v509 = vxor.u32 %v485, 2147483648
    %v510 = vxor.u32 %v486, 2147483648
    %v511 = vmul.f32 %v508, 1.442695
    %v512 = vpow.pop %v511
    %v513 = vmul.f32 %v509, 1.442695
    %v514 = vpow.pop %v513
    %v515 = vmul.f32 %v510, 1.442695
    %v516 = vpow.pop %v515
    %v517 = vadd.f32 %v512, 1.0
    %v518 = vadd.f32 %v514, 1.0
    %v519 = vadd.f32 %v516, 1.0
    %v520 = vrcp.pop %v517
    %v521 = vmul.f32 %v517, %v520
    %v522 = vsub.f32 1.0, %v521
    %v523 = vmul.f32 %v520, %v522
    %v524 = vadd.f32 %v520, %v523
    %vm525 = vweird.f32 %v517
    %vm526 = vweird.f32 %v520
    %vm527 = vmor %vm525, %vm526
    %v528 = vsel %vm527, %v520, %v524
    %v529 = vand.u32 2147483647, %v517
    %vm530 = vcmp.eq.f32.partialorder %v529, 8.507059e+37
    %v531 = vand.u32 %v517, 2147483648
    %v532 = vor.u32 1.1754944e-38, %v531
    %v533 = vsel %vm530, %v532, %v528
    %v534 = vmul.f32 1.0, %v533
    %v535 = vrcp.pop %v518
    %v536 = vmul.f32 %v518, %v535
    %v537 = vsub.f32 1.0, %v536
    %v538 = vmul.f32 %v535, %v537
    %v539 = vadd.f32 %v535, %v538
    %vm540 = vweird.f32 %v518
    %vm541 = vweird.f32 %v535
    %vm542 = vmor %vm540, %vm541
    %v543 = vsel %vm542, %v535, %v539
    %v544 = vand.u32 2147483647, %v518
    %vm545 = vcmp.eq.f32.partialorder %v544, 8.507059e+37
    %v546 = vand.u32 %v518, 2147483648
    %v547 = vor.u32 1.1754944e-38, %v546
    %v548 = vsel %vm545, %v547, %v543
    %v549 = vmul.f32 1.0, %v548
    %v550 = vrcp.pop %v519
    %v551 = vmul.f32 %v519, %v550
    %v552 = vsub.f32 1.0, %v551
    %v553 = vmul.f32 %v550, %v552
    %v554 = vadd.f32 %v550, %v553
    %vm555 = vweird.f32 %v519
    %vm556 = vweird.f32 %v550
    %vm557 = vmor %vm555, %vm556
    %v558 = vsel %vm557, %v550, %v554
    %v559 = vand.u32 2147483647, %v519
    %vm560 = vcmp.eq.f32.partialorder %v559, 8.507059e+37
    %v561 = vand.u32 %v519, 2147483648
    %v562 = vor.u32 1.1754944e-38, %v561
    %v563 = vsel %vm560, %v562, %v558
    %v564 = vmul.f32 1.0, %v563
    %v565 = vtanh.pop %v507
    %v566 = vmul.f32 %v549, %v416
    %v567 = vmul.f32 %v534, %v565
    %v568 = vadd.f32 %v566, %v567
    %v569 = vtanh.pop %v568
    %v570 = vmul.f32 %v564, %v569
    %s571 = scalar_lea.vmem [#allocation4], 96
    %v572 = vld [vmem:[%s571] sm:$0xff]
    %v573 = vld [vmem:[%s571 + $0x8] sm:$0xff]
    %v574 = vld [vmem:[%s571 + $0x10] sm:$0xff]
    %v575 = vld [vmem:[%s571 + $0x18] sm:$0xff]
    %576 = vmatpush.msra.mxu0 %v101
    %577 = vmatpush.msra.mxu0 %v98
    %578 = vmatpush.msra.mxu0 %v95
    %579 = vmatpush.msra.mxu0 %v92
    %580 = vmatpush.msra.mxu0 %v89
    %581 = vmatpush.msra.mxu0 %v86
    %582 = vmatpush.msra.mxu0 %v83
    %583 = vmatpush.msra.mxu0 %v80
    %584 = vmatpush.msra.mxu0 %v77
    %585 = vmatpush.msra.mxu0 %v74
    %586 = vmatpush.msra.mxu0 %v71
    %587 = vmatpush.msra.mxu0 %v68
    %588 = vmatpush.msra.mxu0 %v65
    %589 = vmatpush.msra.mxu0 %v62
    %590 = vmatpush.msra.mxu0 %v59
    %591 = vmatpush.msra.mxu0 %v56
    %592 = vmatmul.f32.gmra.mxu0 %v570
    %v593 = vpop.f32.mrf.mxu0
    %v594 = vadd.f32 0.0, %v593
    %595 = vdwg.mxu0
    %596 = vmatpush.msra.mxu0 %v102
    %597 = vmatpush.msra.mxu0 %v99
    %598 = vmatpush.msra.mxu0 %v96
    %599 = vmatpush.msra.mxu0 %v93
    %600 = vmatpush.msra.mxu0 %v90
    %601 = vmatpush.msra.mxu0 %v87
    %602 = vmatpush.msra.mxu0 %v84
    %603 = vmatpush.msra.mxu0 %v81
    %604 = vmatpush.msra.mxu0 %v78
    %605 = vmatpush.msra.mxu0 %v75
    %606 = vmatpush.msra.mxu0 %v72
    %607 = vmatpush.msra.mxu0 %v69
    %608 = vmatpush.msra.mxu0 %v66
    %609 = vmatpush.msra.mxu0 %v63
    %610 = vmatpush.msra.mxu0 %v60
    %611 = vmatpush.msra.mxu0 %v57
    %612 = vmatmul.f32.gmra.mxu0 %v570
    %v613 = vpop.f32.mrf.mxu0
    %v614 = vadd.f32 0.0, %v613
    %615 = vdwg.mxu0
    %616 = vmatpush.msra.mxu0 %v103
    %617 = vmatpush.msra.mxu0 %v100
    %618 = vmatpush.msra.mxu0 %v97
    %619 = vmatpush.msra.mxu0 %v94
    %620 = vmatpush.msra.mxu0 %v91
    %621 = vmatpush.msra.mxu0 %v88
    %622 = vmatpush.msra.mxu0 %v85
    %623 = vmatpush.msra.mxu0 %v82
    %624 = vmatpush.msra.mxu0 %v79
    %625 = vmatpush.msra.mxu0 %v76
    %626 = vmatpush.msra.mxu0 %v73
    %627 = vmatpush.msra.mxu0 %v70
    %628 = vmatpush.msra.mxu0 %v67
    %629 = vmatpush.msra.mxu0 %v64
    %630 = vmatpush.msra.mxu0 %v61
    %631 = vmatpush.msra.mxu0 %v58
    %632 = vmatmul.f32.gmra.mxu0 %v570
    %v633 = vpop.f32.mrf.mxu0
    %v634 = vadd.f32 0.0, %v633
    %635 = vdwg.mxu0
    %v636 = vadd.f32 %v572, %v594
    %v637 = vadd.f32 %v573, %v614
    %v638 = vadd.f32 %v574, %v634
    %639 = vmatpush.msra.mxu0 %v182
    %640 = vmatpush.msra.mxu0 %v181
    %641 = vmatpush.msra.mxu0 %v180
    %642 = vmatpush.msra.mxu0 %v179
    %643 = vmatpush.msra.mxu0 %v178
    %644 = vmatpush.msra.mxu0 %v177
    %645 = vmatpush.msra.mxu0 %v176
    %646 = vmatpush.msra.mxu0 %v175
    %647 = vmatpush.msra.mxu0 %v174
    %648 = vmatpush.msra.mxu0 %v173
    %649 = vmatpush.msra.mxu0 %v172
    %650 = vmatpush.msra.mxu0 %v171
    %651 = vmatpush.msra.mxu0 %v170
    %652 = vmatpush.msra.mxu0 %v169
    %653 = vmatpush.msra.mxu0 %v168
    %654 = vmatpush.msra.mxu0 %v167
    %655 = vmatmul.f32.gmra.mxu0 %v570
    %v656 = vpop.f32.mrf.mxu0
    %v657 = vadd.f32 0.0, %v656
    %658 = vdwg.mxu0
    %v659 = vadd.f32 %v575, %v657
    %v660 = vxor.u32 %v636, 2147483648
    %v661 = vxor.u32 %v637, 2147483648
    %v662 = vxor.u32 %v638, 2147483648
    %v663 = vmul.f32 %v660, 1.442695
    %v664 = vpow.pop %v663
    %v665 = vmul.f32 %v661, 1.442695
    %v666 = vpow.pop %v665
    %v667 = vmul.f32 %v662, 1.442695
    %v668 = vpow.pop %v667
    %v669 = vadd.f32 %v664, 1.0
    %v670 = vadd.f32 %v666, 1.0
    %v671 = vadd.f32 %v668, 1.0
    %v672 = vrcp.pop %v669
    %v673 = vmul.f32 %v669, %v672
    %v674 = vsub.f32 1.0, %v673
    %v675 = vmul.f32 %v672, %v674
    %v676 = vadd.f32 %v672, %v675
    %vm677 = vweird.f32 %v669
    %vm678 = vweird.f32 %v672
    %vm679 = vmor %vm677, %vm678
    %v680 = vsel %vm679, %v672, %v676
    %v681 = vand.u32 2147483647, %v669
    %vm682 = vcmp.eq.f32.partialorder %v681, 8.507059e+37
    %v683 = vand.u32 %v669, 2147483648
    %v684 = vor.u32 1.1754944e-38, %v683
    %v685 = vsel %vm682, %v684, %v680
    %v686 = vmul.f32 1.0, %v685
    %v687 = vrcp.pop %v670
    %v688 = vmul.f32 %v670, %v687
    %v689 = vsub.f32 1.0, %v688
    %v690 = vmul.f32 %v687, %v689
    %v691 = vadd.f32 %v687, %v690
    %vm692 = vweird.f32 %v670
    %vm693 = vweird.f32 %v687
    %vm694 = vmor %vm692, %vm693
    %v695 = vsel %vm694, %v687, %v691
    %v696 = vand.u32 2147483647, %v670
    %vm697 = vcmp.eq.f32.partialorder %v696, 8.507059e+37
    %v698 = vand.u32 %v670, 2147483648
    %v699 = vor.u32 1.1754944e-38, %v698
    %v700 = vsel %vm697, %v699, %v695
    %v701 = vmul.f32 1.0, %v700
    %v702 = vrcp.pop %v671
    %v703 = vmul.f32 %v671, %v702
    %v704 = vsub.f32 1.0, %v703
    %v705 = vmul.f32 %v702, %v704
    %v706 = vadd.f32 %v702, %v705
    %vm707 = vweird.f32 %v671
    %vm708 = vweird.f32 %v702
    %vm709 = vmor %vm707, %vm708
    %v710 = vsel %vm709, %v702, %v706
    %v711 = vand.u32 2147483647, %v671
    %vm712 = vcmp.eq.f32.partialorder %v711, 8.507059e+37
    %v713 = vand.u32 %v671, 2147483648
    %v714 = vor.u32 1.1754944e-38, %v713
    %v715 = vsel %vm712, %v714, %v710
    %v716 = vmul.f32 1.0, %v715
    %v717 = vtanh.pop %v659
    %v718 = vmul.f32 %v701, %v568
    %v719 = vmul.f32 %v686, %v717
    %v720 = vadd.f32 %v718, %v719
    %v721 = vtanh.pop %v720
    %v722 = vmul.f32 %v716, %v721
    %s723 = scalar_lea.vmem [#allocation4], 128
    %v724 = vld [vmem:[%s723] sm:$0xff]
    %v725 = vld [vmem:[%s723 + $0x8] sm:$0xff]
    %v726 = vld [vmem:[%s723 + $0x10] sm:$0xff]
    %v727 = vld [vmem:[%s723 + $0x18] sm:$0xff]
    %728 = vmatpush.msra.mxu0 %v101
    %729 = vmatpush.msra.mxu0 %v98
    %730 = vmatpush.msra.mxu0 %v95
    %731 = vmatpush.msra.mxu0 %v92
    %732 = vmatpush.msra.mxu0 %v89
    %733 = vmatpush.msra.mxu0 %v86
    %734 = vmatpush.msra.mxu0 %v83
    %735 = vmatpush.msra.mxu0 %v80
    %736 = vmatpush.msra.mxu0 %v77
    %737 = vmatpush.msra.mxu0 %v74
    %738 = vmatpush.msra.mxu0 %v71
    %739 = vmatpush.msra.mxu0 %v68
    %740 = vmatpush.msra.mxu0 %v65
    %741 = vmatpush.msra.mxu0 %v62
    %742 = vmatpush.msra.mxu0 %v59
    %743 = vmatpush.msra.mxu0 %v56
    %744 = vmatmul.f32.gmra.mxu0 %v722
    %v745 = vpop.f32.mrf.mxu0
    %v746 = vadd.f32 0.0, %v745
    %747 = vdwg.mxu0
    %748 = vmatpush.msra.mxu0 %v102
    %749 = vmatpush.msra.mxu0 %v99
    %750 = vmatpush.msra.mxu0 %v96
    %751 = vmatpush.msra.mxu0 %v93
    %752 = vmatpush.msra.mxu0 %v90
    %753 = vmatpush.msra.mxu0 %v87
    %754 = vmatpush.msra.mxu0 %v84
    %755 = vmatpush.msra.mxu0 %v81
    %756 = vmatpush.msra.mxu0 %v78
    %757 = vmatpush.msra.mxu0 %v75
    %758 = vmatpush.msra.mxu0 %v72
    %759 = vmatpush.msra.mxu0 %v69
    %760 = vmatpush.msra.mxu0 %v66
    %761 = vmatpush.msra.mxu0 %v63
    %762 = vmatpush.msra.mxu0 %v60
    %763 = vmatpush.msra.mxu0 %v57
    %764 = vmatmul.f32.gmra.mxu0 %v722
    %v765 = vpop.f32.mrf.mxu0
    %v766 = vadd.f32 0.0, %v765
    %767 = vdwg.mxu0
    %768 = vmatpush.msra.mxu0 %v103
    %769 = vmatpush.msra.mxu0 %v100
    %770 = vmatpush.msra.mxu0 %v97
    %771 = vmatpush.msra.mxu0 %v94
    %772 = vmatpush.msra.mxu0 %v91
    %773 = vmatpush.msra.mxu0 %v88
    %774 = vmatpush.msra.mxu0 %v85
    %775 = vmatpush.msra.mxu0 %v82
    %776 = vmatpush.msra.mxu0 %v79
    %777 = vmatpush.msra.mxu0 %v76
    %778 = vmatpush.msra.mxu0 %v73
    %779 = vmatpush.msra.mxu0 %v70
    %780 = vmatpush.msra.mxu0 %v67
    %781 = vmatpush.msra.mxu0 %v64
    %782 = vmatpush.msra.mxu0 %v61
    %783 = vmatpush.msra.mxu0 %v58
    %784 = vmatmul.f32.gmra.mxu0 %v722
    %v785 = vpop.f32.mrf.mxu0
    %v786 = vadd.f32 0.0, %v785
    %787 = vdwg.mxu0
    %v788 = vadd.f32 %v724, %v746
    %v789 = vadd.f32 %v725, %v766
    %v790 = vadd.f32 %v726, %v786
    %791 = vmatpush.msra.mxu0 %v182
    %792 = vmatpush.msra.mxu0 %v181
    %793 = vmatpush.msra.mxu0 %v180
    %794 = vmatpush.msra.mxu0 %v179
    %795 = vmatpush.msra.mxu0 %v178
    %796 = vmatpush.msra.mxu0 %v177
    %797 = vmatpush.msra.mxu0 %v176
    %798 = vmatpush.msra.mxu0 %v175
    %799 = vmatpush.msra.mxu0 %v174
    %800 = vmatpush.msra.mxu0 %v173
    %801 = vmatpush.msra.mxu0 %v172
    %802 = vmatpush.msra.mxu0 %v171
    %803 = vmatpush.msra.mxu0 %v170
    %804 = vmatpush.msra.mxu0 %v169
    %805 = vmatpush.msra.mxu0 %v168
    %806 = vmatpush.msra.mxu0 %v167
    %807 = vmatmul.f32.gmra.mxu0 %v722
    %v808 = vpop.f32.mrf.mxu0
    %v809 = vadd.f32 0.0, %v808
    %810 = vdwg.mxu0
    %v811 = vadd.f32 %v727, %v809
    %v812 = vxor.u32 %v788, 2147483648
    %v813 = vxor.u32 %v789, 2147483648
    %v814 = vxor.u32 %v790, 2147483648
    %v815 = vmul.f32 %v812, 1.442695
    %v816 = vpow.pop %v815
    %v817 = vmul.f32 %v813, 1.442695
    %v818 = vpow.pop %v817
    %v819 = vmul.f32 %v814, 1.442695
    %v820 = vpow.pop %v819
    %v821 = vadd.f32 %v816, 1.0
    %v822 = vadd.f32 %v818, 1.0
    %v823 = vadd.f32 %v820, 1.0
    %v824 = vrcp.pop %v821
    %v825 = vmul.f32 %v821, %v824
    %v826 = vsub.f32 1.0, %v825
    %v827 = vmul.f32 %v824, %v826
    %v828 = vadd.f32 %v824, %v827
    %vm829 = vweird.f32 %v821
    %vm830 = vweird.f32 %v824
    %vm831 = vmor %vm829, %vm830
    %v832 = vsel %vm831, %v824, %v828
    %v833 = vand.u32 2147483647, %v821
    %vm834 = vcmp.eq.f32.partialorder %v833, 8.507059e+37
    %v835 = vand.u32 %v821, 2147483648
    %v836 = vor.u32 1.1754944e-38, %v835
    %v837 = vsel %vm834, %v836, %v832
    %v838 = vmul.f32 1.0, %v837
    %v839 = vrcp.pop %v822
    %v840 = vmul.f32 %v822, %v839
    %v841 = vsub.f32 1.0, %v840
    %v842 = vmul.f32 %v839, %v841
    %v843 = vadd.f32 %v839, %v842
    %vm844 = vweird.f32 %v822
    %vm845 = vweird.f32 %v839
    %vm846 = vmor %vm844, %vm845
    %v847 = vsel %vm846, %v839, %v843
    %v848 = vand.u32 2147483647, %v822
    %vm849 = vcmp.eq.f32.partialorder %v848, 8.507059e+37
    %v850 = vand.u32 %v822, 2147483648
    %v851 = vor.u32 1.1754944e-38, %v850
    %v852 = vsel %vm849, %v851, %v847
    %v853 = vmul.f32 1.0, %v852
    %v854 = vrcp.pop %v823
    %v855 = vmul.f32 %v823, %v854
    %v856 = vsub.f32 1.0, %v855
    %v857 = vmul.f32 %v854, %v856
    %v858 = vadd.f32 %v854, %v857
    %vm859 = vweird.f32 %v823
    %vm860 = vweird.f32 %v854
    %vm861 = vmor %vm859, %vm860
    %v862 = vsel %vm861, %v854, %v858
    %v863 = vand.u32 2147483647, %v823
    %vm864 = vcmp.eq.f32.partialorder %v863, 8.507059e+37
    %v865 = vand.u32 %v823, 2147483648
    %v866 = vor.u32 1.1754944e-38, %v865
    %v867 = vsel %vm864, %v866, %v862
    %v868 = vmul.f32 1.0, %v867
    %v869 = vtanh.pop %v811
    %v870 = vmul.f32 %v853, %v720
    %v871 = vmul.f32 %v838, %v869
    %v872 = vadd.f32 %v870, %v871
    %v873 = vtanh.pop %v872
    %v874 = vmul.f32 %v868, %v873
    %s875 = scalar_lea.vmem [#allocation4], 160
    %v876 = vld [vmem:[%s875] sm:$0xff]
    %v877 = vld [vmem:[%s875 + $0x8] sm:$0xff]
    %v878 = vld [vmem:[%s875 + $0x10] sm:$0xff]
    %v879 = vld [vmem:[%s875 + $0x18] sm:$0xff]
    %880 = vmatpush.msra.mxu0 %v101
    %881 = vmatpush.msra.mxu0 %v98
    %882 = vmatpush.msra.mxu0 %v95
    %883 = vmatpush.msra.mxu0 %v92
    %884 = vmatpush.msra.mxu0 %v89
    %885 = vmatpush.msra.mxu0 %v86
    %886 = vmatpush.msra.mxu0 %v83
    %887 = vmatpush.msra.mxu0 %v80
    %888 = vmatpush.msra.mxu0 %v77
    %889 = vmatpush.msra.mxu0 %v74
    %890 = vmatpush.msra.mxu0 %v71
    %891 = vmatpush.msra.mxu0 %v68
    %892 = vmatpush.msra.mxu0 %v65
    %893 = vmatpush.msra.mxu0 %v62
    %894 = vmatpush.msra.mxu0 %v59
    %895 = vmatpush.msra.mxu0 %v56
    %896 = vmatmul.f32.gmra.mxu0 %v874
    %v897 = vpop.f32.mrf.mxu0
    %v898 = vadd.f32 0.0, %v897
    %899 = vdwg.mxu0
    %900 = vmatpush.msra.mxu0 %v102
    %901 = vmatpush.msra.mxu0 %v99
    %902 = vmatpush.msra.mxu0 %v96
    %903 = vmatpush.msra.mxu0 %v93
    %904 = vmatpush.msra.mxu0 %v90
    %905 = vmatpush.msra.mxu0 %v87
    %906 = vmatpush.msra.mxu0 %v84
    %907 = vmatpush.msra.mxu0 %v81
    %908 = vmatpush.msra.mxu0 %v78
    %909 = vmatpush.msra.mxu0 %v75
    %910 = vmatpush.msra.mxu0 %v72
    %911 = vmatpush.msra.mxu0 %v69
    %912 = vmatpush.msra.mxu0 %v66
    %913 = vmatpush.msra.mxu0 %v63
    %914 = vmatpush.msra.mxu0 %v60
    %915 = vmatpush.msra.mxu0 %v57
    %916 = vmatmul.f32.gmra.mxu0 %v874
    %v917 = vpop.f32.mrf.mxu0
    %v918 = vadd.f32 0.0, %v917
    %919 = vdwg.mxu0
    %920 = vmatpush.msra.mxu0 %v103
    %921 = vmatpush.msra.mxu0 %v100
    %922 = vmatpush.msra.mxu0 %v97
    %923 = vmatpush.msra.mxu0 %v94
    %924 = vmatpush.msra.mxu0 %v91
    %925 = vmatpush.msra.mxu0 %v88
    %926 = vmatpush.msra.mxu0 %v85
    %927 = vmatpush.msra.mxu0 %v82
    %928 = vmatpush.msra.mxu0 %v79
    %929 = vmatpush.msra.mxu0 %v76
    %930 = vmatpush.msra.mxu0 %v73
    %931 = vmatpush.msra.mxu0 %v70
    %932 = vmatpush.msra.mxu0 %v67
    %933 = vmatpush.msra.mxu0 %v64
    %934 = vmatpush.msra.mxu0 %v61
    %935 = vmatpush.msra.mxu0 %v58
    %936 = vmatmul.f32.gmra.mxu0 %v874
    %v937 = vpop.f32.mrf.mxu0
    %v938 = vadd.f32 0.0, %v937
    %939 = vdwg.mxu0
    %v940 = vadd.f32 %v876, %v898
    %v941 = vadd.f32 %v877, %v918
    %v942 = vadd.f32 %v878, %v938
    %943 = vmatpush.msra.mxu0 %v182
    %944 = vmatpush.msra.mxu0 %v181
    %945 = vmatpush.msra.mxu0 %v180
    %946 = vmatpush.msra.mxu0 %v179
    %947 = vmatpush.msra.mxu0 %v178
    %948 = vmatpush.msra.mxu0 %v177
    %949 = vmatpush.msra.mxu0 %v176
    %950 = vmatpush.msra.mxu0 %v175
    %951 = vmatpush.msra.mxu0 %v174
    %952 = vmatpush.msra.mxu0 %v173
    %953 = vmatpush.msra.mxu0 %v172
    %954 = vmatpush.msra.mxu0 %v171
    %955 = vmatpush.msra.mxu0 %v170
    %956 = vmatpush.msra.mxu0 %v169
    %957 = vmatpush.msra.mxu0 %v168
    %958 = vmatpush.msra.mxu0 %v167
    %959 = vmatmul.f32.gmra.mxu0 %v874
    %v960 = vpop.f32.mrf.mxu0
    %v961 = vadd.f32 0.0, %v960
    %962 = vdwg.mxu0
    %v963 = vadd.f32 %v879, %v961
    %v964 = vxor.u32 %v940, 2147483648
    %v965 = vxor.u32 %v941, 2147483648
    %v966 = vxor.u32 %v942, 2147483648
    %v967 = vmul.f32 %v964, 1.442695
    %v968 = vpow.pop %v967
    %v969 = vmul.f32 %v965, 1.442695
    %v970 = vpow.pop %v969
    %v971 = vmul.f32 %v966, 1.442695
    %v972 = vpow.pop %v971
    %v973 = vadd.f32 %v968, 1.0
    %v974 = vadd.f32 %v970, 1.0
    %v975 = vadd.f32 %v972, 1.0
    %v976 = vrcp.pop %v973
    %v977 = vmul.f32 %v973, %v976
    %v978 = vsub.f32 1.0, %v977
    %v979 = vmul.f32 %v976, %v978
    %v980 = vadd.f32 %v976, %v979
    %vm981 = vweird.f32 %v973
    %vm982 = vweird.f32 %v976
    %vm983 = vmor %vm981, %vm982
    %v984 = vsel %vm983, %v976, %v980
    %v985 = vand.u32 2147483647, %v973
    %vm986 = vcmp.eq.f32.partialorder %v985, 8.507059e+37
    %v987 = vand.u32 %v973, 2147483648
    %v988 = vor.u32 1.1754944e-38, %v987
    %v989 = vsel %vm986, %v988, %v984
    %v990 = vmul.f32 1.0, %v989
    %v991 = vrcp.pop %v974
    %v992 = vmul.f32 %v974, %v991
    %v993 = vsub.f32 1.0, %v992
    %v994 = vmul.f32 %v991, %v993
    %v995 = vadd.f32 %v991, %v994
    %vm996 = vweird.f32 %v974
    %vm997 = vweird.f32 %v991
    %vm998 = vmor %vm996, %vm997
    %v999 = vsel %vm998, %v991, %v995
    %v1000 = vand.u32 2147483647, %v974
    %vm1001 = vcmp.eq.f32.partialorder %v1000, 8.507059e+37
    %v1002 = vand.u32 %v974, 2147483648
    %v1003 = vor.u32 1.1754944e-38, %v1002
    %v1004 = vsel %vm1001, %v1003, %v999
    %v1005 = vmul.f32 1.0, %v1004
    %v1006 = vrcp.pop %v975
    %v1007 = vmul.f32 %v975, %v1006
    %v1008 = vsub.f32 1.0, %v1007
    %v1009 = vmul.f32 %v1006, %v1008
    %v1010 = vadd.f32 %v1006, %v1009
    %vm1011 = vweird.f32 %v975
    %vm1012 = vweird.f32 %v1006
    %vm1013 = vmor %vm1011, %vm1012
    %v1014 = vsel %vm1013, %v1006, %v1010
    %v1015 = vand.u32 2147483647, %v975
    %vm1016 = vcmp.eq.f32.partialorder %v1015, 8.507059e+37
    %v1017 = vand.u32 %v975, 2147483648
    %v1018 = vor.u32 1.1754944e-38, %v1017
    %v1019 = vsel %vm1016, %v1018, %v1014
    %v1020 = vmul.f32 1.0, %v1019
    %v1021 = vtanh.pop %v963
    %v1022 = vmul.f32 %v1005, %v872
    %v1023 = vmul.f32 %v990, %v1021
    %v1024 = vadd.f32 %v1022, %v1023
    %v1025 = vtanh.pop %v1024
    %v1026 = vmul.f32 %v1020, %v1025
    %s1027 = scalar_lea.vmem [#allocation4], 192
    %v1028 = vld [vmem:[%s1027] sm:$0xff]
    %v1029 = vld [vmem:[%s1027 + $0x8] sm:$0xff]
    %v1030 = vld [vmem:[%s1027 + $0x10] sm:$0xff]
    %v1031 = vld [vmem:[%s1027 + $0x18] sm:$0xff]
    %1032 = vmatpush.msra.mxu0 %v101
    %1033 = vmatpush.msra.mxu0 %v98
    %1034 = vmatpush.msra.mxu0 %v95
    %1035 = vmatpush.msra.mxu0 %v92
    %1036 = vmatpush.msra.mxu0 %v89
    %1037 = vmatpush.msra.mxu0 %v86
    %1038 = vmatpush.msra.mxu0 %v83
    %1039 = vmatpush.msra.mxu0 %v80
    %1040 = vmatpush.msra.mxu0 %v77
    %1041 = vmatpush.msra.mxu0 %v74
    %1042 = vmatpush.msra.mxu0 %v71
    %1043 = vmatpush.msra.mxu0 %v68
    %1044 = vmatpush.msra.mxu0 %v65
    %1045 = vmatpush.msra.mxu0 %v62
    %1046 = vmatpush.msra.mxu0 %v59
    %1047 = vmatpush.msra.mxu0 %v56
    %1048 = vmatmul.f32.gmra.mxu0 %v1026
    %v1049 = vpop.f32.mrf.mxu0
    %v1050 = vadd.f32 0.0, %v1049
    %1051 = vdwg.mxu0
    %1052 = vmatpush.msra.mxu0 %v102
    %1053 = vmatpush.msra.mxu0 %v99
    %1054 = vmatpush.msra.mxu0 %v96
    %1055 = vmatpush.msra.mxu0 %v93
    %1056 = vmatpush.msra.mxu0 %v90
    %1057 = vmatpush.msra.mxu0 %v87
    %1058 = vmatpush.msra.mxu0 %v84
    %1059 = vmatpush.msra.mxu0 %v81
    %1060 = vmatpush.msra.mxu0 %v78
    %1061 = vmatpush.msra.mxu0 %v75
    %1062 = vmatpush.msra.mxu0 %v72
    %1063 = vmatpush.msra.mxu0 %v69
    %1064 = vmatpush.msra.mxu0 %v66
    %1065 = vmatpush.msra.mxu0 %v63
    %1066 = vmatpush.msra.mxu0 %v60
    %1067 = vmatpush.msra.mxu0 %v57
    %1068 = vmatmul.f32.gmra.mxu0 %v1026
    %v1069 = vpop.f32.mrf.mxu0
    %v1070 = vadd.f32 0.0, %v1069
    %1071 = vdwg.mxu0
    %1072 = vmatpush.msra.mxu0 %v103
    %1073 = vmatpush.msra.mxu0 %v100
    %1074 = vmatpush.msra.mxu0 %v97
    %1075 = vmatpush.msra.mxu0 %v94
    %1076 = vmatpush.msra.mxu0 %v91
    %1077 = vmatpush.msra.mxu0 %v88
    %1078 = vmatpush.msra.mxu0 %v85
    %1079 = vmatpush.msra.mxu0 %v82
    %1080 = vmatpush.msra.mxu0 %v79
    %1081 = vmatpush.msra.mxu0 %v76
    %1082 = vmatpush.msra.mxu0 %v73
    %1083 = vmatpush.msra.mxu0 %v70
    %1084 = vmatpush.msra.mxu0 %v67
    %1085 = vmatpush.msra.mxu0 %v64
    %1086 = vmatpush.msra.mxu0 %v61
    %1087 = vmatpush.msra.mxu0 %v58
    %1088 = vmatmul.f32.gmra.mxu0 %v1026
    %v1089 = vpop.f32.mrf.mxu0
    %v1090 = vadd.f32 0.0, %v1089
    %1091 = vdwg.mxu0
    %v1092 = vadd.f32 %v1028, %v1050
    %v1093 = vadd.f32 %v1029, %v1070
    %v1094 = vadd.f32 %v1030, %v1090
    %1095 = vmatpush.msra.mxu0 %v182
    %1096 = vmatpush.msra.mxu0 %v181
    %1097 = vmatpush.msra.mxu0 %v180
    %1098 = vmatpush.msra.mxu0 %v179
    %1099 = vmatpush.msra.mxu0 %v178
    %1100 = vmatpush.msra.mxu0 %v177
    %1101 = vmatpush.msra.mxu0 %v176
    %1102 = vmatpush.msra.mxu0 %v175
    %1103 = vmatpush.msra.mxu0 %v174
    %1104 = vmatpush.msra.mxu0 %v173
    %1105 = vmatpush.msra.mxu0 %v172
    %1106 = vmatpush.msra.mxu0 %v171
    %1107 = vmatpush.msra.mxu0 %v170
    %1108 = vmatpush.msra.mxu0 %v169
    %1109 = vmatpush.msra.mxu0 %v168
    %1110 = vmatpush.msra.mxu0 %v167
    %1111 = vmatmul.f32.gmra.mxu0 %v1026
    %v1112 = vpop.f32.mrf.mxu0
    %v1113 = vadd.f32 0.0, %v1112
    %1114 = vdwg.mxu0
    %v1115 = vadd.f32 %v1031, %v1113
    %v1116 = vxor.u32 %v1092, 2147483648
    %v1117 = vxor.u32 %v1093, 2147483648
    %v1118 = vxor.u32 %v1094, 2147483648
    %v1119 = vmul.f32 %v1116, 1.442695
    %v1120 = vpow.pop %v1119
    %v1121 = vmul.f32 %v1117, 1.442695
    %v1122 = vpow.pop %v1121
    %v1123 = vmul.f32 %v1118, 1.442695
    %v1124 = vpow.pop %v1123
    %v1125 = vadd.f32 %v1120, 1.0
    %v1126 = vadd.f32 %v1122, 1.0
    %v1127 = vadd.f32 %v1124, 1.0
    %v1128 = vrcp.pop %v1125
    %v1129 = vmul.f32 %v1125, %v1128
    %v1130 = vsub.f32 1.0, %v1129
    %v1131 = vmul.f32 %v1128, %v1130
    %v1132 = vadd.f32 %v1128, %v1131
    %vm1133 = vweird.f32 %v1125
    %vm1134 = vweird.f32 %v1128
    %vm1135 = vmor %vm1133, %vm1134
    %v1136 = vsel %vm1135, %v1128, %v1132
    %v1137 = vand.u32 2147483647, %v1125
    %vm1138 = vcmp.eq.f32.partialorder %v1137, 8.507059e+37
    %v1139 = vand.u32 %v1125, 2147483648
    %v1140 = vor.u32 1.1754944e-38, %v1139
    %v1141 = vsel %vm1138, %v1140, %v1136
    %v1142 = vmul.f32 1.0, %v1141
    %v1143 = vrcp.pop %v1126
    %v1144 = vmul.f32 %v1126, %v1143
    %v1145 = vsub.f32 1.0, %v1144
    %v1146 = vmul.f32 %v1143, %v1145
    %v1147 = vadd.f32 %v1143, %v1146
    %vm1148 = vweird.f32 %v1126
    %vm1149 = vweird.f32 %v1143
    %vm1150 = vmor %vm1148, %vm1149
    %v1151 = vsel %vm1150, %v1143, %v1147
    %v1152 = vand.u32 2147483647, %v1126
    %vm1153 = vcmp.eq.f32.partialorder %v1152, 8.507059e+37
    %v1154 = vand.u32 %v1126, 2147483648
    %v1155 = vor.u32 1.1754944e-38, %v1154
    %v1156 = vsel %vm1153, %v1155, %v1151
    %v1157 = vmul.f32 1.0, %v1156
    %v1158 = vrcp.pop %v1127
    %v1159 = vmul.f32 %v1127, %v1158
    %v1160 = vsub.f32 1.0, %v1159
    %v1161 = vmul.f32 %v1158, %v1160
    %v1162 = vadd.f32 %v1158, %v1161
    %vm1163 = vweird.f32 %v1127
    %vm1164 = vweird.f32 %v1158
    %vm1165 = vmor %vm1163, %vm1164
    %v1166 = vsel %vm1165, %v1158, %v1162
    %v1167 = vand.u32 2147483647, %v1127
    %vm1168 = vcmp.eq.f32.partialorder %v1167, 8.507059e+37
    %v1169 = vand.u32 %v1127, 2147483648
    %v1170 = vor.u32 1.1754944e-38, %v1169
    %v1171 = vsel %vm1168, %v1170, %v1166
    %v1172 = vmul.f32 1.0, %v1171
    %v1173 = vtanh.pop %v1115
    %v1174 = vmul.f32 %v1157, %v1024
    %v1175 = vmul.f32 %v1142, %v1173
    %v1176 = vadd.f32 %v1174, %v1175
    %v1177 = vtanh.pop %v1176
    %v1178 = vmul.f32 %v1172, %v1177
    %s1179 = scalar_lea.vmem [#allocation4], 224
    %v1180 = vld [vmem:[%s1179] sm:$0xff]
    %v1181 = vld [vmem:[%s1179 + $0x8] sm:$0xff]
    %v1182 = vld [vmem:[%s1179 + $0x10] sm:$0xff]
    %v1183 = vld [vmem:[%s1179 + $0x18] sm:$0xff]
    %1184 = vmatpush.msra.mxu0 %v101
    %1185 = vmatpush.msra.mxu0 %v98
    %1186 = vmatpush.msra.mxu0 %v95
    %1187 = vmatpush.msra.mxu0 %v92
    %1188 = vmatpush.msra.mxu0 %v89
    %1189 = vmatpush.msra.mxu0 %v86
    %1190 = vmatpush.msra.mxu0 %v83
    %1191 = vmatpush.msra.mxu0 %v80
    %1192 = vmatpush.msra.mxu0 %v77
    %1193 = vmatpush.msra.mxu0 %v74
    %1194 = vmatpush.msra.mxu0 %v71
    %1195 = vmatpush.msra.mxu0 %v68
    %1196 = vmatpush.msra.mxu0 %v65
    %1197 = vmatpush.msra.mxu0 %v62
    %1198 = vmatpush.msra.mxu0 %v59
    %1199 = vmatpush.msra.mxu0 %v56
    %1200 = vmatmul.f32.gmra.mxu0 %v1178
    %v1201 = vpop.f32.mrf.mxu0
    %v1202 = vadd.f32 0.0, %v1201
    %1203 = vdwg.mxu0
    %1204 = vmatpush.msra.mxu0 %v102
    %1205 = vmatpush.msra.mxu0 %v99
    %1206 = vmatpush.msra.mxu0 %v96
    %1207 = vmatpush.msra.mxu0 %v93
    %1208 = vmatpush.msra.mxu0 %v90
    %1209 = vmatpush.msra.mxu0 %v87
    %1210 = vmatpush.msra.mxu0 %v84
    %1211 = vmatpush.msra.mxu0 %v81
    %1212 = vmatpush.msra.mxu0 %v78
    %1213 = vmatpush.msra.mxu0 %v75
    %1214 = vmatpush.msra.mxu0 %v72
    %1215 = vmatpush.msra.mxu0 %v69
    %1216 = vmatpush.msra.mxu0 %v66
    %1217 = vmatpush.msra.mxu0 %v63
    %1218 = vmatpush.msra.mxu0 %v60
    %1219 = vmatpush.msra.mxu0 %v57
    %1220 = vmatmul.f32.gmra.mxu0 %v1178
    %v1221 = vpop.f32.mrf.mxu0
    %v1222 = vadd.f32 0.0, %v1221
    %1223 = vdwg.mxu0
    %1224 = vmatpush.msra.mxu0 %v103
    %1225 = vmatpush.msra.mxu0 %v100
    %1226 = vmatpush.msra.mxu0 %v97
    %1227 = vmatpush.msra.mxu0 %v94
    %1228 = vmatpush.msra.mxu0 %v91
    %1229 = vmatpush.msra.mxu0 %v88
    %1230 = vmatpush.msra.mxu0 %v85
    %1231 = vmatpush.msra.mxu0 %v82
    %1232 = vmatpush.msra.mxu0 %v79
    %1233 = vmatpush.msra.mxu0 %v76
    %1234 = vmatpush.msra.mxu0 %v73
    %1235 = vmatpush.msra.mxu0 %v70
    %1236 = vmatpush.msra.mxu0 %v67
    %1237 = vmatpush.msra.mxu0 %v64
    %1238 = vmatpush.msra.mxu0 %v61
    %1239 = vmatpush.msra.mxu0 %v58
    %1240 = vmatmul.f32.gmra.mxu0 %v1178
    %v1241 = vpop.f32.mrf.mxu0
    %v1242 = vadd.f32 0.0, %v1241
    %1243 = vdwg.mxu0
    %v1244 = vadd.f32 %v1180, %v1202
    %v1245 = vadd.f32 %v1181, %v1222
    %v1246 = vadd.f32 %v1182, %v1242
    %1247 = vmatpush.msra.mxu0 %v182
    %1248 = vmatpush.msra.mxu0 %v181
    %1249 = vmatpush.msra.mxu0 %v180
    %1250 = vmatpush.msra.mxu0 %v179
    %1251 = vmatpush.msra.mxu0 %v178
    %1252 = vmatpush.msra.mxu0 %v177
    %1253 = vmatpush.msra.mxu0 %v176
    %1254 = vmatpush.msra.mxu0 %v175
    %1255 = vmatpush.msra.mxu0 %v174
    %1256 = vmatpush.msra.mxu0 %v173
    %1257 = vmatpush.msra.mxu0 %v172
    %1258 = vmatpush.msra.mxu0 %v171
    %1259 = vmatpush.msra.mxu0 %v170
    %1260 = vmatpush.msra.mxu0 %v169
    %1261 = vmatpush.msra.mxu0 %v168
    %1262 = vmatpush.msra.mxu0 %v167
    %1263 = vmatmul.f32.gmra.mxu0 %v1178
    %v1264 = vpop.f32.mrf.mxu0
    %v1265 = vadd.f32 0.0, %v1264
    %1266 = vdwg.mxu0
    %v1267 = vadd.f32 %v1183, %v1265
    %v1268 = vxor.u32 %v1244, 2147483648
    %v1269 = vxor.u32 %v1245, 2147483648
    %v1270 = vxor.u32 %v1246, 2147483648
    %v1271 = vmul.f32 %v1268, 1.442695
    %v1272 = vpow.pop %v1271
    %v1273 = vmul.f32 %v1269, 1.442695
    %v1274 = vpow.pop %v1273
    %v1275 = vmul.f32 %v1270, 1.442695
    %v1276 = vpow.pop %v1275
    %v1277 = vadd.f32 %v1272, 1.0
    %v1278 = vadd.f32 %v1274, 1.0
    %v1279 = vadd.f32 %v1276, 1.0
    %v1280 = vrcp.pop %v1277
    %v1281 = vmul.f32 %v1277, %v1280
    %v1282 = vsub.f32 1.0, %v1281
    %v1283 = vmul.f32 %v1280, %v1282
    %v1284 = vadd.f32 %v1280, %v1283
    %vm1285 = vweird.f32 %v1277
    %vm1286 = vweird.f32 %v1280
    %vm1287 = vmor %vm1285, %vm1286
    %v1288 = vsel %vm1287, %v1280, %v1284
    %v1289 = vand.u32 2147483647, %v1277
    %vm1290 = vcmp.eq.f32.partialorder %v1289, 8.507059e+37
    %v1291 = vand.u32 %v1277, 2147483648
    %v1292 = vor.u32 1.1754944e-38, %v1291
    %v1293 = vsel %vm1290, %v1292, %v1288
    %v1294 = vmul.f32 1.0, %v1293
    %v1295 = vrcp.pop %v1278
    %v1296 = vmul.f32 %v1278, %v1295
    %v1297 = vsub.f32 1.0, %v1296
    %v1298 = vmul.f32 %v1295, %v1297
    %v1299 = vadd.f32 %v1295, %v1298
    %vm1300 = vweird.f32 %v1278
    %vm1301 = vweird.f32 %v1295
    %vm1302 = vmor %vm1300, %vm1301
    %v1303 = vsel %vm1302, %v1295, %v1299
    %v1304 = vand.u32 2147483647, %v1278
    %vm1305 = vcmp.eq.f32.partialorder %v1304, 8.507059e+37
    %v1306 = vand.u32 %v1278, 2147483648
    %v1307 = vor.u32 1.1754944e-38, %v1306
    %v1308 = vsel %vm1305, %v1307, %v1303
    %v1309 = vmul.f32 1.0, %v1308
    %v1310 = vrcp.pop %v1279
    %v1311 = vmul.f32 %v1279, %v1310
    %v1312 = vsub.f32 1.0, %v1311
    %v1313 = vmul.f32 %v1310, %v1312
    %v1314 = vadd.f32 %v1310, %v1313
    %vm1315 = vweird.f32 %v1279
    %vm1316 = vweird.f32 %v1310
    %vm1317 = vmor %vm1315, %vm1316
    %v1318 = vsel %vm1317, %v1310, %v1314
    %v1319 = vand.u32 2147483647, %v1279
    %vm1320 = vcmp.eq.f32.partialorder %v1319, 8.507059e+37
    %v1321 = vand.u32 %v1279, 2147483648
    %v1322 = vor.u32 1.1754944e-38, %v1321
    %v1323 = vsel %vm1320, %v1322, %v1318
    %v1324 = vmul.f32 1.0, %v1323
    %v1325 = vtanh.pop %v1267
    %v1326 = vmul.f32 %v1309, %v1176
    %v1327 = vmul.f32 %v1294, %v1325
    %v1328 = vadd.f32 %v1326, %v1327
    %v1329 = vtanh.pop %v1328
    %v1330 = vmul.f32 %v1324, %v1329
    %1331 = vst [vmem:[#allocation2] sm:$0xff] %v1330
    %1332 = vst [vmem:[#allocation3] sm:$0xff] %v1328
    // Predicated region
    $region22: #{tpu_custom_call.1} parent=1 // pred_check
      %p1333 = pneg %p44
    $region23: #{tpu_custom_call.1} parent=1 // pred_check_branch
      %1335 = sbr.rel (%p1333) target = $region25
    $region24: #{tpu_custom_call.1} parent=1 // pred_region
      %1336 = vst [vmem:[#allocation9] sm:$0xff] %v1330
    $region25: #{tpu_custom_call.1} parent=1 // pred_fallthru
      _
    // Predicated region
    $region26: #{tpu_custom_call.1} parent=1 // pred_check
      _
    $region27: #{tpu_custom_call.1} parent=1 // pred_check_branch
      %1338 = sbr.rel (0) target = $region29
    $region28: #{tpu_custom_call.1} parent=1 // pred_region
      %1340 = vsyncadd [#allocation6], 0
      %s1342 = sshll.u32 [#allocation9], 4
      %s1343 = int_to_ptr.vmem [resolvable:$true] %s1342
      %s1344 = sshll.u32 %s2, 4
      %s1345 = int_to_ptr.hbm [resolvable:$true] %s1344
      %1347 = dma.vmem_to_hbm [thread:$0]  %s1343, 128, %s1345, [#allocation6]
    $region29: #{tpu_custom_call.1} parent=1 // pred_fallthru
      _
    // Predicated region
    $region30: #{tpu_custom_call.1} parent=1 // pred_check
      _
    $region31: #{tpu_custom_call.1} parent=1 // pred_check_branch
      %1349 = sbr.rel (0) target = $region33
    $region32: #{tpu_custom_call.1} parent=1 // pred_region
      %1351 = dma.done [#allocation6], 128
    $region33: #{tpu_custom_call.1} parent=1 // pred_fallthru
      _
    %1352 = vsyncpa [#allocation5], 1
    %1353 = vsyncpa [#allocation8], 1
    %1354 = vsyncpa [#allocation6], 1

// kernel: tpu_custom_call.1
$region0: #{tpu_custom_call.1}
  #allocation0 [shape = 'u32[]', space=smem, size = 0x4, offset = 0x4, fixed_abs, tag = 'smem constant byte address 0x4 - core index']
  #allocation1 [shape = 'u32[72,128]{1,0:T(1,128)}', space=vmem, size = 0x9000, scoped, tag = 'internal scratch']
  #allocation2 [shape = 'f32[8,128]{1,0:T(8,128)}', space=vmem, size = 0x1000, scoped, tag = 'scratch operand']
  #allocation3 [shape = 'f32[8,128]{1,0:T(8,128)}', space=vmem, size = 0x1000, scoped, tag = 'scratch operand']
  %s0 = inlined_call_operand.hbm [shape: f32[8,8,512], index: 0, kind: input, shape index: {}]
  %s1 = inlined_call_operand.hbm [shape: f32[128,512], index: 1, kind: input, shape index: {}]
  %s2 = inlined_call_operand.hbm [shape: f32[8,128], index: 2, kind: output, shape index: {}]
  %s3 = sld [smem:[#allocation0]]
  $region34: #{tpu_custom_call.1} parent=0
    _
  %s5 = ssub.s32 1, %s3
  %s6 = scalar_select 0, %s5, %s3
  $region1: #{tpu_custom_call.1} parent=0
    #allocation4 [shape = 'u8[131072]{0}', space=vmem, size = 0x20000, scoped, tag = 'input window, operand 0, single buffered']
    #allocation5 [shape = 's32[1]{0}', space=sflag, size = 0x4, scoped, tag = 'scoped memory for tpu_custom_call.1']
    #allocation6 [shape = 's32[1]{0}', space=sflag, size = 0x4, scoped, tag = 'scoped memory for tpu_custom_call.1']
    #allocation7 [shape = 'u8[262144]{0}', space=vmem, size = 0x40000, scoped, tag = 'input window, operand 1, single buffered']
    #allocation8 [shape = 's32[1]{0}', space=sflag, size = 0x4, scoped, tag = 'scoped memory for tpu_custom_call.1']
    #allocation9 [shape = 'u8[4096]{0}', space=vmem, size = 0x1000, scoped, tag = 'output window, operand 0, single buffered']
    %7 = vsyncpa [#allocation5], 0
    %8 = vsyncpa [#allocation8], 0
    %9 = vsyncpa [#allocation6], 0
    // Predicated region
    $region2: #{tpu_custom_call.1} parent=1 // pred_check
      _
    $region3: #{tpu_custom_call.1} parent=1 // pred_check_branch
      %11 = sbr.rel (0) target = $region5
    $region4: #{tpu_custom_call.1} parent=1 // pred_region
      %13 = vsyncadd [#allocation5], 0
      %s14 = sshll.u32 %s0, 4
      %s15 = int_to_ptr.hbm [resolvable:$true] %s14
      %s16 = sshll.u32 [#allocation4], 4
      %s17 = int_to_ptr.vmem [resolvable:$true] %s16
      %22 = dma.hbm_to_vmem [thread:$0]  %s15, 4096, %s17, [#allocation5], 512, 512, 32
    $region5: #{tpu_custom_call.1} parent=1 // pred_fallthru
      _
    // Predicated region
    $region6: #{tpu_custom_call.1} parent=1 // pred_check
      _
    $region7: #{tpu_custom_call.1} parent=1 // pred_check_branch
      %24 = sbr.rel (0) target = $region9
    $region8: #{tpu_custom_call.1} parent=1 // pred_region
      %26 = vsyncadd [#allocation8], 0
      %s27 = sshll.u32 %s1, 4
      %s28 = int_to_ptr.hbm [resolvable:$true] %s27
      %s29 = sshll.u32 [#allocation7], 4
      %s30 = int_to_ptr.vmem [resolvable:$true] %s29
      %35 = dma.hbm_to_vmem [thread:$0]  %s28, 8192, %s30, [#allocation8], 512, 512, 32
    $region9: #{tpu_custom_call.1} parent=1 // pred_fallthru
      _
    // Predicated region
    $region10: #{tpu_custom_call.1} parent=1 // pred_check
      _
    $region11: #{tpu_custom_call.1} parent=1 // pred_check_branch
      %37 = sbr.rel (0) target = $region13
    $region12: #{tpu_custom_call.1} parent=1 // pred_region
      %39 = dma.done [#allocation5], 4096
    $region13: #{tpu_custom_call.1} parent=1 // pred_fallthru
      _
    // Predicated region
    $region14: #{tpu_custom_call.1} parent=1 // pred_check
      _
    $region15: #{tpu_custom_call.1} parent=1 // pred_check_branch
      %41 = sbr.rel (0) target = $region17
    $region16: #{tpu_custom_call.1} parent=1 // pred_region
      %43 = dma.done [#allocation8], 8192
    $region17: #{tpu_custom_call.1} parent=1 // pred_fallthru
      _
    %p44 = scmp.eq.s32.totalorder 0, 0
    // Predicated region
    $region18: #{tpu_custom_call.1} parent=1 // pred_check
      %p45 = pneg %p44
    $region19: #{tpu_custom_call.1} parent=1 // pred_check_branch
      %47 = sbr.rel (%p45) target = $region21
    $region20: #{tpu_custom_call.1} parent=1 // pred_region
      %48 = vst [vmem:[#allocation2] sm:$0xff] 0.0
      %49 = vst [vmem:[#allocation3] sm:$0xff] 0.0
    $region21: #{tpu_custom_call.1} parent=1 // pred_fallthru
      _
    %v50 = vld [vmem:[#allocation2] sm:$0xff]
    %v51 = vld [vmem:[#allocation3] sm:$0xff]
    %v52 = vld [vmem:[#allocation4] sm:$0xff]
    %v53 = vld [vmem:[#allocation4 + $0x8] sm:$0xff]
    %v54 = vld [vmem:[#allocation4 + $0x10] sm:$0xff]
    %v55 = vld [vmem:[#allocation4 + $0x18] sm:$0xff]
    %v56 = vld [vmem:[#allocation7] sm:$0xff]
    %v57 = vld [vmem:[#allocation7 + $0x8] sm:$0xff]
    %v58 = vld [vmem:[#allocation7 + $0x10] sm:$0xff]
    %v59 = vld [vmem:[#allocation7 + $0x20] sm:$0xff]
    %v60 = vld [vmem:[#allocation7 + $0x28] sm:$0xff]
    %v61 = vld [vmem:[#allocation7 + $0x30] sm:$0xff]
    %v62 = vld [vmem:[#allocation7 + $0x40] sm:$0xff]
    %v63 = vld [vmem:[#allocation7 + $0x48] sm:$0xff]
    %v64 = vld [vmem:[#allocation7 + $0x50] sm:$0xff]
    %v65 = vld [vmem:[#allocation7 + $0x60] sm:$0xff]
    %v66 = vld [vmem:[#allocation7 + $0x68] sm:$0xff]
    %v67 = vld [vmem:[#allocation7 + $0x70] sm:$0xff]
    %v68 = vld [vmem:[#allocation7 + $0x80] sm:$0xff]
    %v69 = vld [vmem:[#allocation7 + $0x88] sm:$0xff]
    %v70 = vld [vmem:[#allocation7 + $0x90] sm:$0xff]
    %v71 = vld [vmem:[#allocation7 + $0xa0] sm:$0xff]
    %v72 = vld [vmem:[#allocation7 + $0xa8] sm:$0xff]
    %v73 = vld [vmem:[#allocation7 + $0xb0] sm:$0xff]
    %v74 = vld [vmem:[#allocation7 + $0xc0] sm:$0xff]
    %v75 = vld [vmem:[#allocation7 + $0xc8] sm:$0xff]
    %v76 = vld [vmem:[#allocation7 + $0xd0] sm:$0xff]
    %v77 = vld [vmem:[#allocation7 + $0xe0] sm:$0xff]
    %v78 = vld [vmem:[#allocation7 + $0xe8] sm:$0xff]
    %v79 = vld [vmem:[#allocation7 + $0xf0] sm:$0xff]
    %v80 = vld [vmem:[#allocation7 + $0x100] sm:$0xff]
    %v81 = vld [vmem:[#allocation7 + $0x108] sm:$0xff]
    %v82 = vld [vmem:[#allocation7 + $0x110] sm:$0xff]
    %v83 = vld [vmem:[#allocation7 + $0x120] sm:$0xff]
    %v84 = vld [vmem:[#allocation7 + $0x128] sm:$0xff]
    %v85 = vld [vmem:[#allocation7 + $0x130] sm:$0xff]
    %v86 = vld [vmem:[#allocation7 + $0x140] sm:$0xff]
    %v87 = vld [vmem:[#allocation7 + $0x148] sm:$0xff]
    %v88 = vld [vmem:[#allocation7 + $0x150] sm:$0xff]
    %v89 = vld [vmem:[#allocation7 + $0x160] sm:$0xff]
    %v90 = vld [vmem:[#allocation7 + $0x168] sm:$0xff]
    %v91 = vld [vmem:[#allocation7 + $0x170] sm:$0xff]
    %v92 = vld [vmem:[#allocation7 + $0x180] sm:$0xff]
    %v93 = vld [vmem:[#allocation7 + $0x188] sm:$0xff]
    %v94 = vld [vmem:[#allocation7 + $0x190] sm:$0xff]
    %v95 = vld [vmem:[#allocation7 + $0x1a0] sm:$0xff]
    %v96 = vld [vmem:[#allocation7 + $0x1a8] sm:$0xff]
    %v97 = vld [vmem:[#allocation7 + $0x1b0] sm:$0xff]
    %v98 = vld [vmem:[#allocation7 + $0x1c0] sm:$0xff]
    %v99 = vld [vmem:[#allocation7 + $0x1c8] sm:$0xff]
    %v100 = vld [vmem:[#allocation7 + $0x1d0] sm:$0xff]
    %v101 = vld [vmem:[#allocation7 + $0x1e0] sm:$0xff]
    %v102 = vld [vmem:[#allocation7 + $0x1e8] sm:$0xff]
    %v103 = vld [vmem:[#allocation7 + $0x1f0] sm:$0xff]
    %104 = vmatpush.msra.mxu0 %v101
    %105 = vmatpush.msra.mxu0 %v98
    %106 = vmatpush.msra.mxu0 %v95
    %107 = vmatpush.msra.mxu0 %v92
    %108 = vmatpush.msra.mxu0 %v89
    %109 = vmatpush.msra.mxu0 %v86
    %110 = vmatpush.msra.mxu0 %v83
    %111 = vmatpush.msra.mxu0 %v80
    %112 = vmatpush.msra.mxu0 %v77
    %113 = vmatpush.msra.mxu0 %v74
    %114 = vmatpush.msra.mxu0 %v71
    %115 = vmatpush.msra.mxu0 %v68
    %116 = vmatpush.msra.mxu0 %v65
    %117 = vmatpush.msra.mxu0 %v62
    %118 = vmatpush.msra.mxu0 %v59
    %119 = vmatpush.msra.mxu0 %v56
    %120 = vmatmul.f32.gmra.mxu0 %v50
    %v121 = vpop.f32.mrf.mxu0
    %v122 = vadd.f32 0.0, %v121
    %123 = vdwg.mxu0
    %124 = vmatpush.msra.mxu0 %v102
    %125 = vmatpush.msra.mxu0 %v99
    %126 = vmatpush.msra.mxu0 %v96
    %127 = vmatpush.msra.mxu0 %v93
    %128 = vmatpush.msra.mxu0 %v90
    %129 = vmatpush.msra.mxu0 %v87
    %130 = vmatpush.msra.mxu0 %v84
    %131 = vmatpush.msra.mxu0 %v81
    %132 = vmatpush.msra.mxu0 %v78
    %133 = vmatpush.msra.mxu0 %v75
    %134 = vmatpush.msra.mxu0 %v72
    %135 = vmatpush.msra.mxu0 %v69
    %136 = vmatpush.msra.mxu0 %v66
    %137 = vmatpush.msra.mxu0 %v63
    %138 = vmatpush.msra.mxu0 %v60
    %139 = vmatpush.msra.mxu0 %v57
    %140 = vmatmul.f32.gmra.mxu0 %v50
    %v141 = vpop.f32.mrf.mxu0
    %v142 = vadd.f32 0.0, %v141
    %143 = vdwg.mxu0
    %144 = vmatpush.msra.mxu0 %v103
    %145 = vmatpush.msra.mxu0 %v100
    %146 = vmatpush.msra.mxu0 %v97
    %147 = vmatpush.msra.mxu0 %v94
    %148 = vmatpush.msra.mxu0 %v91
    %149 = vmatpush.msra.mxu0 %v88
    %150 = vmatpush.msra.mxu0 %v85
    %151 = vmatpush.msra.mxu0 %v82
    %152 = vmatpush.msra.mxu0 %v79
    %153 = vmatpush.msra.mxu0 %v76
    %154 = vmatpush.msra.mxu0 %v73
    %155 = vmatpush.msra.mxu0 %v70
    %156 = vmatpush.msra.mxu0 %v67
    %157 = vmatpush.msra.mxu0 %v64
    %158 = vmatpush.msra.mxu0 %v61
    %159 = vmatpush.msra.mxu0 %v58
    %160 = vmatmul.f32.gmra.mxu0 %v50
    %v161 = vpop.f32.mrf.mxu0
    %v162 = vadd.f32 0.0, %v161
    %163 = vdwg.mxu0
    %v164 = vadd.f32 %v52, %v122
    %v165 = vadd.f32 %v53, %v142
    %v166 = vadd.f32 %v54, %v162
    %v167 = vld [vmem:[#allocation7 + $0x18] sm:$0xff]
    %v168 = vld [vmem:[#allocation7 + $0x38] sm:$0xff]
    %v169 = vld [vmem:[#allocation7 + $0x58] sm:$0xff]
    %v170 = vld [vmem:[#allocation7 + $0x78] sm:$0xff]
    %v171 = vld [vmem:[#allocation7 + $0x98] sm:$0xff]
    %v172 = vld [vmem:[#allocation7 + $0xb8] sm:$0xff]
    %v173 = vld [vmem:[#allocation7 + $0xd8] sm:$0xff]
    %v174 = vld [vmem:[#allocation7 + $0xf8] sm:$0xff]
    %v175 = vld [vmem:[#allocation7 + $0x118] sm:$0xff]
    %v176 = vld [vmem:[#allocation7 + $0x138] sm:$0xff]
    %v177 = vld [vmem:[#allocation7 + $0x158] sm:$0xff]
    %v178 = vld [vmem:[#allocation7 + $0x178] sm:$0xff]
    %v179 = vld [vmem:[#allocation7 + $0x198] sm:$0xff]
    %v180 = vld [vmem:[#allocation7 + $0x1b8] sm:$0xff]
    %v181 = vld [vmem:[#allocation7 + $0x1d8] sm:$0xff]
    %v182 = vld [vmem:[#allocation7 + $0x1f8] sm:$0xff]
    %183 = vmatpush.msra.mxu0 %v182
    %184 = vmatpush.msra.mxu0 %v181
    %185 = vmatpush.msra.mxu0 %v180
    %186 = vmatpush.msra.mxu0 %v179
    %187 = vmatpush.msra.mxu0 %v178
    %188 = vmatpush.msra.mxu0 %v177
    %189 = vmatpush.msra.mxu0 %v176
    %190 = vmatpush.msra.mxu0 %v175
    %191 = vmatpush.msra.mxu0 %v174
    %192 = vmatpush.msra.mxu0 %v173
    %193 = vmatpush.msra.mxu0 %v172
    %194 = vmatpush.msra.mxu0 %v171
    %195 = vmatpush.msra.mxu0 %v170
    %196 = vmatpush.msra.mxu0 %v169
    %197 = vmatpush.msra.mxu0 %v168
    %198 = vmatpush.msra.mxu0 %v167
    %199 = vmatmul.f32.gmra.mxu0 %v50
    %v200 = vpop.f32.mrf.mxu0
    %v201 = vadd.f32 0.0, %v200
    %202 = vdwg.mxu0
    %v203 = vadd.f32 %v55, %v201
    %v204 = vxor.u32 %v164, 2147483648
    %v205 = vxor.u32 %v165, 2147483648
    %v206 = vxor.u32 %v166, 2147483648
    %v207 = vmul.f32 %v204, 1.442695
    %v208 = vpow.pop %v207
    %v209 = vmul.f32 %v205, 1.442695
    %v210 = vpow.pop %v209
    %v211 = vmul.f32 %v206, 1.442695
    %v212 = vpow.pop %v211
    %v213 = vadd.f32 %v208, 1.0
    %v214 = vadd.f32 %v210, 1.0
    %v215 = vadd.f32 %v212, 1.0
    %v216 = vrcp.pop %v213
    %v217 = vmul.f32 %v213, %v216
    %v218 = vsub.f32 1.0, %v217
    %v219 = vmul.f32 %v216, %v218
    %v220 = vadd.f32 %v216, %v219
    %vm221 = vweird.f32 %v213
    %vm222 = vweird.f32 %v216
    %vm223 = vmor %vm221, %vm222
    %v224 = vsel %vm223, %v216, %v220
    %v225 = vand.u32 2147483647, %v213
    %vm226 = vcmp.eq.f32.partialorder %v225, 8.507059e+37
    %v227 = vand.u32 %v213, 2147483648
    %v228 = vor.u32 1.1754944e-38, %v227
    %v229 = vsel %vm226, %v228, %v224
    %v230 = vmul.f32 1.0, %v229
    %v231 = vrcp.pop %v214
    %v232 = vmul.f32 %v214, %v231
    %v233 = vsub.f32 1.0, %v232
    %v234 = vmul.f32 %v231, %v233
    %v235 = vadd.f32 %v231, %v234
    %vm236 = vweird.f32 %v214
    %vm237 = vweird.f32 %v231
    %vm238 = vmor %vm236, %vm237
    %v239 = vsel %vm238, %v231, %v235
    %v240 = vand.u32 2147483647, %v214
    %vm241 = vcmp.eq.f32.partialorder %v240, 8.507059e+37
    %v242 = vand.u32 %v214, 2147483648
    %v243 = vor.u32 1.1754944e-38, %v242
    %v244 = vsel %vm241, %v243, %v239
    %v245 = vmul.f32 1.0, %v244
    %v246 = vrcp.pop %v215
    %v247 = vmul.f32 %v215, %v246
    %v248 = vsub.f32 1.0, %v247
    %v249 = vmul.f32 %v246, %v248
    %v250 = vadd.f32 %v246, %v249
    %vm251 = vweird.f32 %v215
    %vm252 = vweird.f32 %v246
    %vm253 = vmor %vm251, %vm252
    %v254 = vsel %vm253, %v246, %v250
    %v255 = vand.u32 2147483647, %v215
    %vm256 = vcmp.eq.f32.partialorder %v255, 8.507059e+37
    %v257 = vand.u32 %v215, 2147483648
    %v258 = vor.u32 1.1754944e-38, %v257
    %v259 = vsel %vm256, %v258, %v254
    %v260 = vmul.f32 1.0, %v259
    %v261 = vtanh.pop %v203
    %v262 = vmul.f32 %v245, %v51
    %v263 = vmul.f32 %v230, %v261
    %v264 = vadd.f32 %v262, %v263
    %v265 = vtanh.pop %v264
    %v266 = vmul.f32 %v260, %v265
    %s267 = scalar_lea.vmem [#allocation4], 32
    %v268 = vld [vmem:[%s267] sm:$0xff]
    %v269 = vld [vmem:[%s267 + $0x8] sm:$0xff]
    %v270 = vld [vmem:[%s267 + $0x10] sm:$0xff]
    %v271 = vld [vmem:[%s267 + $0x18] sm:$0xff]
    %272 = vmatpush.msra.mxu0 %v101
    %273 = vmatpush.msra.mxu0 %v98
    %274 = vmatpush.msra.mxu0 %v95
    %275 = vmatpush.msra.mxu0 %v92
    %276 = vmatpush.msra.mxu0 %v89
    %277 = vmatpush.msra.mxu0 %v86
    %278 = vmatpush.msra.mxu0 %v83
    %279 = vmatpush.msra.mxu0 %v80
    %280 = vmatpush.msra.mxu0 %v77
    %281 = vmatpush.msra.mxu0 %v74
    %282 = vmatpush.msra.mxu0 %v71
    %283 = vmatpush.msra.mxu0 %v68
    %284 = vmatpush.msra.mxu0 %v65
    %285 = vmatpush.msra.mxu0 %v62
    %286 = vmatpush.msra.mxu0 %v59
    %287 = vmatpush.msra.mxu0 %v56
    %288 = vmatmul.f32.gmra.mxu0 %v266
    %v289 = vpop.f32.mrf.mxu0
    %v290 = vadd.f32 0.0, %v289
    %291 = vdwg.mxu0
    %292 = vmatpush.msra.mxu0 %v102
    %293 = vmatpush.msra.mxu0 %v99
    %294 = vmatpush.msra.mxu0 %v96
    %295 = vmatpush.msra.mxu0 %v93
    %296 = vmatpush.msra.mxu0 %v90
    %297 = vmatpush.msra.mxu0 %v87
    %298 = vmatpush.msra.mxu0 %v84
    %299 = vmatpush.msra.mxu0 %v81
    %300 = vmatpush.msra.mxu0 %v78
    %301 = vmatpush.msra.mxu0 %v75
    %302 = vmatpush.msra.mxu0 %v72
    %303 = vmatpush.msra.mxu0 %v69
    %304 = vmatpush.msra.mxu0 %v66
    %305 = vmatpush.msra.mxu0 %v63
    %306 = vmatpush.msra.mxu0 %v60
    %307 = vmatpush.msra.mxu0 %v57
    %308 = vmatmul.f32.gmra.mxu0 %v266
    %v309 = vpop.f32.mrf.mxu0
    %v310 = vadd.f32 0.0, %v309
    %311 = vdwg.mxu0
    %312 = vmatpush.msra.mxu0 %v103
    %313 = vmatpush.msra.mxu0 %v100
    %314 = vmatpush.msra.mxu0 %v97
    %315 = vmatpush.msra.mxu0 %v94
    %316 = vmatpush.msra.mxu0 %v91
    %317 = vmatpush.msra.mxu0 %v88
    %318 = vmatpush.msra.mxu0 %v85
    %319 = vmatpush.msra.mxu0 %v82
    %320 = vmatpush.msra.mxu0 %v79
    %321 = vmatpush.msra.mxu0 %v76
    %322 = vmatpush.msra.mxu0 %v73
    %323 = vmatpush.msra.mxu0 %v70
    %324 = vmatpush.msra.mxu0 %v67
    %325 = vmatpush.msra.mxu0 %v64
    %326 = vmatpush.msra.mxu0 %v61
    %327 = vmatpush.msra.mxu0 %v58
    %328 = vmatmul.f32.gmra.mxu0 %v266
    %v329 = vpop.f32.mrf.mxu0
    %v330 = vadd.f32 0.0, %v329
    %331 = vdwg.mxu0
    %v332 = vadd.f32 %v268, %v290
    %v333 = vadd.f32 %v269, %v310
    %v334 = vadd.f32 %v270, %v330
    %335 = vmatpush.msra.mxu0 %v182
    %336 = vmatpush.msra.mxu0 %v181
    %337 = vmatpush.msra.mxu0 %v180
    %338 = vmatpush.msra.mxu0 %v179
    %339 = vmatpush.msra.mxu0 %v178
    %340 = vmatpush.msra.mxu0 %v177
    %341 = vmatpush.msra.mxu0 %v176
    %342 = vmatpush.msra.mxu0 %v175
    %343 = vmatpush.msra.mxu0 %v174
    %344 = vmatpush.msra.mxu0 %v173
    %345 = vmatpush.msra.mxu0 %v172
    %346 = vmatpush.msra.mxu0 %v171
    %347 = vmatpush.msra.mxu0 %v170
    %348 = vmatpush.msra.mxu0 %v169
    %349 = vmatpush.msra.mxu0 %v168
    %350 = vmatpush.msra.mxu0 %v167
    %351 = vmatmul.f32.gmra.mxu0 %v266
    %v352 = vpop.f32.mrf.mxu0
    %v353 = vadd.f32 0.0, %v352
    %354 = vdwg.mxu0
    %v355 = vadd.f32 %v271, %v353
    %v356 = vxor.u32 %v332, 2147483648
    %v357 = vxor.u32 %v333, 2147483648
    %v358 = vxor.u32 %v334, 2147483648
    %v359 = vmul.f32 %v356, 1.442695
    %v360 = vpow.pop %v359
    %v361 = vmul.f32 %v357, 1.442695
    %v362 = vpow.pop %v361
    %v363 = vmul.f32 %v358, 1.442695
    %v364 = vpow.pop %v363
    %v365 = vadd.f32 %v360, 1.0
    %v366 = vadd.f32 %v362, 1.0
    %v367 = vadd.f32 %v364, 1.0
    %v368 = vrcp.pop %v365
    %v369 = vmul.f32 %v365, %v368
    %v370 = vsub.f32 1.0, %v369
    %v371 = vmul.f32 %v368, %v370
    %v372 = vadd.f32 %v368, %v371
    %vm373 = vweird.f32 %v365
    %vm374 = vweird.f32 %v368
    %vm375 = vmor %vm373, %vm374
    %v376 = vsel %vm375, %v368, %v372
    %v377 = vand.u32 2147483647, %v365
    %vm378 = vcmp.eq.f32.partialorder %v377, 8.507059e+37
    %v379 = vand.u32 %v365, 2147483648
    %v380 = vor.u32 1.1754944e-38, %v379
    %v381 = vsel %vm378, %v380, %v376
    %v382 = vmul.f32 1.0, %v381
    %v383 = vrcp.pop %v366
    %v384 = vmul.f32 %v366, %v383
    %v385 = vsub.f32 1.0, %v384
    %v386 = vmul.f32 %v383, %v385
    %v387 = vadd.f32 %v383, %v386
    %vm388 = vweird.f32 %v366
    %vm389 = vweird.f32 %v383
    %vm390 = vmor %vm388, %vm389
    %v391 = vsel %vm390, %v383, %v387
    %v392 = vand.u32 2147483647, %v366
    %vm393 = vcmp.eq.f32.partialorder %v392, 8.507059e+37
    %v394 = vand.u32 %v366, 2147483648
    %v395 = vor.u32 1.1754944e-38, %v394
    %v396 = vsel %vm393, %v395, %v391
    %v397 = vmul.f32 1.0, %v396
    %v398 = vrcp.pop %v367
    %v399 = vmul.f32 %v367, %v398
    %v400 = vsub.f32 1.0, %v399
    %v401 = vmul.f32 %v398, %v400
    %v402 = vadd.f32 %v398, %v401
    %vm403 = vweird.f32 %v367
    %vm404 = vweird.f32 %v398
    %vm405 = vmor %vm403, %vm404
    %v406 = vsel %vm405, %v398, %v402
    %v407 = vand.u32 2147483647, %v367
    %vm408 = vcmp.eq.f32.partialorder %v407, 8.507059e+37
    %v409 = vand.u32 %v367, 2147483648
    %v410 = vor.u32 1.1754944e-38, %v409
    %v411 = vsel %vm408, %v410, %v406
    %v412 = vmul.f32 1.0, %v411
    %v413 = vtanh.pop %v355
    %v414 = vmul.f32 %v397, %v264
    %v415 = vmul.f32 %v382, %v413
    %v416 = vadd.f32 %v414, %v415
    %v417 = vtanh.pop %v416
    %v418 = vmul.f32 %v412, %v417
    %s419 = scalar_lea.vmem [#allocation4], 64
    %v420 = vld [vmem:[%s419] sm:$0xff]
    %v421 = vld [vmem:[%s419 + $0x8] sm:$0xff]
    %v422 = vld [vmem:[%s419 + $0x10] sm:$0xff]
    %v423 = vld [vmem:[%s419 + $0x18] sm:$0xff]
    %424 = vmatpush.msra.mxu0 %v101
    %425 = vmatpush.msra.mxu0 %v98
    %426 = vmatpush.msra.mxu0 %v95
    %427 = vmatpush.msra.mxu0 %v92
    %428 = vmatpush.msra.mxu0 %v89
    %429 = vmatpush.msra.mxu0 %v86
    %430 = vmatpush.msra.mxu0 %v83
    %431 = vmatpush.msra.mxu0 %v80
    %432 = vmatpush.msra.mxu0 %v77
    %433 = vmatpush.msra.mxu0 %v74
    %434 = vmatpush.msra.mxu0 %v71
    %435 = vmatpush.msra.mxu0 %v68
    %436 = vmatpush.msra.mxu0 %v65
    %437 = vmatpush.msra.mxu0 %v62
    %438 = vmatpush.msra.mxu0 %v59
    %439 = vmatpush.msra.mxu0 %v56
    %440 = vmatmul.f32.gmra.mxu0 %v418
    %v441 = vpop.f32.mrf.mxu0
    %v442 = vadd.f32 0.0, %v441
    %443 = vdwg.mxu0
    %444 = vmatpush.msra.mxu0 %v102
    %445 = vmatpush.msra.mxu0 %v99
    %446 = vmatpush.msra.mxu0 %v96
    %447 = vmatpush.msra.mxu0 %v93
    %448 = vmatpush.msra.mxu0 %v90
    %449 = vmatpush.msra.mxu0 %v87
    %450 = vmatpush.msra.mxu0 %v84
    %451 = vmatpush.msra.mxu0 %v81
    %452 = vmatpush.msra.mxu0 %v78
    %453 = vmatpush.msra.mxu0 %v75
    %454 = vmatpush.msra.mxu0 %v72
    %455 = vmatpush.msra.mxu0 %v69
    %456 = vmatpush.msra.mxu0 %v66
    %457 = vmatpush.msra.mxu0 %v63
    %458 = vmatpush.msra.mxu0 %v60
    %459 = vmatpush.msra.mxu0 %v57
    %460 = vmatmul.f32.gmra.mxu0 %v418
    %v461 = vpop.f32.mrf.mxu0
    %v462 = vadd.f32 0.0, %v461
    %463 = vdwg.mxu0
    %464 = vmatpush.msra.mxu0 %v103
    %465 = vmatpush.msra.mxu0 %v100
    %466 = vmatpush.msra.mxu0 %v97
    %467 = vmatpush.msra.mxu0 %v94
    %468 = vmatpush.msra.mxu0 %v91
    %469 = vmatpush.msra.mxu0 %v88
    %470 = vmatpush.msra.mxu0 %v85
    %471 = vmatpush.msra.mxu0 %v82
    %472 = vmatpush.msra.mxu0 %v79
    %473 = vmatpush.msra.mxu0 %v76
    %474 = vmatpush.msra.mxu0 %v73
    %475 = vmatpush.msra.mxu0 %v70
    %476 = vmatpush.msra.mxu0 %v67
    %477 = vmatpush.msra.mxu0 %v64
    %478 = vmatpush.msra.mxu0 %v61
    %479 = vmatpush.msra.mxu0 %v58
    %480 = vmatmul.f32.gmra.mxu0 %v418
    %v481 = vpop.f32.mrf.mxu0
    %v482 = vadd.f32 0.0, %v481
    %483 = vdwg.mxu0
    %v484 = vadd.f32 %v420, %v442
    %v485 = vadd.f32 %v421, %v462
    %v486 = vadd.f32 %v422, %v482
    %487 = vmatpush.msra.mxu0 %v182
    %488 = vmatpush.msra.mxu0 %v181
    %489 = vmatpush.msra.mxu0 %v180
    %490 = vmatpush.msra.mxu0 %v179
    %491 = vmatpush.msra.mxu0 %v178
    %492 = vmatpush.msra.mxu0 %v177
    %493 = vmatpush.msra.mxu0 %v176
    %494 = vmatpush.msra.mxu0 %v175
    %495 = vmatpush.msra.mxu0 %v174
    %496 = vmatpush.msra.mxu0 %v173
    %497 = vmatpush.msra.mxu0 %v172
    %498 = vmatpush.msra.mxu0 %v171
    %499 = vmatpush.msra.mxu0 %v170
    %500 = vmatpush.msra.mxu0 %v169
    %501 = vmatpush.msra.mxu0 %v168
    %502 = vmatpush.msra.mxu0 %v167
    %503 = vmatmul.f32.gmra.mxu0 %v418
    %v504 = vpop.f32.mrf.mxu0
    %v505 = vadd.f32 0.0, %v504
    %506 = vdwg.mxu0
    %v507 = vadd.f32 %v423, %v505
    %v508 = vxor.u32 %v484, 2147483648
    %v509 = vxor.u32 %v485, 2147483648
    %v510 = vxor.u32 %v486, 2147483648
    %v511 = vmul.f32 %v508, 1.442695
    %v512 = vpow.pop %v511
    %v513 = vmul.f32 %v509, 1.442695
    %v514 = vpow.pop %v513
    %v515 = vmul.f32 %v510, 1.442695
    %v516 = vpow.pop %v515
    %v517 = vadd.f32 %v512, 1.0
    %v518 = vadd.f32 %v514, 1.0
    %v519 = vadd.f32 %v516, 1.0
    %v520 = vrcp.pop %v517
    %v521 = vmul.f32 %v517, %v520
    %v522 = vsub.f32 1.0, %v521
    %v523 = vmul.f32 %v520, %v522
    %v524 = vadd.f32 %v520, %v523
    %vm525 = vweird.f32 %v517
    %vm526 = vweird.f32 %v520
    %vm527 = vmor %vm525, %vm526
    %v528 = vsel %vm527, %v520, %v524
    %v529 = vand.u32 2147483647, %v517
    %vm530 = vcmp.eq.f32.partialorder %v529, 8.507059e+37
    %v531 = vand.u32 %v517, 2147483648
    %v532 = vor.u32 1.1754944e-38, %v531
    %v533 = vsel %vm530, %v532, %v528
    %v534 = vmul.f32 1.0, %v533
    %v535 = vrcp.pop %v518
    %v536 = vmul.f32 %v518, %v535
    %v537 = vsub.f32 1.0, %v536
    %v538 = vmul.f32 %v535, %v537
    %v539 = vadd.f32 %v535, %v538
    %vm540 = vweird.f32 %v518
    %vm541 = vweird.f32 %v535
    %vm542 = vmor %vm540, %vm541
    %v543 = vsel %vm542, %v535, %v539
    %v544 = vand.u32 2147483647, %v518
    %vm545 = vcmp.eq.f32.partialorder %v544, 8.507059e+37
    %v546 = vand.u32 %v518, 2147483648
    %v547 = vor.u32 1.1754944e-38, %v546
    %v548 = vsel %vm545, %v547, %v543
    %v549 = vmul.f32 1.0, %v548
    %v550 = vrcp.pop %v519
    %v551 = vmul.f32 %v519, %v550
    %v552 = vsub.f32 1.0, %v551
    %v553 = vmul.f32 %v550, %v552
    %v554 = vadd.f32 %v550, %v553
    %vm555 = vweird.f32 %v519
    %vm556 = vweird.f32 %v550
    %vm557 = vmor %vm555, %vm556
    %v558 = vsel %vm557, %v550, %v554
    %v559 = vand.u32 2147483647, %v519
    %vm560 = vcmp.eq.f32.partialorder %v559, 8.507059e+37
    %v561 = vand.u32 %v519, 2147483648
    %v562 = vor.u32 1.1754944e-38, %v561
    %v563 = vsel %vm560, %v562, %v558
    %v564 = vmul.f32 1.0, %v563
    %v565 = vtanh.pop %v507
    %v566 = vmul.f32 %v549, %v416
    %v567 = vmul.f32 %v534, %v565
    %v568 = vadd.f32 %v566, %v567
    %v569 = vtanh.pop %v568
    %v570 = vmul.f32 %v564, %v569
    %s571 = scalar_lea.vmem [#allocation4], 96
    %v572 = vld [vmem:[%s571] sm:$0xff]
    %v573 = vld [vmem:[%s571 + $0x8] sm:$0xff]
    %v574 = vld [vmem:[%s571 + $0x10] sm:$0xff]
    %v575 = vld [vmem:[%s571 + $0x18] sm:$0xff]
    %576 = vmatpush.msra.mxu0 %v101
    %577 = vmatpush.msra.mxu0 %v98
    %578 = vmatpush.msra.mxu0 %v95
    %579 = vmatpush.msra.mxu0 %v92
    %580 = vmatpush.msra.mxu0 %v89
    %581 = vmatpush.msra.mxu0 %v86
    %582 = vmatpush.msra.mxu0 %v83
    %583 = vmatpush.msra.mxu0 %v80
    %584 = vmatpush.msra.mxu0 %v77
    %585 = vmatpush.msra.mxu0 %v74
    %586 = vmatpush.msra.mxu0 %v71
    %587 = vmatpush.msra.mxu0 %v68
    %588 = vmatpush.msra.mxu0 %v65
    %589 = vmatpush.msra.mxu0 %v62
    %590 = vmatpush.msra.mxu0 %v59
    %591 = vmatpush.msra.mxu0 %v56
    %592 = vmatmul.f32.gmra.mxu0 %v570
    %v593 = vpop.f32.mrf.mxu0
    %v594 = vadd.f32 0.0, %v593
    %595 = vdwg.mxu0
    %596 = vmatpush.msra.mxu0 %v102
    %597 = vmatpush.msra.mxu0 %v99
    %598 = vmatpush.msra.mxu0 %v96
    %599 = vmatpush.msra.mxu0 %v93
    %600 = vmatpush.msra.mxu0 %v90
    %601 = vmatpush.msra.mxu0 %v87
    %602 = vmatpush.msra.mxu0 %v84
    %603 = vmatpush.msra.mxu0 %v81
    %604 = vmatpush.msra.mxu0 %v78
    %605 = vmatpush.msra.mxu0 %v75
    %606 = vmatpush.msra.mxu0 %v72
    %607 = vmatpush.msra.mxu0 %v69
    %608 = vmatpush.msra.mxu0 %v66
    %609 = vmatpush.msra.mxu0 %v63
    %610 = vmatpush.msra.mxu0 %v60
    %611 = vmatpush.msra.mxu0 %v57
    %612 = vmatmul.f32.gmra.mxu0 %v570
    %v613 = vpop.f32.mrf.mxu0
    %v614 = vadd.f32 0.0, %v613
    %615 = vdwg.mxu0
    %616 = vmatpush.msra.mxu0 %v103
    %617 = vmatpush.msra.mxu0 %v100
    %618 = vmatpush.msra.mxu0 %v97
    %619 = vmatpush.msra.mxu0 %v94
    %620 = vmatpush.msra.mxu0 %v91
    %621 = vmatpush.msra.mxu0 %v88
    %622 = vmatpush.msra.mxu0 %v85
    %623 = vmatpush.msra.mxu0 %v82
    %624 = vmatpush.msra.mxu0 %v79
    %625 = vmatpush.msra.mxu0 %v76
    %626 = vmatpush.msra.mxu0 %v73
    %627 = vmatpush.msra.mxu0 %v70
    %628 = vmatpush.msra.mxu0 %v67
    %629 = vmatpush.msra.mxu0 %v64
    %630 = vmatpush.msra.mxu0 %v61
    %631 = vmatpush.msra.mxu0 %v58
    %632 = vmatmul.f32.gmra.mxu0 %v570
    %v633 = vpop.f32.mrf.mxu0
    %v634 = vadd.f32 0.0, %v633
    %635 = vdwg.mxu0
    %v636 = vadd.f32 %v572, %v594
    %v637 = vadd.f32 %v573, %v614
    %v638 = vadd.f32 %v574, %v634
    %639 = vmatpush.msra.mxu0 %v182
    %640 = vmatpush.msra.mxu0 %v181
    %641 = vmatpush.msra.mxu0 %v180
    %642 = vmatpush.msra.mxu0 %v179
    %643 = vmatpush.msra.mxu0 %v178
    %644 = vmatpush.msra.mxu0 %v177
    %645 = vmatpush.msra.mxu0 %v176
    %646 = vmatpush.msra.mxu0 %v175
    %647 = vmatpush.msra.mxu0 %v174
    %648 = vmatpush.msra.mxu0 %v173
    %649 = vmatpush.msra.mxu0 %v172
    %650 = vmatpush.msra.mxu0 %v171
    %651 = vmatpush.msra.mxu0 %v170
    %652 = vmatpush.msra.mxu0 %v169
    %653 = vmatpush.msra.mxu0 %v168
    %654 = vmatpush.msra.mxu0 %v167
    %655 = vmatmul.f32.gmra.mxu0 %v570
    %v656 = vpop.f32.mrf.mxu0
    %v657 = vadd.f32 0.0, %v656
    %658 = vdwg.mxu0
    %v659 = vadd.f32 %v575, %v657
    %v660 = vxor.u32 %v636, 2147483648
    %v661 = vxor.u32 %v637, 2147483648
    %v662 = vxor.u32 %v638, 2147483648
    %v663 = vmul.f32 %v660, 1.442695
    %v664 = vpow.pop %v663
    %v665 = vmul.f32 %v661, 1.442695
    %v666 = vpow.pop %v665
    %v667 = vmul.f32 %v662, 1.442695
    %v668 = vpow.pop %v667
    %v669 = vadd.f32 %v664, 1.0
    %v670 = vadd.f32 %v666, 1.0
    %v671 = vadd.f32 %v668, 1.0
    %v672 = vrcp.pop %v669
    %v673 = vmul.f32 %v669, %v672
    %v674 = vsub.f32 1.0, %v673
    %v675 = vmul.f32 %v672, %v674
    %v676 = vadd.f32 %v672, %v675
    %vm677 = vweird.f32 %v669
    %vm678 = vweird.f32 %v672
    %vm679 = vmor %vm677, %vm678
    %v680 = vsel %vm679, %v672, %v676
    %v681 = vand.u32 2147483647, %v669
    %vm682 = vcmp.eq.f32.partialorder %v681, 8.507059e+37
    %v683 = vand.u32 %v669, 2147483648
    %v684 = vor.u32 1.1754944e-38, %v683
    %v685 = vsel %vm682, %v684, %v680
    %v686 = vmul.f32 1.0, %v685
    %v687 = vrcp.pop %v670
    %v688 = vmul.f32 %v670, %v687
    %v689 = vsub.f32 1.0, %v688
    %v690 = vmul.f32 %v687, %v689
    %v691 = vadd.f32 %v687, %v690
    %vm692 = vweird.f32 %v670
    %vm693 = vweird.f32 %v687
    %vm694 = vmor %vm692, %vm693
    %v695 = vsel %vm694, %v687, %v691
    %v696 = vand.u32 2147483647, %v670
    %vm697 = vcmp.eq.f32.partialorder %v696, 8.507059e+37
    %v698 = vand.u32 %v670, 2147483648
    %v699 = vor.u32 1.1754944e-38, %v698
    %v700 = vsel %vm697, %v699, %v695
    %v701 = vmul.f32 1.0, %v700
    %v702 = vrcp.pop %v671
    %v703 = vmul.f32 %v671, %v702
    %v704 = vsub.f32 1.0, %v703
    %v705 = vmul.f32 %v702, %v704
    %v706 = vadd.f32 %v702, %v705
    %vm707 = vweird.f32 %v671
    %vm708 = vweird.f32 %v702
    %vm709 = vmor %vm707, %vm708
    %v710 = vsel %vm709, %v702, %v706
    %v711 = vand.u32 2147483647, %v671
    %vm712 = vcmp.eq.f32.partialorder %v711, 8.507059e+37
    %v713 = vand.u32 %v671, 2147483648
    %v714 = vor.u32 1.1754944e-38, %v713
    %v715 = vsel %vm712, %v714, %v710
    %v716 = vmul.f32 1.0, %v715
    %v717 = vtanh.pop %v659
    %v718 = vmul.f32 %v701, %v568
    %v719 = vmul.f32 %v686, %v717
    %v720 = vadd.f32 %v718, %v719
    %v721 = vtanh.pop %v720
    %v722 = vmul.f32 %v716, %v721
    %s723 = scalar_lea.vmem [#allocation4], 128
    %v724 = vld [vmem:[%s723] sm:$0xff]
    %v725 = vld [vmem:[%s723 + $0x8] sm:$0xff]
    %v726 = vld [vmem:[%s723 + $0x10] sm:$0xff]
    %v727 = vld [vmem:[%s723 + $0x18] sm:$0xff]
    %728 = vmatpush.msra.mxu0 %v101
    %729 = vmatpush.msra.mxu0 %v98
    %730 = vmatpush.msra.mxu0 %v95
    %731 = vmatpush.msra.mxu0 %v92
    %732 = vmatpush.msra.mxu0 %v89
    %733 = vmatpush.msra.mxu0 %v86
    %734 = vmatpush.msra.mxu0 %v83
    %735 = vmatpush.msra.mxu0 %v80
    %736 = vmatpush.msra.mxu0 %v77
    %737 = vmatpush.msra.mxu0 %v74
    %738 = vmatpush.msra.mxu0 %v71
    %739 = vmatpush.msra.mxu0 %v68
    %740 = vmatpush.msra.mxu0 %v65
    %741 = vmatpush.msra.mxu0 %v62
    %742 = vmatpush.msra.mxu0 %v59
    %743 = vmatpush.msra.mxu0 %v56
    %744 = vmatmul.f32.gmra.mxu0 %v722
    %v745 = vpop.f32.mrf.mxu0
    %v746 = vadd.f32 0.0, %v745
    %747 = vdwg.mxu0
    %748 = vmatpush.msra.mxu0 %v102
    %749 = vmatpush.msra.mxu0 %v99
    %750 = vmatpush.msra.mxu0 %v96
    %751 = vmatpush.msra.mxu0 %v93
    %752 = vmatpush.msra.mxu0 %v90
    %753 = vmatpush.msra.mxu0 %v87
    %754 = vmatpush.msra.mxu0 %v84
    %755 = vmatpush.msra.mxu0 %v81
    %756 = vmatpush.msra.mxu0 %v78
    %757 = vmatpush.msra.mxu0 %v75
    %758 = vmatpush.msra.mxu0 %v72
    %759 = vmatpush.msra.mxu0 %v69
    %760 = vmatpush.msra.mxu0 %v66
    %761 = vmatpush.msra.mxu0 %v63
    %762 = vmatpush.msra.mxu0 %v60
    %763 = vmatpush.msra.mxu0 %v57
    %764 = vmatmul.f32.gmra.mxu0 %v722
    %v765 = vpop.f32.mrf.mxu0
    %v766 = vadd.f32 0.0, %v765
    %767 = vdwg.mxu0
    %768 = vmatpush.msra.mxu0 %v103
    %769 = vmatpush.msra.mxu0 %v100
    %770 = vmatpush.msra.mxu0 %v97
    %771 = vmatpush.msra.mxu0 %v94
    %772 = vmatpush.msra.mxu0 %v91
    %773 = vmatpush.msra.mxu0 %v88
    %774 = vmatpush.msra.mxu0 %v85
    %775 = vmatpush.msra.mxu0 %v82
    %776 = vmatpush.msra.mxu0 %v79
    %777 = vmatpush.msra.mxu0 %v76
    %778 = vmatpush.msra.mxu0 %v73
    %779 = vmatpush.msra.mxu0 %v70
    %780 = vmatpush.msra.mxu0 %v67
    %781 = vmatpush.msra.mxu0 %v64
    %782 = vmatpush.msra.mxu0 %v61
    %783 = vmatpush.msra.mxu0 %v58
    %784 = vmatmul.f32.gmra.mxu0 %v722
    %v785 = vpop.f32.mrf.mxu0
    %v786 = vadd.f32 0.0, %v785
    %787 = vdwg.mxu0
    %v788 = vadd.f32 %v724, %v746
    %v789 = vadd.f32 %v725, %v766
    %v790 = vadd.f32 %v726, %v786
    %791 = vmatpush.msra.mxu0 %v182
    %792 = vmatpush.msra.mxu0 %v181
    %793 = vmatpush.msra.mxu0 %v180
    %794 = vmatpush.msra.mxu0 %v179
    %795 = vmatpush.msra.mxu0 %v178
    %796 = vmatpush.msra.mxu0 %v177
    %797 = vmatpush.msra.mxu0 %v176
    %798 = vmatpush.msra.mxu0 %v175
    %799 = vmatpush.msra.mxu0 %v174
    %800 = vmatpush.msra.mxu0 %v173
    %801 = vmatpush.msra.mxu0 %v172
    %802 = vmatpush.msra.mxu0 %v171
    %803 = vmatpush.msra.mxu0 %v170
    %804 = vmatpush.msra.mxu0 %v169
    %805 = vmatpush.msra.mxu0 %v168
    %806 = vmatpush.msra.mxu0 %v167
    %807 = vmatmul.f32.gmra.mxu0 %v722
    %v808 = vpop.f32.mrf.mxu0
    %v809 = vadd.f32 0.0, %v808
    %810 = vdwg.mxu0
    %v811 = vadd.f32 %v727, %v809
    %v812 = vxor.u32 %v788, 2147483648
    %v813 = vxor.u32 %v789, 2147483648
    %v814 = vxor.u32 %v790, 2147483648
    %v815 = vmul.f32 %v812, 1.442695
    %v816 = vpow.pop %v815
    %v817 = vmul.f32 %v813, 1.442695
    %v818 = vpow.pop %v817
    %v819 = vmul.f32 %v814, 1.442695
    %v820 = vpow.pop %v819
    %v821 = vadd.f32 %v816, 1.0
    %v822 = vadd.f32 %v818, 1.0
    %v823 = vadd.f32 %v820, 1.0
    %v824 = vrcp.pop %v821
    %v825 = vmul.f32 %v821, %v824
    %v826 = vsub.f32 1.0, %v825
    %v827 = vmul.f32 %v824, %v826
    %v828 = vadd.f32 %v824, %v827
    %vm829 = vweird.f32 %v821
    %vm830 = vweird.f32 %v824
    %vm831 = vmor %vm829, %vm830
    %v832 = vsel %vm831, %v824, %v828
    %v833 = vand.u32 2147483647, %v821
    %vm834 = vcmp.eq.f32.partialorder %v833, 8.507059e+37
    %v835 = vand.u32 %v821, 2147483648
    %v836 = vor.u32 1.1754944e-38, %v835
    %v837 = vsel %vm834, %v836, %v832
    %v838 = vmul.f32 1.0, %v837
    %v839 = vrcp.pop %v822
    %v840 = vmul.f32 %v822, %v839
    %v841 = vsub.f32 1.0, %v840
    %v842 = vmul.f32 %v839, %v841
    %v843 = vadd.f32 %v839, %v842
    %vm844 = vweird.f32 %v822
    %vm845 = vweird.f32 %v839
    %vm846 = vmor %vm844, %vm845
    %v847 = vsel %vm846, %v839, %v843
    %v848 = vand.u32 2147483647, %v822
    %vm849 = vcmp.eq.f32.partialorder %v848, 8.507059e+37
    %v850 = vand.u32 %v822, 2147483648
    %v851 = vor.u32 1.1754944e-38, %v850
    %v852 = vsel %vm849, %v851, %v847
    %v853 = vmul.f32 1.0, %v852
    %v854 = vrcp.pop %v823
    %v855 = vmul.f32 %v823, %v854
    %v856 = vsub.f32 1.0, %v855
    %v857 = vmul.f32 %v854, %v856
    %v858 = vadd.f32 %v854, %v857
    %vm859 = vweird.f32 %v823
    %vm860 = vweird.f32 %v854
    %vm861 = vmor %vm859, %vm860
    %v862 = vsel %vm861, %v854, %v858
    %v863 = vand.u32 2147483647, %v823
    %vm864 = vcmp.eq.f32.partialorder %v863, 8.507059e+37
    %v865 = vand.u32 %v823, 2147483648
    %v866 = vor.u32 1.1754944e-38, %v865
    %v867 = vsel %vm864, %v866, %v862
    %v868 = vmul.f32 1.0, %v867
    %v869 = vtanh.pop %v811
    %v870 = vmul.f32 %v853, %v720
    %v871 = vmul.f32 %v838, %v869
    %v872 = vadd.f32 %v870, %v871
    %v873 = vtanh.pop %v872
    %v874 = vmul.f32 %v868, %v873
    %s875 = scalar_lea.vmem [#allocation4], 160
    %v876 = vld [vmem:[%s875] sm:$0xff]
    %v877 = vld [vmem:[%s875 + $0x8] sm:$0xff]
    %v878 = vld [vmem:[%s875 + $0x10] sm:$0xff]
    %v879 = vld [vmem:[%s875 + $0x18] sm:$0xff]
    %880 = vmatpush.msra.mxu0 %v101
    %881 = vmatpush.msra.mxu0 %v98
    %882 = vmatpush.msra.mxu0 %v95
    %883 = vmatpush.msra.mxu0 %v92
    %884 = vmatpush.msra.mxu0 %v89
    %885 = vmatpush.msra.mxu0 %v86
    %886 = vmatpush.msra.mxu0 %v83
    %887 = vmatpush.msra.mxu0 %v80
    %888 = vmatpush.msra.mxu0 %v77
    %889 = vmatpush.msra.mxu0 %v74
    %890 = vmatpush.msra.mxu0 %v71
    %891 = vmatpush.msra.mxu0 %v68
    %892 = vmatpush.msra.mxu0 %v65
    %893 = vmatpush.msra.mxu0 %v62
    %894 = vmatpush.msra.mxu0 %v59
    %895 = vmatpush.msra.mxu0 %v56
    %896 = vmatmul.f32.gmra.mxu0 %v874
    %v897 = vpop.f32.mrf.mxu0
    %v898 = vadd.f32 0.0, %v897
    %899 = vdwg.mxu0
    %900 = vmatpush.msra.mxu0 %v102
    %901 = vmatpush.msra.mxu0 %v99
    %902 = vmatpush.msra.mxu0 %v96
    %903 = vmatpush.msra.mxu0 %v93
    %904 = vmatpush.msra.mxu0 %v90
    %905 = vmatpush.msra.mxu0 %v87
    %906 = vmatpush.msra.mxu0 %v84
    %907 = vmatpush.msra.mxu0 %v81
    %908 = vmatpush.msra.mxu0 %v78
    %909 = vmatpush.msra.mxu0 %v75
    %910 = vmatpush.msra.mxu0 %v72
    %911 = vmatpush.msra.mxu0 %v69
    %912 = vmatpush.msra.mxu0 %v66
    %913 = vmatpush.msra.mxu0 %v63
    %914 = vmatpush.msra.mxu0 %v60
    %915 = vmatpush.msra.mxu0 %v57
    %916 = vmatmul.f32.gmra.mxu0 %v874
    %v917 = vpop.f32.mrf.mxu0
    %v918 = vadd.f32 0.0, %v917
    %919 = vdwg.mxu0
    %920 = vmatpush.msra.mxu0 %v103
    %921 = vmatpush.msra.mxu0 %v100
    %922 = vmatpush.msra.mxu0 %v97
    %923 = vmatpush.msra.mxu0 %v94
    %924 = vmatpush.msra.mxu0 %v91
    %925 = vmatpush.msra.mxu0 %v88
    %926 = vmatpush.msra.mxu0 %v85
    %927 = vmatpush.msra.mxu0 %v82
    %928 = vmatpush.msra.mxu0 %v79
    %929 = vmatpush.msra.mxu0 %v76
    %930 = vmatpush.msra.mxu0 %v73
    %931 = vmatpush.msra.mxu0 %v70
    %932 = vmatpush.msra.mxu0 %v67
    %933 = vmatpush.msra.mxu0 %v64
    %934 = vmatpush.msra.mxu0 %v61
    %935 = vmatpush.msra.mxu0 %v58
    %936 = vmatmul.f32.gmra.mxu0 %v874
    %v937 = vpop.f32.mrf.mxu0
    %v938 = vadd.f32 0.0, %v937
    %939 = vdwg.mxu0
    %v940 = vadd.f32 %v876, %v898
    %v941 = vadd.f32 %v877, %v918
    %v942 = vadd.f32 %v878, %v938
    %943 = vmatpush.msra.mxu0 %v182
    %944 = vmatpush.msra.mxu0 %v181
    %945 = vmatpush.msra.mxu0 %v180
    %946 = vmatpush.msra.mxu0 %v179
    %947 = vmatpush.msra.mxu0 %v178
    %948 = vmatpush.msra.mxu0 %v177
    %949 = vmatpush.msra.mxu0 %v176
    %950 = vmatpush.msra.mxu0 %v175
    %951 = vmatpush.msra.mxu0 %v174
    %952 = vmatpush.msra.mxu0 %v173
    %953 = vmatpush.msra.mxu0 %v172
    %954 = vmatpush.msra.mxu0 %v171
    %955 = vmatpush.msra.mxu0 %v170
    %956 = vmatpush.msra.mxu0 %v169
    %957 = vmatpush.msra.mxu0 %v168
    %958 = vmatpush.msra.mxu0 %v167
    %959 = vmatmul.f32.gmra.mxu0 %v874
    %v960 = vpop.f32.mrf.mxu0
    %v961 = vadd.f32 0.0, %v960
    %962 = vdwg.mxu0
    %v963 = vadd.f32 %v879, %v961
    %v964 = vxor.u32 %v940, 2147483648
    %v965 = vxor.u32 %v941, 2147483648
    %v966 = vxor.u32 %v942, 2147483648
    %v967 = vmul.f32 %v964, 1.442695
    %v968 = vpow.pop %v967
    %v969 = vmul.f32 %v965, 1.442695
    %v970 = vpow.pop %v969
    %v971 = vmul.f32 %v966, 1.442695
    %v972 = vpow.pop %v971
    %v973 = vadd.f32 %v968, 1.0
    %v974 = vadd.f32 %v970, 1.0
    %v975 = vadd.f32 %v972, 1.0
    %v976 = vrcp.pop %v973
    %v977 = vmul.f32 %v973, %v976
    %v978 = vsub.f32 1.0, %v977
    %v979 = vmul.f32 %v976, %v978
    %v980 = vadd.f32 %v976, %v979
    %vm981 = vweird.f32 %v973
    %vm982 = vweird.f32 %v976
    %vm983 = vmor %vm981, %vm982
    %v984 = vsel %vm983, %v976, %v980
    %v985 = vand.u32 2147483647, %v973
    %vm986 = vcmp.eq.f32.partialorder %v985, 8.507059e+37
    %v987 = vand.u32 %v973, 2147483648
    %v988 = vor.u32 1.1754944e-38, %v987
    %v989 = vsel %vm986, %v988, %v984
    %v990 = vmul.f32 1.0, %v989
    %v991 = vrcp.pop %v974
    %v992 = vmul.f32 %v974, %v991
    %v993 = vsub.f32 1.0, %v992
    %v994 = vmul.f32 %v991, %v993
    %v995 = vadd.f32 %v991, %v994
    %vm996 = vweird.f32 %v974
    %vm997 = vweird.f32 %v991
    %vm998 = vmor %vm996, %vm997
    %v999 = vsel %vm998, %v991, %v995
    %v1000 = vand.u32 2147483647, %v974
    %vm1001 = vcmp.eq.f32.partialorder %v1000, 8.507059e+37
    %v1002 = vand.u32 %v974, 2147483648
    %v1003 = vor.u32 1.1754944e-38, %v1002
    %v1004 = vsel %vm1001, %v1003, %v999
    %v1005 = vmul.f32 1.0, %v1004
    %v1006 = vrcp.pop %v975
    %v1007 = vmul.f32 %v975, %v1006
    %v1008 = vsub.f32 1.0, %v1007
    %v1009 = vmul.f32 %v1006, %v1008
    %v1010 = vadd.f32 %v1006, %v1009
    %vm1011 = vweird.f32 %v975
    %vm1012 = vweird.f32 %v1006
    %vm1013 = vmor %vm1011, %vm1012
    %v1014 = vsel %vm1013, %v1006, %v1010
    %v1015 = vand.u32 2147483647, %v975
    %vm1016 = vcmp.eq.f32.partialorder %v1015, 8.507059e+37
    %v1017 = vand.u32 %v975, 2147483648
    %v1018 = vor.u32 1.1754944e-38, %v1017
    %v1019 = vsel %vm1016, %v1018, %v1014
    %v1020 = vmul.f32 1.0, %v1019
    %v1021 = vtanh.pop %v963
    %v1022 = vmul.f32 %v1005, %v872
    %v1023 = vmul.f32 %v990, %v1021
    %v1024 = vadd.f32 %v1022, %v1023
    %v1025 = vtanh.pop %v1024
    %v1026 = vmul.f32 %v1020, %v1025
    %s1027 = scalar_lea.vmem [#allocation4], 192
    %v1028 = vld [vmem:[%s1027] sm:$0xff]
    %v1029 = vld [vmem:[%s1027 + $0x8] sm:$0xff]
    %v1030 = vld [vmem:[%s1027 + $0x10] sm:$0xff]
    %v1031 = vld [vmem:[%s1027 + $0x18] sm:$0xff]
    %1032 = vmatpush.msra.mxu0 %v101
    %1033 = vmatpush.msra.mxu0 %v98
    %1034 = vmatpush.msra.mxu0 %v95
    %1035 = vmatpush.msra.mxu0 %v92
    %1036 = vmatpush.msra.mxu0 %v89
    %1037 = vmatpush.msra.mxu0 %v86
    %1038 = vmatpush.msra.mxu0 %v83
    %1039 = vmatpush.msra.mxu0 %v80
    %1040 = vmatpush.msra.mxu0 %v77
    %1041 = vmatpush.msra.mxu0 %v74
    %1042 = vmatpush.msra.mxu0 %v71
    %1043 = vmatpush.msra.mxu0 %v68
    %1044 = vmatpush.msra.mxu0 %v65
    %1045 = vmatpush.msra.mxu0 %v62
    %1046 = vmatpush.msra.mxu0 %v59
    %1047 = vmatpush.msra.mxu0 %v56
    %1048 = vmatmul.f32.gmra.mxu0 %v1026
    %v1049 = vpop.f32.mrf.mxu0
    %v1050 = vadd.f32 0.0, %v1049
    %1051 = vdwg.mxu0
    %1052 = vmatpush.msra.mxu0 %v102
    %1053 = vmatpush.msra.mxu0 %v99
    %1054 = vmatpush.msra.mxu0 %v96
    %1055 = vmatpush.msra.mxu0 %v93
    %1056 = vmatpush.msra.mxu0 %v90
    %1057 = vmatpush.msra.mxu0 %v87
    %1058 = vmatpush.msra.mxu0 %v84
    %1059 = vmatpush.msra.mxu0 %v81
    %1060 = vmatpush.msra.mxu0 %v78
    %1061 = vmatpush.msra.mxu0 %v75
    %1062 = vmatpush.msra.mxu0 %v72
    %1063 = vmatpush.msra.mxu0 %v69
    %1064 = vmatpush.msra.mxu0 %v66
    %1065 = vmatpush.msra.mxu0 %v63
    %1066 = vmatpush.msra.mxu0 %v60
    %1067 = vmatpush.msra.mxu0 %v57
    %1068 = vmatmul.f32.gmra.mxu0 %v1026
    %v1069 = vpop.f32.mrf.mxu0
    %v1070 = vadd.f32 0.0, %v1069
    %1071 = vdwg.mxu0
    %1072 = vmatpush.msra.mxu0 %v103
    %1073 = vmatpush.msra.mxu0 %v100
    %1074 = vmatpush.msra.mxu0 %v97
    %1075 = vmatpush.msra.mxu0 %v94
    %1076 = vmatpush.msra.mxu0 %v91
    %1077 = vmatpush.msra.mxu0 %v88
    %1078 = vmatpush.msra.mxu0 %v85
    %1079 = vmatpush.msra.mxu0 %v82
    %1080 = vmatpush.msra.mxu0 %v79
    %1081 = vmatpush.msra.mxu0 %v76
    %1082 = vmatpush.msra.mxu0 %v73
    %1083 = vmatpush.msra.mxu0 %v70
    %1084 = vmatpush.msra.mxu0 %v67
    %1085 = vmatpush.msra.mxu0 %v64
    %1086 = vmatpush.msra.mxu0 %v61
    %1087 = vmatpush.msra.mxu0 %v58
    %1088 = vmatmul.f32.gmra.mxu0 %v1026
    %v1089 = vpop.f32.mrf.mxu0
    %v1090 = vadd.f32 0.0, %v1089
    %1091 = vdwg.mxu0
    %v1092 = vadd.f32 %v1028, %v1050
    %v1093 = vadd.f32 %v1029, %v1070
    %v1094 = vadd.f32 %v1030, %v1090
    %1095 = vmatpush.msra.mxu0 %v182
    %1096 = vmatpush.msra.mxu0 %v181
    %1097 = vmatpush.msra.mxu0 %v180
    %1098 = vmatpush.msra.mxu0 %v179
    %1099 = vmatpush.msra.mxu0 %v178
    %1100 = vmatpush.msra.mxu0 %v177
    %1101 = vmatpush.msra.mxu0 %v176
    %1102 = vmatpush.msra.mxu0 %v175
    %1103 = vmatpush.msra.mxu0 %v174
    %1104 = vmatpush.msra.mxu0 %v173
    %1105 = vmatpush.msra.mxu0 %v172
    %1106 = vmatpush.msra.mxu0 %v171
    %1107 = vmatpush.msra.mxu0 %v170
    %1108 = vmatpush.msra.mxu0 %v169
    %1109 = vmatpush.msra.mxu0 %v168
    %1110 = vmatpush.msra.mxu0 %v167
    %1111 = vmatmul.f32.gmra.mxu0 %v1026
    %v1112 = vpop.f32.mrf.mxu0
    %v1113 = vadd.f32 0.0, %v1112
    %1114 = vdwg.mxu0
    %v1115 = vadd.f32 %v1031, %v1113
    %v1116 = vxor.u32 %v1092, 2147483648
    %v1117 = vxor.u32 %v1093, 2147483648
    %v1118 = vxor.u32 %v1094, 2147483648
    %v1119 = vmul.f32 %v1116, 1.442695
    %v1120 = vpow.pop %v1119
    %v1121 = vmul.f32 %v1117, 1.442695
    %v1122 = vpow.pop %v1121
    %v1123 = vmul.f32 %v1118, 1.442695
    %v1124 = vpow.pop %v1123
    %v1125 = vadd.f32 %v1120, 1.0
    %v1126 = vadd.f32 %v1122, 1.0
    %v1127 = vadd.f32 %v1124, 1.0
    %v1128 = vrcp.pop %v1125
    %v1129 = vmul.f32 %v1125, %v1128
    %v1130 = vsub.f32 1.0, %v1129
    %v1131 = vmul.f32 %v1128, %v1130
    %v1132 = vadd.f32 %v1128, %v1131
    %vm1133 = vweird.f32 %v1125
    %vm1134 = vweird.f32 %v1128
    %vm1135 = vmor %vm1133, %vm1134
    %v1136 = vsel %vm1135, %v1128, %v1132
    %v1137 = vand.u32 2147483647, %v1125
    %vm1138 = vcmp.eq.f32.partialorder %v1137, 8.507059e+37
    %v1139 = vand.u32 %v1125, 2147483648
    %v1140 = vor.u32 1.1754944e-38, %v1139
    %v1141 = vsel %vm1138, %v1140, %v1136
    %v1142 = vmul.f32 1.0, %v1141
    %v1143 = vrcp.pop %v1126
    %v1144 = vmul.f32 %v1126, %v1143
    %v1145 = vsub.f32 1.0, %v1144
    %v1146 = vmul.f32 %v1143, %v1145
    %v1147 = vadd.f32 %v1143, %v1146
    %vm1148 = vweird.f32 %v1126
    %vm1149 = vweird.f32 %v1143
    %vm1150 = vmor %vm1148, %vm1149
    %v1151 = vsel %vm1150, %v1143, %v1147
    %v1152 = vand.u32 2147483647, %v1126
    %vm1153 = vcmp.eq.f32.partialorder %v1152, 8.507059e+37
    %v1154 = vand.u32 %v1126, 2147483648
    %v1155 = vor.u32 1.1754944e-38, %v1154
    %v1156 = vsel %vm1153, %v1155, %v1151
    %v1157 = vmul.f32 1.0, %v1156
    %v1158 = vrcp.pop %v1127
    %v1159 = vmul.f32 %v1127, %v1158
    %v1160 = vsub.f32 1.0, %v1159
    %v1161 = vmul.f32 %v1158, %v1160
    %v1162 = vadd.f32 %v1158, %v1161
    %vm1163 = vweird.f32 %v1127
    %vm1164 = vweird.f32 %v1158
    %vm1165 = vmor %vm1163, %vm1164
    %v1166 = vsel %vm1165, %v1158, %v1162
    %v1167 = vand.u32 2147483647, %v1127
    %vm1168 = vcmp.eq.f32.partialorder %v1167, 8.507059e+37
    %v1169 = vand.u32 %v1127, 2147483648
    %v1170 = vor.u32 1.1754944e-38, %v1169
    %v1171 = vsel %vm1168, %v1170, %v1166
    %v1172 = vmul.f32 1.0, %v1171
    %v1173 = vtanh.pop %v1115
    %v1174 = vmul.f32 %v1157, %v1024
    %v1175 = vmul.f32 %v1142, %v1173
    %v1176 = vadd.f32 %v1174, %v1175
    %v1177 = vtanh.pop %v1176
    %v1178 = vmul.f32 %v1172, %v1177
    %s1179 = scalar_lea.vmem [#allocation4], 224
    %v1180 = vld [vmem:[%s1179] sm:$0xff]
    %v1181 = vld [vmem:[%s1179 + $0x8] sm:$0xff]
    %v1182 = vld [vmem:[%s1179 + $0x10] sm:$0xff]
    %v1183 = vld [vmem:[%s1179 + $0x18] sm:$0xff]
    %1184 = vmatpush.msra.mxu0 %v101
    %1185 = vmatpush.msra.mxu0 %v98
    %1186 = vmatpush.msra.mxu0 %v95
    %1187 = vmatpush.msra.mxu0 %v92
    %1188 = vmatpush.msra.mxu0 %v89
    %1189 = vmatpush.msra.mxu0 %v86
    %1190 = vmatpush.msra.mxu0 %v83
    %1191 = vmatpush.msra.mxu0 %v80
    %1192 = vmatpush.msra.mxu0 %v77
    %1193 = vmatpush.msra.mxu0 %v74
    %1194 = vmatpush.msra.mxu0 %v71
    %1195 = vmatpush.msra.mxu0 %v68
    %1196 = vmatpush.msra.mxu0 %v65
    %1197 = vmatpush.msra.mxu0 %v62
    %1198 = vmatpush.msra.mxu0 %v59
    %1199 = vmatpush.msra.mxu0 %v56
    %1200 = vmatmul.f32.gmra.mxu0 %v1178
    %v1201 = vpop.f32.mrf.mxu0
    %v1202 = vadd.f32 0.0, %v1201
    %1203 = vdwg.mxu0
    %1204 = vmatpush.msra.mxu0 %v102
    %1205 = vmatpush.msra.mxu0 %v99
    %1206 = vmatpush.msra.mxu0 %v96
    %1207 = vmatpush.msra.mxu0 %v93
    %1208 = vmatpush.msra.mxu0 %v90
    %1209 = vmatpush.msra.mxu0 %v87
    %1210 = vmatpush.msra.mxu0 %v84
    %1211 = vmatpush.msra.mxu0 %v81
    %1212 = vmatpush.msra.mxu0 %v78
    %1213 = vmatpush.msra.mxu0 %v75
    %1214 = vmatpush.msra.mxu0 %v72
    %1215 = vmatpush.msra.mxu0 %v69
    %1216 = vmatpush.msra.mxu0 %v66
    %1217 = vmatpush.msra.mxu0 %v63
    %1218 = vmatpush.msra.mxu0 %v60
    %1219 = vmatpush.msra.mxu0 %v57
    %1220 = vmatmul.f32.gmra.mxu0 %v1178
    %v1221 = vpop.f32.mrf.mxu0
    %v1222 = vadd.f32 0.0, %v1221
    %1223 = vdwg.mxu0
    %1224 = vmatpush.msra.mxu0 %v103
    %1225 = vmatpush.msra.mxu0 %v100
    %1226 = vmatpush.msra.mxu0 %v97
    %1227 = vmatpush.msra.mxu0 %v94
    %1228 = vmatpush.msra.mxu0 %v91
    %1229 = vmatpush.msra.mxu0 %v88
    %1230 = vmatpush.msra.mxu0 %v85
    %1231 = vmatpush.msra.mxu0 %v82
    %1232 = vmatpush.msra.mxu0 %v79
    %1233 = vmatpush.msra.mxu0 %v76
    %1234 = vmatpush.msra.mxu0 %v73
    %1235 = vmatpush.msra.mxu0 %v70
    %1236 = vmatpush.msra.mxu0 %v67
    %1237 = vmatpush.msra.mxu0 %v64
    %1238 = vmatpush.msra.mxu0 %v61
    %1239 = vmatpush.msra.mxu0 %v58
    %1240 = vmatmul.f32.gmra.mxu0 %v1178
    %v1241 = vpop.f32.mrf.mxu0
    %v1242 = vadd.f32 0.0, %v1241
    %1243 = vdwg.mxu0
    %v1244 = vadd.f32 %v1180, %v1202
    %v1245 = vadd.f32 %v1181, %v1222
    %v1246 = vadd.f32 %v1182, %v1242
    %1247 = vmatpush.msra.mxu0 %v182
    %1248 = vmatpush.msra.mxu0 %v181
    %1249 = vmatpush.msra.mxu0 %v180
    %1250 = vmatpush.msra.mxu0 %v179
    %1251 = vmatpush.msra.mxu0 %v178
    %1252 = vmatpush.msra.mxu0 %v177
    %1253 = vmatpush.msra.mxu0 %v176
    %1254 = vmatpush.msra.mxu0 %v175
    %1255 = vmatpush.msra.mxu0 %v174
    %1256 = vmatpush.msra.mxu0 %v173
    %1257 = vmatpush.msra.mxu0 %v172
    %1258 = vmatpush.msra.mxu0 %v171
    %1259 = vmatpush.msra.mxu0 %v170
    %1260 = vmatpush.msra.mxu0 %v169
    %1261 = vmatpush.msra.mxu0 %v168
    %1262 = vmatpush.msra.mxu0 %v167
    %1263 = vmatmul.f32.gmra.mxu0 %v1178
    %v1264 = vpop.f32.mrf.mxu0
    %v1265 = vadd.f32 0.0, %v1264
    %1266 = vdwg.mxu0
    %v1267 = vadd.f32 %v1183, %v1265
    %v1268 = vxor.u32 %v1244, 2147483648
    %v1269 = vxor.u32 %v1245, 2147483648
    %v1270 = vxor.u32 %v1246, 2147483648
    %v1271 = vmul.f32 %v1268, 1.442695
    %v1272 = vpow.pop %v1271
    %v1273 = vmul.f32 %v1269, 1.442695
    %v1274 = vpow.pop %v1273
    %v1275 = vmul.f32 %v1270, 1.442695
    %v1276 = vpow.pop %v1275
    %v1277 = vadd.f32 %v1272, 1.0
    %v1278 = vadd.f32 %v1274, 1.0
    %v1279 = vadd.f32 %v1276, 1.0
    %v1280 = vrcp.pop %v1277
    %v1281 = vmul.f32 %v1277, %v1280
    %v1282 = vsub.f32 1.0, %v1281
    %v1283 = vmul.f32 %v1280, %v1282
    %v1284 = vadd.f32 %v1280, %v1283
    %vm1285 = vweird.f32 %v1277
    %vm1286 = vweird.f32 %v1280
    %vm1287 = vmor %vm1285, %vm1286
    %v1288 = vsel %vm1287, %v1280, %v1284
    %v1289 = vand.u32 2147483647, %v1277
    %vm1290 = vcmp.eq.f32.partialorder %v1289, 8.507059e+37
    %v1291 = vand.u32 %v1277, 2147483648
    %v1292 = vor.u32 1.1754944e-38, %v1291
    %v1293 = vsel %vm1290, %v1292, %v1288
    %v1294 = vmul.f32 1.0, %v1293
    %v1295 = vrcp.pop %v1278
    %v1296 = vmul.f32 %v1278, %v1295
    %v1297 = vsub.f32 1.0, %v1296
    %v1298 = vmul.f32 %v1295, %v1297
    %v1299 = vadd.f32 %v1295, %v1298
    %vm1300 = vweird.f32 %v1278
    %vm1301 = vweird.f32 %v1295
    %vm1302 = vmor %vm1300, %vm1301
    %v1303 = vsel %vm1302, %v1295, %v1299
    %v1304 = vand.u32 2147483647, %v1278
    %vm1305 = vcmp.eq.f32.partialorder %v1304, 8.507059e+37
    %v1306 = vand.u32 %v1278, 2147483648
    %v1307 = vor.u32 1.1754944e-38, %v1306
    %v1308 = vsel %vm1305, %v1307, %v1303
    %v1309 = vmul.f32 1.0, %v1308
    %v1310 = vrcp.pop %v1279
    %v1311 = vmul.f32 %v1279, %v1310
    %v1312 = vsub.f32 1.0, %v1311
    %v1313 = vmul.f32 %v1310, %v1312
    %v1314 = vadd.f32 %v1310, %v1313
    %vm1315 = vweird.f32 %v1279
    %vm1316 = vweird.f32 %v1310
    %vm1317 = vmor %vm1315, %vm1316
    %v1318 = vsel %vm1317, %v1310, %v1314
    %v1319 = vand.u32 2147483647, %v1279
    %vm1320 = vcmp.eq.f32.partialorder %v1319, 8.507059e+37
    %v1321 = vand.u32 %v1279, 2147483648
    %v1322 = vor.u32 1.1754944e-38, %v1321
    %v1323 = vsel %vm1320, %v1322, %v1318
    %v1324 = vmul.f32 1.0, %v1323
    %v1325 = vtanh.pop %v1267
    %v1326 = vmul.f32 %v1309, %v1176
    %v1327 = vmul.f32 %v1294, %v1325
    %v1328 = vadd.f32 %v1326, %v1327
    %v1329 = vtanh.pop %v1328
    %v1330 = vmul.f32 %v1324, %v1329
    %1331 = vst [vmem:[#allocation2] sm:$0xff] %v1330
    %1332 = vst [vmem:[#allocation3] sm:$0xff] %v1328
    // Predicated region
    $region22: #{tpu_custom_call.1} parent=1 // pred_check
      %p1333 = pneg %p44
    $region23: #{tpu_custom_call.1} parent=1 // pred_check_branch
      %1335 = sbr.rel (%p1333) target = $region25
    $region24: #{tpu_custom_call.1} parent=1 // pred_region
      %1336 = vst [vmem:[#allocation9] sm:$0xff] %v1330
    $region25: #{tpu_custom_call.1} parent=1 // pred_fallthru
      _
    // Predicated region
    $region26: #{tpu_custom_call.1} parent=1 // pred_check
      _
    $region27: #{tpu_custom_call.1} parent=1 // pred_check_branch
      %1338 = sbr.rel (0) target = $region29
    $region28: #{tpu_custom_call.1} parent=1 // pred_region
      %1340 = vsyncadd [#allocation6], 0
      %s1342 = sshll.u32 [#allocation9], 4
      %s1343 = int_to_ptr.vmem [resolvable:$true] %s1342
      %s1344 = sshll.u32 %s2, 4
      %s1345 = int_to_ptr.hbm [resolvable:$true] %s1344
      %1347 = dma.vmem_to_hbm [thread:$0]  %s1343, 128, %s1345, [#allocation6]
    $region29: #{tpu_custom_call.1} parent=1 // pred_fallthru
      _
    // Predicated region
    $region30: #{tpu_custom_call.1} parent=1 // pred_check
      _
    $region31: #{tpu_custom_call.1} parent=1 // pred_check_branch
      %1349 = sbr.rel (0) target = $region33
    $region32: #{tpu_custom_call.1} parent=1 // pred_region
      %1351 = dma.done [#allocation6], 128
    $region33: #{tpu_custom_call.1} parent=1 // pred_fallthru
      _
    %1352 = vsyncpa [#allocation5], 1
    %1353 = vsyncpa [#allocation8], 1
    %1354 = vsyncpa [#allocation6], 1

</llo_original>
